<compile_context>
chip_gen: v5e
topology: v5e:2x2
jax: 0.10.0
libtpu: 0.0.40
codegen_flags: <defaults>
</compile_context>

<pallas_src>
import functools

import jax
import jax.numpy as jnp
from jax.experimental import pallas as pl
from jax.experimental.pallas import tpu as pltpu


# ---------------------------------------------------------------------------
# helpers
# ---------------------------------------------------------------------------

def _round_up(a, b):
    return -(-a // b) * b


def _vmem_limit_bytes():
    """Scoped-VMEM limit to request: ~75% of physical, capped, with a floor.

    v5e/v6e (128 MiB) -> 96 MiB, v7x (64 MiB) -> 48 MiB, unknown -> 48 MiB.
    """
    try:
        cap = int(pltpu.get_tpu_info().vmem_capacity_bytes)
    except Exception:
        cap = 64 * 1024 * 1024
    return int(max(32 * 1024 * 1024, min(cap * 3 // 4, 100 * 1024 * 1024)))


def _cost_estimate(B, C, C2, N, itemsize):
    # Memory-bound op: give XLA the real flop/byte numbers so it can overlap
    # neighbouring ops around this custom call.
    return pl.CostEstimate(
        flops=2 * B * C2 * C * N,
        transcendentals=0,
        bytes_accessed=(B * C * N + C2 * C + B * C2 * N) * itemsize,
    )


def _reference(x_nchw, w_linear):
    """Pure-JAX reference of the exact PyTorch token-major math."""
    B, C, H, W = x_nchw.shape
    c_out = C // 2
    x_tok = jnp.transpose(x_nchw.reshape(B, C, H * W), (0, 2, 1))   # (B, HW, C)
    z = x_tok @ w_linear.T                                          # (B, HW, 2C)
    z = z.reshape(B, H, W, 2, 2, c_out)                             # (p1, p2, c)
    return jnp.transpose(z, (0, 5, 1, 3, 2, 4)).reshape(B, c_out, 2 * H, 2 * W)


# ---------------------------------------------------------------------------
# Two-pass path: lane-dense GEMM kernel + XLA pixel shuffle  (robust fallback)
# ---------------------------------------------------------------------------

def _expand_kernel(x_ref, w_ref, o_ref):
    # x_ref: (1, C, TN)   w_ref: (TC2, C)   o_ref: (1, TC2, TN)
    o_ref[0] = jnp.dot(
        w_ref[...], x_ref[0], preferred_element_type=jnp.float32
    ).astype(o_ref.dtype)


def _pick_tile_n(C, tc2, N, itemsize, budget, cap=2048):
    """Largest lane tile (multiple of 128, capped) s.t. the double-buffered
    x/out blocks plus the weight block fit `budget` bytes of VMEM."""
    w_bytes = 2 * tc2 * C * itemsize            # weight block (worst case 2 bufs)
    per_col = 2 * (C + tc2) * itemsize          # x + out columns, double-buffered
    avail = max(budget - w_bytes, 128 * per_col)
    tn = (avail // per_col) // 128 * 128
    tn = int(max(128, min(cap, tn)))
    if tn >= N:
        return N                                # full-extent block is always legal
    return tn


def _expand_matmul(x3, w_linear, out_dtype, *, single_buffer_weight):
    """z[b] = w_linear @ x3[b] : (B, C, N) x (C2, C) -> (B, C2, N)."""
    B, C, N = x3.shape
    C2 = w_linear.shape[0]
    itemsize = x3.dtype.itemsize
    vmem_limit = _vmem_limit_bytes()
    budget = vmem_limit - 4 * 1024 * 1024

    # Output-channel tiling keeps the weight block small for large C (v7x VMEM)
    # and adds parallel grid steps for the two v7x TensorCores.
    w_bytes_full = C2 * C * itemsize
    tc2 = C2 if w_bytes_full <= 4 * 1024 * 1024 else min(C2, 512)
    n_c2 = pl.cdiv(C2, tc2)

    tn = _pick_tile_n(C, tc2, N, itemsize, budget)
    n_n = pl.cdiv(N, tn)

    # Megacore / dual-TensorCore balance: guarantee >= 2 grid steps when possible.
    if B * n_n * n_c2 < 2 and N > 128:
        tn = min(N, _round_up(-(-N // 2), 128))
        n_n = pl.cdiv(N, tn)

    # Single-buffer the constant-index resident weight only when it is big enough
    # to matter (frees tc2*C*itemsize bytes of VMEM for larger lane tiles).
    w_spec_kwargs = {}
    if single_buffer_weight and n_c2 == 1 and w_bytes_full > 2 * 1024 * 1024:
        w_spec_kwargs = dict(pipeline_mode=pl.Buffered(1))

    in_specs = [
        pl.BlockSpec((1, C, tn), lambda b, jn, jc: (b, 0, jn)),
        pl.BlockSpec((tc2, C), lambda b, jn, jc: (jc, 0), **w_spec_kwargs),
    ]
    out_specs = pl.BlockSpec((1, tc2, tn), lambda b, jn, jc: (b, jc, jn))

    return pl.pallas_call(
        _expand_kernel,
        out_shape=jax.ShapeDtypeStruct((B, C2, N), out_dtype),
        grid=(B, n_n, n_c2),                    # jc innermost: x block is reused
        in_specs=in_specs,
        out_specs=out_specs,
        compiler_params=pltpu.CompilerParams(
            dimension_semantics=("parallel", "parallel", "parallel"),
            vmem_limit_bytes=vmem_limit,
        ),
        cost_estimate=_cost_estimate(B, C, C2, N, itemsize),
    )(x3, w_linear)


def _patch_expand_unfused(x_nchw, w_linear, out_dtype):
    B, C, H, W = x_nchw.shape
    c_out = C // 2
    x3 = x_nchw.reshape(B, C, H * W)            # free, contiguous reshape
    try:
        z = _expand_matmul(x3, w_linear, out_dtype, single_buffer_weight=True)
    except Exception:                           # e.g. Buffered(1) not accepted
        z = _expand_matmul(x3, w_linear, out_dtype, single_buffer_weight=False)
    # z[b, (p1 p2 c), h*W + w] -> out[b, c, 2h+p1, 2w+p2]
    # This is a second HBM pass; the fused path below removes it when usable.
    z = z.reshape(B, 2, 2, c_out, H, W)
    return jnp.transpose(z, (0, 3, 4, 1, 5, 2)).reshape(B, c_out, 2 * H, 2 * W)


# ---------------------------------------------------------------------------
# Fused path: GEMM + pixel shuffle in one kernel (single HBM write of the output)
# ---------------------------------------------------------------------------

def _fused_kernel(x_ref, w_ref, o_ref, *, c_out, H, W):
    # x_ref: (1, C, H*W)     w_ref: (2C, C), rows ordered (p1, p2, c) like PyTorch
    # o_ref: (1, c_out, H, 2, 2W) -- same memory layout as (B, c_out, 2H, 2W)
    z = jnp.dot(w_ref[...], x_ref[0], preferred_element_type=jnp.float32)  # (2C, HW)
    two_w = 2 * W
    for p1 in range(2):
        a = z[(2 * p1) * c_out:(2 * p1 + 1) * c_out, :]        # p2 = 0 rows
        b = z[(2 * p1 + 1) * c_out:(2 * p1 + 2) * c_out, :]    # p2 = 1 rows
        # even/odd lane interleave: r[c, 2*(h*W+w) + p2] == r[c, h*2W + 2w + p2]
        r = jnp.stack([a, b], axis=-1).reshape(c_out, 2 * H * W)
        r = r.astype(o_ref.dtype)
        for h in range(H):                                     # static unroll
            o_ref[0, :, h, p1, :] = r[:, h * two_w:(h + 1) * two_w]
    # TODO(synk): add an H-tiling grid axis (needs TH*W % 128 == 0) and 2C-channel
    # tiling so the fused path also covers very large C / very large feature maps.


def _patch_expand_fused(x_nchw, w_linear, out_dtype):
    B, C, H, W = x_nchw.shape
    N = H * W
    c_out = C // 2
    C2 = w_linear.shape[0]
    itemsize = x_nchw.dtype.itemsize
    vmem_limit = _vmem_limit_bytes()
    x3 = x_nchw.reshape(B, C, N)                # free reshape, no HBM pass

    out5 = pl.pallas_call(
        functools.partial(_fused_kernel, c_out=c_out, H=H, W=W),
        out_shape=jax.ShapeDtypeStruct((B, c_out, H, 2, 2 * W), out_dtype),
        grid=(B,),
        in_specs=[
            pl.BlockSpec((1, C, N), lambda b: (b, 0, 0)),
            pl.BlockSpec((C2, C), lambda b: (0, 0)),
        ],
        out_specs=pl.BlockSpec((1, c_out, H, 2, 2 * W), lambda b: (b, 0, 0, 0, 0)),
        compiler_params=pltpu.CompilerParams(
            dimension_semantics=("parallel",),
            vmem_limit_bytes=vmem_limit,
        ),
        cost_estimate=_cost_estimate(B, C, C2, N, itemsize),
    )(x3, w_linear)
    # (H, 2) merge to 2H: adjacent-dim merge == metadata-only reshape (no HBM pass).
    return out5.reshape(B, c_out, 2 * H, 2 * W)


def _fused_fits(B, C, H, W, itemsize, vmem_limit):
    """Conservative VMEM / unroll guard for the fused (whole image per step) path."""
    if C % 2 != 0 or C < 2 or H > 128:
        return False
    c_out = C // 2
    N = H * W
    x_blk = 2 * C * N * itemsize                                   # double buffered
    w_blk = 2 * 2 * C * C * itemsize
    out_blk = 2 * c_out * H * 8 * _round_up(2 * W, 128) * itemsize  # (2,2W) padding
    interm = (2 * C + 2 * C) * N * 4                               # z + interleave, f32
    return (x_blk + w_blk + out_blk + interm) <= int(vmem_limit * 0.7)


_FUSED_PROBE = {"ok": None}


def _fused_path_supported():
    """One-time cached check that the in-kernel lane interleave lowers on this
    backend and matches the reference numerically."""
    if _FUSED_PROBE["ok"] is None:
        try:
            kx, kw = jax.random.split(jax.random.PRNGKey(42))
            x0 = jax.random.normal(kx, (1, 8, 8, 16), dtype=jnp.float32)
            w0 = jax.random.normal(kw, (16, 8), dtype=jnp.float32)
            got = jax.block_until_ready(_patch_expand_fused(x0, w0, jnp.float32))
            ref = _reference(x0, w0)
            _FUSED_PROBE["ok"] = bool(jnp.allclose(got, ref, atol=1e-4, rtol=1e-4))
        except Exception:
            _FUSED_PROBE["ok"] = False
    return _FUSED_PROBE["ok"]


# ---------------------------------------------------------------------------
# Public entry point
# ---------------------------------------------------------------------------

def patch_expand(x_nchw, w_linear, *, compute_dtype=None):
    """PatchExpand forward.

    x_nchw:   (B, C, H, W)
    w_linear: (2C, C) -- PyTorch nn.Linear(C, 2C, bias=False).weight
    compute_dtype: optional narrower GEMM dtype (e.g. jnp.bfloat16); accumulation
        stays float32 and the output keeps the input dtype.
    returns:  (B, C//2, 2H, 2W)
    """
    B, C, H, W = x_nchw.shape
    out_dtype = x_nchw.dtype
    if compute_dtype is not None:
        x_nchw = x_nchw.astype(compute_dtype)
        w_linear = w_linear.astype(compute_dtype)

    itemsize = x_nchw.dtype.itemsize
    vmem_limit = _vmem_limit_bytes()
    if _fused_fits(B, C, H, W, itemsize, vmem_limit) and _fused_path_supported():
        try:
            return _patch_expand_fused(x_nchw, w_linear, out_dtype)
        except Exception:
            pass                                 # shape-specific lowering failure
    return _patch_expand_unfused(x_nchw, w_linear, out_dtype)


# ---------------------------------------------------------------------------
# Demo / self-test
# ---------------------------------------------------------------------------

if __name__ == "__main__":
    B, C, H, W = 2, 4, 16, 16                    # dim = C = 4 (small demo shape)

    key = jax.random.PRNGKey(0)
    kx, kw = jax.random.split(key)
    x = jax.random.normal(kx, (B, C, H, W), dtype=jnp.float32)
    # nn.Linear(dim, 2*dim, bias=False).weight has shape (2*dim, dim)
    w_linear = jax.random.normal(kw, (2 * C, C), dtype=jnp.float32) * 0.1

    out = patch_expand(x, w_linear)
    out = jax.block_until_ready(out)

    assert out.shape == (B, C // 2, 2 * H, 2 * W), out.shape

    ref = _reference(x, w_linear)
    err = float(jnp.max(jnp.abs(out - ref)))
    # tolerance covers f32 accumulation-order differences between GEMM orientations
    assert jnp.allclose(out, ref, atol=1e-4, rtol=1e-4), err

    print("KERNEL_OK")
</pallas_src>

<mosaic_0001>
module attributes {stable_mosaic.version = 11 : i64} {
  func.func @_fused_kernel(%arg0: i32, %arg1: memref<1x8x128xf32, #tpu.memory_space<vmem>>, %arg2: memref<16x8xf32, #tpu.memory_space<vmem>>, %arg3: memref<1x4x8x2x32xf32, #tpu.memory_space<vmem>>) attributes {dimension_semantics = [#tpu.dimension_semantics<parallel>], iteration_bounds = array<i64: 1>, scalar_prefetch = 0 : i64, scratch_operands = 0 : i64, tpu.core_type = #tpu.core_type<tc>, window_params = [{transform_indices = @transform_0, window_bounds = array<i64: 1, 8, 128>}, {pipeline_mode = #tpu.pipeline_mode<synchronous>, transform_indices = @transform_1, window_bounds = array<i64: 16, 8>}, {transform_indices = @transform_2, window_bounds = array<i64: 1, 4, 8, 2, 32>}]} {
    %c0 = arith.constant 0 : index
    %c0_0 = arith.constant 0 : index
    %0 = vector.load %arg2[%c0, %c0_0] : memref<16x8xf32, #tpu.memory_space<vmem>>, vector<16x8xf32>
    %c0_1 = arith.constant 0 : index
    %c0_2 = arith.constant 0 : index
    %c0_3 = arith.constant 0 : index
    %1 = vector.load %arg1[%c0_1, %c0_2, %c0_3] : memref<1x8x128xf32, #tpu.memory_space<vmem>>, vector<1x8x128xf32>
    %2 = vector.shape_cast %1 : vector<1x8x128xf32> to vector<8x128xf32>
    %cst = arith.constant dense<0.000000e+00> : vector<16x128xf32>
    %3 = tpu.matmul %0, %2, %cst {dimension_numbers = #tpu.dot_dimension_numbers<[1], [0], [0], [1], [0, 0, 1, 1], [], []>} : vector<16x8xf32>, vector<8x128xf32>, vector<16x128xf32> -> vector<16x128xf32>
    %4 = vector.extract_strided_slice %3 {offsets = [0, 0], sizes = [4, 128], strides = [1, 1]} : vector<16x128xf32> to vector<4x128xf32>
    %5 = vector.extract_strided_slice %3 {offsets = [4, 0], sizes = [4, 128], strides = [1, 1]} : vector<16x128xf32> to vector<4x128xf32>
    %6 = vector.shape_cast %4 : vector<4x128xf32> to vector<4x128x1xf32>
    %7 = vector.shape_cast %5 : vector<4x128xf32> to vector<4x128x1xf32>
    %8 = tpu.concatenate %6, %7 in 2 : vector<4x128x1xf32>, vector<4x128x1xf32> -> vector<4x128x2xf32>
    %9 = vector.shape_cast %8 : vector<4x128x2xf32> to vector<4x256xf32>
    %10 = vector.extract_strided_slice %9 {offsets = [0, 0], sizes = [4, 32], strides = [1, 1]} : vector<4x256xf32> to vector<4x32xf32>
    %c0_4 = arith.constant 0 : index
    %c0_5 = arith.constant 0 : index
    %c0_6 = arith.constant 0 : index
    %c0_7 = arith.constant 0 : index
    %c0_8 = arith.constant 0 : index
    %11 = vector.load %arg3[%c0_4, %c0_5, %c0_6, %c0_7, %c0_8] : memref<1x4x8x2x32xf32, #tpu.memory_space<vmem>>, vector<1x4x1x1x32xf32>
    %12 = vector.shape_cast %11 : vector<1x4x1x1x32xf32> to vector<4x32xf32>
    %13 = vector.shape_cast %10 : vector<4x32xf32> to vector<1x4x1x1x32xf32>
    tpu.vector_store %arg3[%c0_4, %c0_5, %c0_6, %c0_7, %c0_8], %13 {strides = array<i32>} : memref<1x4x8x2x32xf32, #tpu.memory_space<vmem>>, vector<1x4x1x1x32xf32>,
    %14 = vector.extract_strided_slice %9 {offsets = [0, 32], sizes = [4, 32], strides = [1, 1]} : vector<4x256xf32> to vector<4x32xf32>
    %c0_9 = arith.constant 0 : index
    %c0_10 = arith.constant 0 : index
    %c1 = arith.constant 1 : index
    %c0_11 = arith.constant 0 : index
    %c0_12 = arith.constant 0 : index
    %15 = vector.load %arg3[%c0_9, %c0_10, %c1, %c0_11, %c0_12] : memref<1x4x8x2x32xf32, #tpu.memory_space<vmem>>, vector<1x4x1x1x32xf32>
    %16 = vector.shape_cast %15 : vector<1x4x1x1x32xf32> to vector<4x32xf32>
    %17 = vector.shape_cast %14 : vector<4x32xf32> to vector<1x4x1x1x32xf32>
    tpu.vector_store %arg3[%c0_9, %c0_10, %c1, %c0_11, %c0_12], %17 {strides = array<i32>} : memref<1x4x8x2x32xf32, #tpu.memory_space<vmem>>, vector<1x4x1x1x32xf32>,
    %18 = vector.extract_strided_slice %9 {offsets = [0, 64], sizes = [4, 32], strides = [1, 1]} : vector<4x256xf32> to vector<4x32xf32>
    %c0_13 = arith.constant 0 : index
    %c0_14 = arith.constant 0 : index
    %c2 = arith.constant 2 : index
    %c0_15 = arith.constant 0 : index
    %c0_16 = arith.constant 0 : index
    %19 = vector.load %arg3[%c0_13, %c0_14, %c2, %c0_15, %c0_16] : memref<1x4x8x2x32xf32, #tpu.memory_space<vmem>>, vector<1x4x1x1x32xf32>
    %20 = vector.shape_cast %19 : vector<1x4x1x1x32xf32> to vector<4x32xf32>
    %21 = vector.shape_cast %18 : vector<4x32xf32> to vector<1x4x1x1x32xf32>
    tpu.vector_store %arg3[%c0_13, %c0_14, %c2, %c0_15, %c0_16], %21 {strides = array<i32>} : memref<1x4x8x2x32xf32, #tpu.memory_space<vmem>>, vector<1x4x1x1x32xf32>,
    %22 = vector.extract_strided_slice %9 {offsets = [0, 96], sizes = [4, 32], strides = [1, 1]} : vector<4x256xf32> to vector<4x32xf32>
    %c0_17 = arith.constant 0 : index
    %c0_18 = arith.constant 0 : index
    %c3 = arith.constant 3 : index
    %c0_19 = arith.constant 0 : index
    %c0_20 = arith.constant 0 : index
    %23 = vector.load %arg3[%c0_17, %c0_18, %c3, %c0_19, %c0_20] : memref<1x4x8x2x32xf32, #tpu.memory_space<vmem>>, vector<1x4x1x1x32xf32>
    %24 = vector.shape_cast %23 : vector<1x4x1x1x32xf32> to vector<4x32xf32>
    %25 = vector.shape_cast %22 : vector<4x32xf32> to vector<1x4x1x1x32xf32>
    tpu.vector_store %arg3[%c0_17, %c0_18, %c3, %c0_19, %c0_20], %25 {strides = array<i32>} : memref<1x4x8x2x32xf32, #tpu.memory_space<vmem>>, vector<1x4x1x1x32xf32>,
    %26 = vector.extract_strided_slice %9 {offsets = [0, 128], sizes = [4, 32], strides = [1, 1]} : vector<4x256xf32> to vector<4x32xf32>
    %c0_21 = arith.constant 0 : index
    %c0_22 = arith.constant 0 : index
    %c4 = arith.constant 4 : index
    %c0_23 = arith.constant 0 : index
    %c0_24 = arith.constant 0 : index
    %27 = vector.load %arg3[%c0_21, %c0_22, %c4, %c0_23, %c0_24] : memref<1x4x8x2x32xf32, #tpu.memory_space<vmem>>, vector<1x4x1x1x32xf32>
    %28 = vector.shape_cast %27 : vector<1x4x1x1x32xf32> to vector<4x32xf32>
    %29 = vector.shape_cast %26 : vector<4x32xf32> to vector<1x4x1x1x32xf32>
    tpu.vector_store %arg3[%c0_21, %c0_22, %c4, %c0_23, %c0_24], %29 {strides = array<i32>} : memref<1x4x8x2x32xf32, #tpu.memory_space<vmem>>, vector<1x4x1x1x32xf32>,
    %30 = vector.extract_strided_slice %9 {offsets = [0, 160], sizes = [4, 32], strides = [1, 1]} : vector<4x256xf32> to vector<4x32xf32>
    %c0_25 = arith.constant 0 : index
    %c0_26 = arith.constant 0 : index
    %c5 = arith.constant 5 : index
    %c0_27 = arith.constant 0 : index
    %c0_28 = arith.constant 0 : index
    %31 = vector.load %arg3[%c0_25, %c0_26, %c5, %c0_27, %c0_28] : memref<1x4x8x2x32xf32, #tpu.memory_space<vmem>>, vector<1x4x1x1x32xf32>
    %32 = vector.shape_cast %31 : vector<1x4x1x1x32xf32> to vector<4x32xf32>
    %33 = vector.shape_cast %30 : vector<4x32xf32> to vector<1x4x1x1x32xf32>
    tpu.vector_store %arg3[%c0_25, %c0_26, %c5, %c0_27, %c0_28], %33 {strides = array<i32>} : memref<1x4x8x2x32xf32, #tpu.memory_space<vmem>>, vector<1x4x1x1x32xf32>,
    %34 = vector.extract_strided_slice %9 {offsets = [0, 192], sizes = [4, 32], strides = [1, 1]} : vector<4x256xf32> to vector<4x32xf32>
    %c0_29 = arith.constant 0 : index
    %c0_30 = arith.constant 0 : index
    %c6 = arith.constant 6 : index
    %c0_31 = arith.constant 0 : index
    %c0_32 = arith.constant 0 : index
    %35 = vector.load %arg3[%c0_29, %c0_30, %c6, %c0_31, %c0_32] : memref<1x4x8x2x32xf32, #tpu.memory_space<vmem>>, vector<1x4x1x1x32xf32>
    %36 = vector.shape_cast %35 : vector<1x4x1x1x32xf32> to vector<4x32xf32>
    %37 = vector.shape_cast %34 : vector<4x32xf32> to vector<1x4x1x1x32xf32>
    tpu.vector_store %arg3[%c0_29, %c0_30, %c6, %c0_31, %c0_32], %37 {strides = array<i32>} : memref<1x4x8x2x32xf32, #tpu.memory_space<vmem>>, vector<1x4x1x1x32xf32>,
    %38 = vector.extract_strided_slice %9 {offsets = [0, 224], sizes = [4, 32], strides = [1, 1]} : vector<4x256xf32> to vector<4x32xf32>
    %c0_33 = arith.constant 0 : index
    %c0_34 = arith.constant 0 : index
    %c7 = arith.constant 7 : index
    %c0_35 = arith.constant 0 : index
    %c0_36 = arith.constant 0 : index
    %39 = vector.load %arg3[%c0_33, %c0_34, %c7, %c0_35, %c0_36] : memref<1x4x8x2x32xf32, #tpu.memory_space<vmem>>, vector<1x4x1x1x32xf32>
    %40 = vector.shape_cast %39 : vector<1x4x1x1x32xf32> to vector<4x32xf32>
    %41 = vector.shape_cast %38 : vector<4x32xf32> to vector<1x4x1x1x32xf32>
    tpu.vector_store %arg3[%c0_33, %c0_34, %c7, %c0_35, %c0_36], %41 {strides = array<i32>} : memref<1x4x8x2x32xf32, #tpu.memory_space<vmem>>, vector<1x4x1x1x32xf32>,
    %42 = vector.extract_strided_slice %3 {offsets = [8, 0], sizes = [4, 128], strides = [1, 1]} : vector<16x128xf32> to vector<4x128xf32>
    %43 = vector.extract_strided_slice %3 {offsets = [12, 0], sizes = [4, 128], strides = [1, 1]} : vector<16x128xf32> to vector<4x128xf32>
    %44 = vector.shape_cast %42 : vector<4x128xf32> to vector<4x128x1xf32>
    %45 = vector.shape_cast %43 : vector<4x128xf32> to vector<4x128x1xf32>
    %46 = tpu.concatenate %44, %45 in 2 : vector<4x128x1xf32>, vector<4x128x1xf32> -> vector<4x128x2xf32>
    %47 = vector.shape_cast %46 : vector<4x128x2xf32> to vector<4x256xf32>
    %48 = vector.extract_strided_slice %47 {offsets = [0, 0], sizes = [4, 32], strides = [1, 1]} : vector<4x256xf32> to vector<4x32xf32>
    %c0_37 = arith.constant 0 : index
    %c0_38 = arith.constant 0 : index
    %c0_39 = arith.constant 0 : index
    %c1_40 = arith.constant 1 : index
    %c0_41 = arith.constant 0 : index
    %49 = vector.load %arg3[%c0_37, %c0_38, %c0_39, %c1_40, %c0_41] : memref<1x4x8x2x32xf32, #tpu.memory_space<vmem>>, vector<1x4x1x1x32xf32>
    %50 = vector.shape_cast %49 : vector<1x4x1x1x32xf32> to vector<4x32xf32>
    %51 = vector.shape_cast %48 : vector<4x32xf32> to vector<1x4x1x1x32xf32>
    tpu.vector_store %arg3[%c0_37, %c0_38, %c0_39, %c1_40, %c0_41], %51 {strides = array<i32>} : memref<1x4x8x2x32xf32, #tpu.memory_space<vmem>>, vector<1x4x1x1x32xf32>,
    %52 = vector.extract_strided_slice %47 {offsets = [0, 32], sizes = [4, 32], strides = [1, 1]} : vector<4x256xf32> to vector<4x32xf32>
    %c0_42 = arith.constant 0 : index
    %c0_43 = arith.constant 0 : index
    %c1_44 = arith.constant 1 : index
    %c1_45 = arith.constant 1 : index
    %c0_46 = arith.constant 0 : index
    %53 = vector.load %arg3[%c0_42, %c0_43, %c1_44, %c1_45, %c0_46] : memref<1x4x8x2x32xf32, #tpu.memory_space<vmem>>, vector<1x4x1x1x32xf32>
    %54 = vector.shape_cast %53 : vector<1x4x1x1x32xf32> to vector<4x32xf32>
    %55 = vector.shape_cast %52 : vector<4x32xf32> to vector<1x4x1x1x32xf32>
    tpu.vector_store %arg3[%c0_42, %c0_43, %c1_44, %c1_45, %c0_46], %55 {strides = array<i32>} : memref<1x4x8x2x32xf32, #tpu.memory_space<vmem>>, vector<1x4x1x1x32xf32>,
    %56 = vector.extract_strided_slice %47 {offsets = [0, 64], sizes = [4, 32], strides = [1, 1]} : vector<4x256xf32> to vector<4x32xf32>
    %c0_47 = arith.constant 0 : index
    %c0_48 = arith.constant 0 : index
    %c2_49 = arith.constant 2 : index
    %c1_50 = arith.constant 1 : index
    %c0_51 = arith.constant 0 : index
    %57 = vector.load %arg3[%c0_47, %c0_48, %c2_49, %c1_50, %c0_51] : memref<1x4x8x2x32xf32, #tpu.memory_space<vmem>>, vector<1x4x1x1x32xf32>
    %58 = vector.shape_cast %57 : vector<1x4x1x1x32xf32> to vector<4x32xf32>
    %59 = vector.shape_cast %56 : vector<4x32xf32> to vector<1x4x1x1x32xf32>
    tpu.vector_store %arg3[%c0_47, %c0_48, %c2_49, %c1_50, %c0_51], %59 {strides = array<i32>} : memref<1x4x8x2x32xf32, #tpu.memory_space<vmem>>, vector<1x4x1x1x32xf32>,
    %60 = vector.extract_strided_slice %47 {offsets = [0, 96], sizes = [4, 32], strides = [1, 1]} : vector<4x256xf32> to vector<4x32xf32>
    %c0_52 = arith.constant 0 : index
    %c0_53 = arith.constant 0 : index
    %c3_54 = arith.constant 3 : index
    %c1_55 = arith.constant 1 : index
    %c0_56 = arith.constant 0 : index
    %61 = vector.load %arg3[%c0_52, %c0_53, %c3_54, %c1_55, %c0_56] : memref<1x4x8x2x32xf32, #tpu.memory_space<vmem>>, vector<1x4x1x1x32xf32>
    %62 = vector.shape_cast %61 : vector<1x4x1x1x32xf32> to vector<4x32xf32>
    %63 = vector.shape_cast %60 : vector<4x32xf32> to vector<1x4x1x1x32xf32>
    tpu.vector_store %arg3[%c0_52, %c0_53, %c3_54, %c1_55, %c0_56], %63 {strides = array<i32>} : memref<1x4x8x2x32xf32, #tpu.memory_space<vmem>>, vector<1x4x1x1x32xf32>,
    %64 = vector.extract_strided_slice %47 {offsets = [0, 128], sizes = [4, 32], strides = [1, 1]} : vector<4x256xf32> to vector<4x32xf32>
    %c0_57 = arith.constant 0 : index
    %c0_58 = arith.constant 0 : index
    %c4_59 = arith.constant 4 : index
    %c1_60 = arith.constant 1 : index
    %c0_61 = arith.constant 0 : index
    %65 = vector.load %arg3[%c0_57, %c0_58, %c4_59, %c1_60, %c0_61] : memref<1x4x8x2x32xf32, #tpu.memory_space<vmem>>, vector<1x4x1x1x32xf32>
    %66 = vector.shape_cast %65 : vector<1x4x1x1x32xf32> to vector<4x32xf32>
    %67 = vector.shape_cast %64 : vector<4x32xf32> to vector<1x4x1x1x32xf32>
    tpu.vector_store %arg3[%c0_57, %c0_58, %c4_59, %c1_60, %c0_61], %67 {strides = array<i32>} : memref<1x4x8x2x32xf32, #tpu.memory_space<vmem>>, vector<1x4x1x1x32xf32>,
    %68 = vector.extract_strided_slice %47 {offsets = [0, 160], sizes = [4, 32], strides = [1, 1]} : vector<4x256xf32> to vector<4x32xf32>
    %c0_62 = arith.constant 0 : index
    %c0_63 = arith.constant 0 : index
    %c5_64 = arith.constant 5 : index
    %c1_65 = arith.constant 1 : index
    %c0_66 = arith.constant 0 : index
    %69 = vector.load %arg3[%c0_62, %c0_63, %c5_64, %c1_65, %c0_66] : memref<1x4x8x2x32xf32, #tpu.memory_space<vmem>>, vector<1x4x1x1x32xf32>
    %70 = vector.shape_cast %69 : vector<1x4x1x1x32xf32> to vector<4x32xf32>
    %71 = vector.shape_cast %68 : vector<4x32xf32> to vector<1x4x1x1x32xf32>
    tpu.vector_store %arg3[%c0_62, %c0_63, %c5_64, %c1_65, %c0_66], %71 {strides = array<i32>} : memref<1x4x8x2x32xf32, #tpu.memory_space<vmem>>, vector<1x4x1x1x32xf32>,
    %72 = vector.extract_strided_slice %47 {offsets = [0, 192], sizes = [4, 32], strides = [1, 1]} : vector<4x256xf32> to vector<4x32xf32>
    %c0_67 = arith.constant 0 : index
    %c0_68 = arith.constant 0 : index
    %c6_69 = arith.constant 6 : index
    %c1_70 = arith.constant 1 : index
    %c0_71 = arith.constant 0 : index
    %73 = vector.load %arg3[%c0_67, %c0_68, %c6_69, %c1_70, %c0_71] : memref<1x4x8x2x32xf32, #tpu.memory_space<vmem>>, vector<1x4x1x1x32xf32>
    %74 = vector.shape_cast %73 : vector<1x4x1x1x32xf32> to vector<4x32xf32>
    %75 = vector.shape_cast %72 : vector<4x32xf32> to vector<1x4x1x1x32xf32>
    tpu.vector_store %arg3[%c0_67, %c0_68, %c6_69, %c1_70, %c0_71], %75 {strides = array<i32>} : memref<1x4x8x2x32xf32, #tpu.memory_space<vmem>>, vector<1x4x1x1x32xf32>,
    %76 = vector.extract_strided_slice %47 {offsets = [0, 224], sizes = [4, 32], strides = [1, 1]} : vector<4x256xf32> to vector<4x32xf32>
    %c0_72 = arith.constant 0 : index
    %c0_73 = arith.constant 0 : index
    %c7_74 = arith.constant 7 : index
    %c1_75 = arith.constant 1 : index
    %c0_76 = arith.constant 0 : index
    %77 = vector.load %arg3[%c0_72, %c0_73, %c7_74, %c1_75, %c0_76] : memref<1x4x8x2x32xf32, #tpu.memory_space<vmem>>, vector<1x4x1x1x32xf32>
    %78 = vector.shape_cast %77 : vector<1x4x1x1x32xf32> to vector<4x32xf32>
    %79 = vector.shape_cast %76 : vector<4x32xf32> to vector<1x4x1x1x32xf32>
    tpu.vector_store %arg3[%c0_72, %c0_73, %c7_74, %c1_75, %c0_76], %79 {strides = array<i32>} : memref<1x4x8x2x32xf32, #tpu.memory_space<vmem>>, vector<1x4x1x1x32xf32>,
    return
  }
  func.func @transform_0(%arg0: i32) -> (i32, i32, i32) {
    %c0_i32 = arith.constant 0 : i32
    %c0_i32_0 = arith.constant 0 : i32
    %c0_i32_1 = arith.constant 0 : i32
    return %arg0, %c0_i32, %c0_i32_0 : i32, i32, i32
  }
  func.func @transform_1(%arg0: i32) -> (i32, i32) {
    %c0_i32 = arith.constant 0 : i32
    %c0_i32_0 = arith.constant 0 : i32
    %c0_i32_1 = arith.constant 0 : i32
    return %c0_i32, %c0_i32_0 : i32, i32
  }
  func.func @transform_2(%arg0: i32) -> (i32, i32, i32, i32, i32) {
    %c0_i32 = arith.constant 0 : i32
    %c0_i32_0 = arith.constant 0 : i32
    %c0_i32_1 = arith.constant 0 : i32
    %c0_i32_2 = arith.constant 0 : i32
    %c0_i32_3 = arith.constant 0 : i32
    return %arg0, %c0_i32, %c0_i32_0, %c0_i32_1, %c0_i32_2 : i32, i32, i32, i32, i32
  }
}

module attributes {stable_mosaic.version = 11 : i64} {
  func.func @_expand_kernel(%arg0: i32, %arg1: i32, %arg2: i32, %arg3: memref<1x4x256xf32, #tpu.memory_space<vmem>>, %arg4: memref<8x4xf32, #tpu.memory_space<vmem>>, %arg5: memref<1x8x256xf32, #tpu.memory_space<vmem>>) attributes {dimension_semantics = [#tpu.dimension_semantics<parallel>, #tpu.dimension_semantics<parallel>, #tpu.dimension_semantics<parallel>], iteration_bounds = array<i64: 2, 1, 1>, scalar_prefetch = 0 : i64, scratch_operands = 0 : i64, tpu.core_type = #tpu.core_type<tc>, window_params = [{transform_indices = @transform_0, window_bounds = array<i64: 1, 4, 256>}, {transform_indices = @transform_1, window_bounds = array<i64: 8, 4>}, {transform_indices = @transform_2, window_bounds = array<i64: 1, 8, 256>}]} {
    %c0 = arith.constant 0 : index
    %c0_0 = arith.constant 0 : index
    %0 = vector.load %arg4[%c0, %c0_0] : memref<8x4xf32, #tpu.memory_space<vmem>>, vector<8x4xf32>
    %c0_1 = arith.constant 0 : index
    %c0_2 = arith.constant 0 : index
    %c0_3 = arith.constant 0 : index
    %1 = vector.load %arg3[%c0_1, %c0_2, %c0_3] : memref<1x4x256xf32, #tpu.memory_space<vmem>>, vector<1x4x256xf32>
    %2 = vector.shape_cast %1 : vector<1x4x256xf32> to vector<4x256xf32>
    %cst = arith.constant dense<0.000000e+00> : vector<8x256xf32>
    %3 = tpu.matmul %0, %2, %cst {dimension_numbers = #tpu.dot_dimension_numbers<[1], [0], [0], [1], [0, 0, 1, 1], [], []>} : vector<8x4xf32>, vector<4x256xf32>, vector<8x256xf32> -> vector<8x256xf32>
    %c0_4 = arith.constant 0 : index
    %c0_5 = arith.constant 0 : index
    %c0_6 = arith.constant 0 : index
    %4 = vector.load %arg5[%c0_4, %c0_5, %c0_6] : memref<1x8x256xf32, #tpu.memory_space<vmem>>, vector<1x8x256xf32>
    %5 = vector.shape_cast %4 : vector<1x8x256xf32> to vector<8x256xf32>
    %6 = vector.shape_cast %3 : vector<8x256xf32> to vector<1x8x256xf32>
    tpu.vector_store %arg5[%c0_4, %c0_5, %c0_6], %6 {strides = array<i32>} : memref<1x8x256xf32, #tpu.memory_space<vmem>>, vector<1x8x256xf32>,
    return
  }
  func.func @transform_0(%arg0: i32, %arg1: i32, %arg2: i32) -> (i32, i32, i32) {
    %c0_i32 = arith.constant 0 : i32
    %c0_i32_0 = arith.constant 0 : i32
    return %arg0, %c0_i32, %arg1 : i32, i32, i32
  }
  func.func @transform_1(%arg0: i32, %arg1: i32, %arg2: i32) -> (i32, i32) {
    %c0_i32 = arith.constant 0 : i32
    %c0_i32_0 = arith.constant 0 : i32
    return %arg2, %c0_i32 : i32, i32
  }
  func.func @transform_2(%arg0: i32, %arg1: i32, %arg2: i32) -> (i32, i32, i32) {
    %c0_i32 = arith.constant 0 : i32
    return %arg0, %arg2, %arg1 : i32, i32, i32
  }
}

module attributes {stable_mosaic.version = 11 : i64} {
  func.func @_expand_kernel(%arg0: i32, %arg1: i32, %arg2: i32, %arg3: memref<1x4x256xf32, #tpu.memory_space<vmem>>, %arg4: memref<8x4xf32, #tpu.memory_space<vmem>>, %arg5: memref<1x8x256xf32, #tpu.memory_space<vmem>>) attributes {dimension_semantics = [#tpu.dimension_semantics<parallel>, #tpu.dimension_semantics<parallel>, #tpu.dimension_semantics<parallel>], iteration_bounds = array<i64: 2, 1, 1>, scalar_prefetch = 0 : i64, scratch_operands = 0 : i64, tpu.core_type = #tpu.core_type<tc>, window_params = [{transform_indices = @transform_0, window_bounds = array<i64: 1, 4, 256>}, {transform_indices = @transform_1, window_bounds = array<i64: 8, 4>}, {transform_indices = @transform_2, window_bounds = array<i64: 1, 8, 256>}]} {
    %c0 = arith.constant 0 : index
    %c0_0 = arith.constant 0 : index
    %0 = vector.load %arg4[%c0, %c0_0] : memref<8x4xf32, #tpu.memory_space<vmem>>, vector<8x4xf32>
    %c0_1 = arith.constant 0 : index
    %c0_2 = arith.constant 0 : index
    %c0_3 = arith.constant 0 : index
    %1 = vector.load %arg3[%c0_1, %c0_2, %c0_3] : memref<1x4x256xf32, #tpu.memory_space<vmem>>, vector<1x4x256xf32>
    %2 = vector.shape_cast %1 : vector<1x4x256xf32> to vector<4x256xf32>
    %cst = arith.constant dense<0.000000e+00> : vector<8x256xf32>
    %3 = tpu.matmul %0, %2, %cst {dimension_numbers = #tpu.dot_dimension_numbers<[1], [0], [0], [1], [0, 0, 1, 1], [], []>} : vector<8x4xf32>, vector<4x256xf32>, vector<8x256xf32> -> vector<8x256xf32>
    %c0_4 = arith.constant 0 : index
    %c0_5 = arith.constant 0 : index
    %c0_6 = arith.constant 0 : index
    %4 = vector.load %arg5[%c0_4, %c0_5, %c0_6] : memref<1x8x256xf32, #tpu.memory_space<vmem>>, vector<1x8x256xf32>
    %5 = vector.shape_cast %4 : vector<1x8x256xf32> to vector<8x256xf32>
    %6 = vector.shape_cast %3 : vector<8x256xf32> to vector<1x8x256xf32>
    tpu.vector_store %arg5[%c0_4, %c0_5, %c0_6], %6 {strides = array<i32>} : memref<1x8x256xf32, #tpu.memory_space<vmem>>, vector<1x8x256xf32>,
    return
  }
  func.func @transform_0(%arg0: i32, %arg1: i32, %arg2: i32) -> (i32, i32, i32) {
    %c0_i32 = arith.constant 0 : i32
    %c0_i32_0 = arith.constant 0 : i32
    return %arg0, %c0_i32, %arg1 : i32, i32, i32
  }
  func.func @transform_1(%arg0: i32, %arg1: i32, %arg2: i32) -> (i32, i32) {
    %c0_i32 = arith.constant 0 : i32
    %c0_i32_0 = arith.constant 0 : i32
    return %arg2, %c0_i32 : i32, i32
  }
  func.func @transform_2(%arg0: i32, %arg1: i32, %arg2: i32) -> (i32, i32, i32) {
    %c0_i32 = arith.constant 0 : i32
    return %arg0, %arg2, %arg1 : i32, i32, i32
  }
}

</mosaic_0001>

<llo_original>
// kernel: tpu_custom_call.1
$region0: #{tpu_custom_call.1}
  #allocation0 [shape = 'u32[]', space=smem, size = 0x4, offset = 0x4, fixed_abs, tag = 'smem constant byte address 0x4 - core index']
  #allocation1 [shape = 'u32[72,128]{1,0:T(1,128)}', space=vmem, size = 0x9000, scoped, tag = 'internal scratch']
  %s0 = inlined_call_operand.vmem [shape: f32[1,8,128], index: 0, kind: input, shape index: {}]
  %s1 = inlined_call_operand.vmem [shape: f32[16,8], index: 1, kind: input, shape index: {}]
  %s2 = inlined_call_operand.hbm [shape: f32[1,4,8,2,32], index: 2, kind: output, shape index: {}]
  %s3 = sld [smem:[#allocation0]]
  $region18: #{tpu_custom_call.1} parent=0
    _
  %s5 = ssub.s32 1, %s3
  %s6 = scalar_select 0, %s5, %s3
  $region1: #{tpu_custom_call.1} parent=0
    #allocation2 [shape = 'u8[32768]{0}', space=vmem, size = 0x8000, scoped, tag = 'output window, operand 0, single buffered']
    #allocation3 [shape = 's32[1]{0}', space=sflag, size = 0x4, scoped, tag = 'scoped memory for tpu_custom_call.1']
    %7 = vsyncpa [#allocation3], 0
    // Predicated region
    $region2: #{tpu_custom_call.1} parent=1 // pred_check
      _
    $region3: #{tpu_custom_call.1} parent=1 // pred_check_branch
      %9 = sbr.rel (0) target = $region5
    $region4: #{tpu_custom_call.1} parent=1 // pred_region
      _
    $region5: #{tpu_custom_call.1} parent=1 // pred_fallthru
      _
    // Predicated region
    $region6: #{tpu_custom_call.1} parent=1 // pred_check
      _
    $region7: #{tpu_custom_call.1} parent=1 // pred_check_branch
      %11 = sbr.rel (0) target = $region9
    $region8: #{tpu_custom_call.1} parent=1 // pred_region
      _
    $region9: #{tpu_custom_call.1} parent=1 // pred_fallthru
      _
    %v12 = vld [vmem:[%s1] sm:$0xff]
    %v13 = vld [vmem:[%s1 + $0x8] sm:$0xff]
    %v14 = vld [vmem:[%s0] sm:$0xff]
    %vm15 = vcmask 64512
    %v17 = vsel %vm15, %v12, 0
    %v20 = vsel %vm15, %v13, 0
    %22 = vmatpush.msra.mxu0 0.0
    %23 = vmatpush.msra.mxu0 0.0
    %24 = vmatpush.msra.mxu0 0.0
    %25 = vmatpush.msra.mxu0 0.0
    %26 = vmatpush.msra.mxu0 0.0
    %27 = vmatpush.msra.mxu0 0.0
    %28 = vmatpush.msra.mxu0 0.0
    %29 = vmatpush.msra.mxu0 0.0
    %30 = vmatpush.msra.mxu0 0.0
    %31 = vmatpush.msra.mxu0 0.0
    %32 = vmatpush.msra.mxu0 0.0
    %33 = vmatpush.msra.mxu0 0.0
    %34 = vmatpush.msra.mxu0 0.0
    %35 = vmatpush.msra.mxu0 0.0
    %36 = vmatpush.msra.mxu0 0.0
    %37 = vmatpush.msra.mxu0 %v14
    %38 = vmatmul.f32.gmra.mxu0 %v17
    %v39 = vpop.f32.mrf.mxu0
    %v40 = vadd.f32 0.0, %v39
    %41 = vmatmul.f32.gmra.mxu0 %v20
    %v42 = vpop.f32.mrf.mxu0
    %v43 = vadd.f32 0.0, %v42
    %44 = vdwg.mxu0
    %v45 = vperm.slane %v40, 0
    %v46 = vlaneseq
    %v47 = vshrl.u32 %v46, 7
    %49 = vset.pattern.permute.xlu0 %v47
    %50 = vperm.xlu0 %49, %v45
    %v51 = vpop.permute.xlu0 %50
    %v52 = vlaneseq
    %v53 = vshrl.u32 %v52, 7
    %v54 = vadd.s32 %v53, 8
    %55 = vset.pattern.permute.xlu0 %v54
    %56 = vperm.xlu0 %55, %v45
    %v57 = vpop.permute.xlu0 %56
    %v58 = vlaneseq
    %v59 = vshrl.u32 %v58, 7
    %v60 = vadd.s32 %v59, 16
    %61 = vset.pattern.permute.xlu0 %v60
    %62 = vperm.xlu0 %61, %v45
    %v63 = vpop.permute.xlu0 %62
    %v64 = vlaneseq
    %v65 = vshrl.u32 %v64, 7
    %v66 = vadd.s32 %v65, 24
    %67 = vset.pattern.permute.xlu0 %v66
    %68 = vperm.xlu0 %67, %v45
    %v69 = vpop.permute.xlu0 %68
    %v70 = vlaneseq
    %v71 = vshrl.u32 %v70, 7
    %v72 = vadd.s32 %v71, 32
    %73 = vset.pattern.permute.xlu0 %v72
    %74 = vperm.xlu0 %73, %v45
    %v75 = vpop.permute.xlu0 %74
    %v76 = vlaneseq
    %v77 = vshrl.u32 %v76, 7
    %v78 = vadd.s32 %v77, 40
    %79 = vset.pattern.permute.xlu0 %v78
    %80 = vperm.xlu0 %79, %v45
    %v81 = vpop.permute.xlu0 %80
    %v82 = vlaneseq
    %v83 = vshrl.u32 %v82, 7
    %v84 = vadd.s32 %v83, 48
    %85 = vset.pattern.permute.xlu0 %v84
    %86 = vperm.xlu0 %85, %v45
    %v87 = vpop.permute.xlu0 %86
    %v88 = vlaneseq
    %v89 = vshrl.u32 %v88, 7
    %v90 = vadd.s32 %v89, 56
    %91 = vset.pattern.permute.xlu0 %v90
    %92 = vperm.xlu0 %91, %v45
    %v93 = vpop.permute.xlu0 %92
    %v94 = vlaneseq
    %v95 = vshrl.u32 %v94, 7
    %v96 = vadd.s32 %v95, 64
    %97 = vset.pattern.permute.xlu0 %v96
    %98 = vperm.xlu0 %97, %v45
    %v99 = vpop.permute.xlu0 %98
    %v100 = vlaneseq
    %v101 = vshrl.u32 %v100, 7
    %v102 = vadd.s32 %v101, 72
    %103 = vset.pattern.permute.xlu0 %v102
    %104 = vperm.xlu0 %103, %v45
    %v105 = vpop.permute.xlu0 %104
    %v106 = vlaneseq
    %v107 = vshrl.u32 %v106, 7
    %v108 = vadd.s32 %v107, 80
    %109 = vset.pattern.permute.xlu0 %v108
    %110 = vperm.xlu0 %109, %v45
    %v111 = vpop.permute.xlu0 %110
    %v112 = vlaneseq
    %v113 = vshrl.u32 %v112, 7
    %v114 = vadd.s32 %v113, 88
    %115 = vset.pattern.permute.xlu0 %v114
    %116 = vperm.xlu0 %115, %v45
    %v117 = vpop.permute.xlu0 %116
    %v118 = vlaneseq
    %v119 = vshrl.u32 %v118, 7
    %v120 = vadd.s32 %v119, 96
    %121 = vset.pattern.permute.xlu0 %v120
    %122 = vperm.xlu0 %121, %v45
    %v123 = vpop.permute.xlu0 %122
    %v124 = vlaneseq
    %v125 = vshrl.u32 %v124, 7
    %v126 = vadd.s32 %v125, 104
    %127 = vset.pattern.permute.xlu0 %v126
    %128 = vperm.xlu0 %127, %v45
    %v129 = vpop.permute.xlu0 %128
    %v130 = vlaneseq
    %v131 = vshrl.u32 %v130, 7
    %v132 = vadd.s32 %v131, 112
    %133 = vset.pattern.permute.xlu0 %v132
    %134 = vperm.xlu0 %133, %v45
    %v135 = vpop.permute.xlu0 %134
    %v136 = vlaneseq
    %v137 = vshrl.u32 %v136, 7
    %v138 = vadd.s32 %v137, 120
    %139 = vset.pattern.permute.xlu0 %v138
    %140 = vperm.xlu0 %139, %v45
    %v141 = vpop.permute.xlu0 %140
    %v142 = vperm.slane %v40, 1
    %v143 = vlaneseq
    %v144 = vshrl.u32 %v143, 7
    %146 = vset.pattern.permute.xlu0 %v144
    %147 = vperm.xlu0 %146, %v142
    %v148 = vpop.permute.xlu0 %147
    %v149 = vlaneseq
    %v150 = vshrl.u32 %v149, 7
    %v151 = vadd.s32 %v150, 8
    %152 = vset.pattern.permute.xlu0 %v151
    %153 = vperm.xlu0 %152, %v142
    %v154 = vpop.permute.xlu0 %153
    %v155 = vlaneseq
    %v156 = vshrl.u32 %v155, 7
    %v157 = vadd.s32 %v156, 16
    %158 = vset.pattern.permute.xlu0 %v157
    %159 = vperm.xlu0 %158, %v142
    %v160 = vpop.permute.xlu0 %159
    %v161 = vlaneseq
    %v162 = vshrl.u32 %v161, 7
    %v163 = vadd.s32 %v162, 24
    %164 = vset.pattern.permute.xlu0 %v163
    %165 = vperm.xlu0 %164, %v142
    %v166 = vpop.permute.xlu0 %165
    %v167 = vlaneseq
    %v168 = vshrl.u32 %v167, 7
    %v169 = vadd.s32 %v168, 32
    %170 = vset.pattern.permute.xlu0 %v169
    %171 = vperm.xlu0 %170, %v142
    %v172 = vpop.permute.xlu0 %171
    %v173 = vlaneseq
    %v174 = vshrl.u32 %v173, 7
    %v175 = vadd.s32 %v174, 40
    %176 = vset.pattern.permute.xlu0 %v175
    %177 = vperm.xlu0 %176, %v142
    %v178 = vpop.permute.xlu0 %177
    %v179 = vlaneseq
    %v180 = vshrl.u32 %v179, 7
    %v181 = vadd.s32 %v180, 48
    %182 = vset.pattern.permute.xlu0 %v181
    %183 = vperm.xlu0 %182, %v142
    %v184 = vpop.permute.xlu0 %183
    %v185 = vlaneseq
    %v186 = vshrl.u32 %v185, 7
    %v187 = vadd.s32 %v186, 56
    %188 = vset.pattern.permute.xlu0 %v187
    %189 = vperm.xlu0 %188, %v142
    %v190 = vpop.permute.xlu0 %189
    %v191 = vlaneseq
    %v192 = vshrl.u32 %v191, 7
    %v193 = vadd.s32 %v192, 64
    %194 = vset.pattern.permute.xlu0 %v193
    %195 = vperm.xlu0 %194, %v142
    %v196 = vpop.permute.xlu0 %195
    %v197 = vlaneseq
    %v198 = vshrl.u32 %v197, 7
    %v199 = vadd.s32 %v198, 72
    %200 = vset.pattern.permute.xlu0 %v199
    %201 = vperm.xlu0 %200, %v142
    %v202 = vpop.permute.xlu0 %201
    %v203 = vlaneseq
    %v204 = vshrl.u32 %v203, 7
    %v205 = vadd.s32 %v204, 80
    %206 = vset.pattern.permute.xlu0 %v205
    %207 = vperm.xlu0 %206, %v142
    %v208 = vpop.permute.xlu0 %207
    %v209 = vlaneseq
    %v210 = vshrl.u32 %v209, 7
    %v211 = vadd.s32 %v210, 88
    %212 = vset.pattern.permute.xlu0 %v211
    %213 = vperm.xlu0 %212, %v142
    %v214 = vpop.permute.xlu0 %213
    %v215 = vlaneseq
    %v216 = vshrl.u32 %v215, 7
    %v217 = vadd.s32 %v216, 96
    %218 = vset.pattern.permute.xlu0 %v217
    %219 = vperm.xlu0 %218, %v142
    %v220 = vpop.permute.xlu0 %219
    %v221 = vlaneseq
    %v222 = vshrl.u32 %v221, 7
    %v223 = vadd.s32 %v222, 104
    %224 = vset.pattern.permute.xlu0 %v223
    %225 = vperm.xlu0 %224, %v142
    %v226 = vpop.permute.xlu0 %225
    %v227 = vlaneseq
    %v228 = vshrl.u32 %v227, 7
    %v229 = vadd.s32 %v228, 112
    %230 = vset.pattern.permute.xlu0 %v229
    %231 = vperm.xlu0 %230, %v142
    %v232 = vpop.permute.xlu0 %231
    %v233 = vlaneseq
    %v234 = vshrl.u32 %v233, 7
    %v235 = vadd.s32 %v234, 120
    %236 = vset.pattern.permute.xlu0 %v235
    %237 = vperm.xlu0 %236, %v142
    %v238 = vpop.permute.xlu0 %237
    %v239 = vperm.slane %v40, 2
    %v240 = vlaneseq
    %v241 = vshrl.u32 %v240, 7
    %243 = vset.pattern.permute.xlu0 %v241
    %244 = vperm.xlu0 %243, %v239
    %v245 = vpop.permute.xlu0 %244
    %v246 = vlaneseq
    %v247 = vshrl.u32 %v246, 7
    %v248 = vadd.s32 %v247, 8
    %249 = vset.pattern.permute.xlu0 %v248
    %250 = vperm.xlu0 %249, %v239
    %v251 = vpop.permute.xlu0 %250
    %v252 = vlaneseq
    %v253 = vshrl.u32 %v252, 7
    %v254 = vadd.s32 %v253, 16
    %255 = vset.pattern.permute.xlu0 %v254
    %256 = vperm.xlu0 %255, %v239
    %v257 = vpop.permute.xlu0 %256
    %v258 = vlaneseq
    %v259 = vshrl.u32 %v258, 7
    %v260 = vadd.s32 %v259, 24
    %261 = vset.pattern.permute.xlu0 %v260
    %262 = vperm.xlu0 %261, %v239
    %v263 = vpop.permute.xlu0 %262
    %v264 = vlaneseq
    %v265 = vshrl.u32 %v264, 7
    %v266 = vadd.s32 %v265, 32
    %267 = vset.pattern.permute.xlu0 %v266
    %268 = vperm.xlu0 %267, %v239
    %v269 = vpop.permute.xlu0 %268
    %v270 = vlaneseq
    %v271 = vshrl.u32 %v270, 7
    %v272 = vadd.s32 %v271, 40
    %273 = vset.pattern.permute.xlu0 %v272
    %274 = vperm.xlu0 %273, %v239
    %v275 = vpop.permute.xlu0 %274
    %v276 = vlaneseq
    %v277 = vshrl.u32 %v276, 7
    %v278 = vadd.s32 %v277, 48
    %279 = vset.pattern.permute.xlu0 %v278
    %280 = vperm.xlu0 %279, %v239
    %v281 = vpop.permute.xlu0 %280
    %v282 = vlaneseq
    %v283 = vshrl.u32 %v282, 7
    %v284 = vadd.s32 %v283, 56
    %285 = vset.pattern.permute.xlu0 %v284
    %286 = vperm.xlu0 %285, %v239
    %v287 = vpop.permute.xlu0 %286
    %v288 = vlaneseq
    %v289 = vshrl.u32 %v288, 7
    %v290 = vadd.s32 %v289, 64
    %291 = vset.pattern.permute.xlu0 %v290
    %292 = vperm.xlu0 %291, %v239
    %v293 = vpop.permute.xlu0 %292
    %v294 = vlaneseq
    %v295 = vshrl.u32 %v294, 7
    %v296 = vadd.s32 %v295, 72
    %297 = vset.pattern.permute.xlu0 %v296
    %298 = vperm.xlu0 %297, %v239
    %v299 = vpop.permute.xlu0 %298
    %v300 = vlaneseq
    %v301 = vshrl.u32 %v300, 7
    %v302 = vadd.s32 %v301, 80
    %303 = vset.pattern.permute.xlu0 %v302
    %304 = vperm.xlu0 %303, %v239
    %v305 = vpop.permute.xlu0 %304
    %v306 = vlaneseq
    %v307 = vshrl.u32 %v306, 7
    %v308 = vadd.s32 %v307, 88
    %309 = vset.pattern.permute.xlu0 %v308
    %310 = vperm.xlu0 %309, %v239
    %v311 = vpop.permute.xlu0 %310
    %v312 = vlaneseq
    %v313 = vshrl.u32 %v312, 7
    %v314 = vadd.s32 %v313, 96
    %315 = vset.pattern.permute.xlu0 %v314
    %316 = vperm.xlu0 %315, %v239
    %v317 = vpop.permute.xlu0 %316
    %v318 = vlaneseq
    %v319 = vshrl.u32 %v318, 7
    %v320 = vadd.s32 %v319, 104
    %321 = vset.pattern.permute.xlu0 %v320
    %322 = vperm.xlu0 %321, %v239
    %v323 = vpop.permute.xlu0 %322
    %v324 = vlaneseq
    %v325 = vshrl.u32 %v324, 7
    %v326 = vadd.s32 %v325, 112
    %327 = vset.pattern.permute.xlu0 %v326
    %328 = vperm.xlu0 %327, %v239
    %v329 = vpop.permute.xlu0 %328
    %v330 = vlaneseq
    %v331 = vshrl.u32 %v330, 7
    %v332 = vadd.s32 %v331, 120
    %333 = vset.pattern.permute.xlu0 %v332
    %334 = vperm.xlu0 %333, %v239
    %v335 = vpop.permute.xlu0 %334
    %v336 = vperm.slane %v40, 3
    %v337 = vlaneseq
    %v338 = vshrl.u32 %v337, 7
    %340 = vset.pattern.permute.xlu0 %v338
    %341 = vperm.xlu0 %340, %v336
    %v342 = vpop.permute.xlu0 %341
    %v343 = vlaneseq
    %v344 = vshrl.u32 %v343, 7
    %v345 = vadd.s32 %v344, 8
    %346 = vset.pattern.permute.xlu0 %v345
    %347 = vperm.xlu0 %346, %v336
    %v348 = vpop.permute.xlu0 %347
    %v349 = vlaneseq
    %v350 = vshrl.u32 %v349, 7
    %v351 = vadd.s32 %v350, 16
    %352 = vset.pattern.permute.xlu0 %v351
    %353 = vperm.xlu0 %352, %v336
    %v354 = vpop.permute.xlu0 %353
    %v355 = vlaneseq
    %v356 = vshrl.u32 %v355, 7
    %v357 = vadd.s32 %v356, 24
    %358 = vset.pattern.permute.xlu0 %v357
    %359 = vperm.xlu0 %358, %v336
    %v360 = vpop.permute.xlu0 %359
    %v361 = vlaneseq
    %v362 = vshrl.u32 %v361, 7
    %v363 = vadd.s32 %v362, 32
    %364 = vset.pattern.permute.xlu0 %v363
    %365 = vperm.xlu0 %364, %v336
    %v366 = vpop.permute.xlu0 %365
    %v367 = vlaneseq
    %v368 = vshrl.u32 %v367, 7
    %v369 = vadd.s32 %v368, 40
    %370 = vset.pattern.permute.xlu0 %v369
    %371 = vperm.xlu0 %370, %v336
    %v372 = vpop.permute.xlu0 %371
    %v373 = vlaneseq
    %v374 = vshrl.u32 %v373, 7
    %v375 = vadd.s32 %v374, 48
    %376 = vset.pattern.permute.xlu0 %v375
    %377 = vperm.xlu0 %376, %v336
    %v378 = vpop.permute.xlu0 %377
    %v379 = vlaneseq
    %v380 = vshrl.u32 %v379, 7
    %v381 = vadd.s32 %v380, 56
    %382 = vset.pattern.permute.xlu0 %v381
    %383 = vperm.xlu0 %382, %v336
    %v384 = vpop.permute.xlu0 %383
    %v385 = vlaneseq
    %v386 = vshrl.u32 %v385, 7
    %v387 = vadd.s32 %v386, 64
    %388 = vset.pattern.permute.xlu0 %v387
    %389 = vperm.xlu0 %388, %v336
    %v390 = vpop.permute.xlu0 %389
    %v391 = vlaneseq
    %v392 = vshrl.u32 %v391, 7
    %v393 = vadd.s32 %v392, 72
    %394 = vset.pattern.permute.xlu0 %v393
    %395 = vperm.xlu0 %394, %v336
    %v396 = vpop.permute.xlu0 %395
    %v397 = vlaneseq
    %v398 = vshrl.u32 %v397, 7
    %v399 = vadd.s32 %v398, 80
    %400 = vset.pattern.permute.xlu0 %v399
    %401 = vperm.xlu0 %400, %v336
    %v402 = vpop.permute.xlu0 %401
    %v403 = vlaneseq
    %v404 = vshrl.u32 %v403, 7
    %v405 = vadd.s32 %v404, 88
    %406 = vset.pattern.permute.xlu0 %v405
    %407 = vperm.xlu0 %406, %v336
    %v408 = vpop.permute.xlu0 %407
    %v409 = vlaneseq
    %v410 = vshrl.u32 %v409, 7
    %v411 = vadd.s32 %v410, 96
    %412 = vset.pattern.permute.xlu0 %v411
    %413 = vperm.xlu0 %412, %v336
    %v414 = vpop.permute.xlu0 %413
    %v415 = vlaneseq
    %v416 = vshrl.u32 %v415, 7
    %v417 = vadd.s32 %v416, 104
    %418 = vset.pattern.permute.xlu0 %v417
    %419 = vperm.xlu0 %418, %v336
    %v420 = vpop.permute.xlu0 %419
    %v421 = vlaneseq
    %v422 = vshrl.u32 %v421, 7
    %v423 = vadd.s32 %v422, 112
    %424 = vset.pattern.permute.xlu0 %v423
    %425 = vperm.xlu0 %424, %v336
    %v426 = vpop.permute.xlu0 %425
    %v427 = vlaneseq
    %v428 = vshrl.u32 %v427, 7
    %v429 = vadd.s32 %v428, 120
    %430 = vset.pattern.permute.xlu0 %v429
    %431 = vperm.xlu0 %430, %v336
    %v432 = vpop.permute.xlu0 %431
    %v433 = vperm.slane %v40, 4
    %v434 = vlaneseq
    %v435 = vshrl.u32 %v434, 7
    %437 = vset.pattern.permute.xlu0 %v435
    %438 = vperm.xlu0 %437, %v433
    %v439 = vpop.permute.xlu0 %438
    %v440 = vlaneseq
    %v441 = vshrl.u32 %v440, 7
    %v442 = vadd.s32 %v441, 8
    %443 = vset.pattern.permute.xlu0 %v442
    %444 = vperm.xlu0 %443, %v433
    %v445 = vpop.permute.xlu0 %444
    %v446 = vlaneseq
    %v447 = vshrl.u32 %v446, 7
    %v448 = vadd.s32 %v447, 16
    %449 = vset.pattern.permute.xlu0 %v448
    %450 = vperm.xlu0 %449, %v433
    %v451 = vpop.permute.xlu0 %450
    %v452 = vlaneseq
    %v453 = vshrl.u32 %v452, 7
    %v454 = vadd.s32 %v453, 24
    %455 = vset.pattern.permute.xlu0 %v454
    %456 = vperm.xlu0 %455, %v433
    %v457 = vpop.permute.xlu0 %456
    %v458 = vlaneseq
    %v459 = vshrl.u32 %v458, 7
    %v460 = vadd.s32 %v459, 32
    %461 = vset.pattern.permute.xlu0 %v460
    %462 = vperm.xlu0 %461, %v433
    %v463 = vpop.permute.xlu0 %462
    %v464 = vlaneseq
    %v465 = vshrl.u32 %v464, 7
    %v466 = vadd.s32 %v465, 40
    %467 = vset.pattern.permute.xlu0 %v466
    %468 = vperm.xlu0 %467, %v433
    %v469 = vpop.permute.xlu0 %468
    %v470 = vlaneseq
    %v471 = vshrl.u32 %v470, 7
    %v472 = vadd.s32 %v471, 48
    %473 = vset.pattern.permute.xlu0 %v472
    %474 = vperm.xlu0 %473, %v433
    %v475 = vpop.permute.xlu0 %474
    %v476 = vlaneseq
    %v477 = vshrl.u32 %v476, 7
    %v478 = vadd.s32 %v477, 56
    %479 = vset.pattern.permute.xlu0 %v478
    %480 = vperm.xlu0 %479, %v433
    %v481 = vpop.permute.xlu0 %480
    %v482 = vlaneseq
    %v483 = vshrl.u32 %v482, 7
    %v484 = vadd.s32 %v483, 64
    %485 = vset.pattern.permute.xlu0 %v484
    %486 = vperm.xlu0 %485, %v433
    %v487 = vpop.permute.xlu0 %486
    %v488 = vlaneseq
    %v489 = vshrl.u32 %v488, 7
    %v490 = vadd.s32 %v489, 72
    %491 = vset.pattern.permute.xlu0 %v490
    %492 = vperm.xlu0 %491, %v433
    %v493 = vpop.permute.xlu0 %492
    %v494 = vlaneseq
    %v495 = vshrl.u32 %v494, 7
    %v496 = vadd.s32 %v495, 80
    %497 = vset.pattern.permute.xlu0 %v496
    %498 = vperm.xlu0 %497, %v433
    %v499 = vpop.permute.xlu0 %498
    %v500 = vlaneseq
    %v501 = vshrl.u32 %v500, 7
    %v502 = vadd.s32 %v501, 88
    %503 = vset.pattern.permute.xlu0 %v502
    %504 = vperm.xlu0 %503, %v433
    %v505 = vpop.permute.xlu0 %504
    %v506 = vlaneseq
    %v507 = vshrl.u32 %v506, 7
    %v508 = vadd.s32 %v507, 96
    %509 = vset.pattern.permute.xlu0 %v508
    %510 = vperm.xlu0 %509, %v433
    %v511 = vpop.permute.xlu0 %510
    %v512 = vlaneseq
    %v513 = vshrl.u32 %v512, 7
    %v514 = vadd.s32 %v513, 104
    %515 = vset.pattern.permute.xlu0 %v514
    %516 = vperm.xlu0 %515, %v433
    %v517 = vpop.permute.xlu0 %516
    %v518 = vlaneseq
    %v519 = vshrl.u32 %v518, 7
    %v520 = vadd.s32 %v519, 112
    %521 = vset.pattern.permute.xlu0 %v520
    %522 = vperm.xlu0 %521, %v433
    %v523 = vpop.permute.xlu0 %522
    %v524 = vlaneseq
    %v525 = vshrl.u32 %v524, 7
    %v526 = vadd.s32 %v525, 120
    %527 = vset.pattern.permute.xlu0 %v526
    %528 = vperm.xlu0 %527, %v433
    %v529 = vpop.permute.xlu0 %528
    %v530 = vperm.slane %v40, 5
    %v531 = vlaneseq
    %v532 = vshrl.u32 %v531, 7
    %534 = vset.pattern.permute.xlu0 %v532
    %535 = vperm.xlu0 %534, %v530
    %v536 = vpop.permute.xlu0 %535
    %v537 = vlaneseq
    %v538 = vshrl.u32 %v537, 7
    %v539 = vadd.s32 %v538, 8
    %540 = vset.pattern.permute.xlu0 %v539
    %541 = vperm.xlu0 %540, %v530
    %v542 = vpop.permute.xlu0 %541
    %v543 = vlaneseq
    %v544 = vshrl.u32 %v543, 7
    %v545 = vadd.s32 %v544, 16
    %546 = vset.pattern.permute.xlu0 %v545
    %547 = vperm.xlu0 %546, %v530
    %v548 = vpop.permute.xlu0 %547
    %v549 = vlaneseq
    %v550 = vshrl.u32 %v549, 7
    %v551 = vadd.s32 %v550, 24
    %552 = vset.pattern.permute.xlu0 %v551
    %553 = vperm.xlu0 %552, %v530
    %v554 = vpop.permute.xlu0 %553
    %v555 = vlaneseq
    %v556 = vshrl.u32 %v555, 7
    %v557 = vadd.s32 %v556, 32
    %558 = vset.pattern.permute.xlu0 %v557
    %559 = vperm.xlu0 %558, %v530
    %v560 = vpop.permute.xlu0 %559
    %v561 = vlaneseq
    %v562 = vshrl.u32 %v561, 7
    %v563 = vadd.s32 %v562, 40
    %564 = vset.pattern.permute.xlu0 %v563
    %565 = vperm.xlu0 %564, %v530
    %v566 = vpop.permute.xlu0 %565
    %v567 = vlaneseq
    %v568 = vshrl.u32 %v567, 7
    %v569 = vadd.s32 %v568, 48
    %570 = vset.pattern.permute.xlu0 %v569
    %571 = vperm.xlu0 %570, %v530
    %v572 = vpop.permute.xlu0 %571
    %v573 = vlaneseq
    %v574 = vshrl.u32 %v573, 7
    %v575 = vadd.s32 %v574, 56
    %576 = vset.pattern.permute.xlu0 %v575
    %577 = vperm.xlu0 %576, %v530
    %v578 = vpop.permute.xlu0 %577
    %v579 = vlaneseq
    %v580 = vshrl.u32 %v579, 7
    %v581 = vadd.s32 %v580, 64
    %582 = vset.pattern.permute.xlu0 %v581
    %583 = vperm.xlu0 %582, %v530
    %v584 = vpop.permute.xlu0 %583
    %v585 = vlaneseq
    %v586 = vshrl.u32 %v585, 7
    %v587 = vadd.s32 %v586, 72
    %588 = vset.pattern.permute.xlu0 %v587
    %589 = vperm.xlu0 %588, %v530
    %v590 = vpop.permute.xlu0 %589
    %v591 = vlaneseq
    %v592 = vshrl.u32 %v591, 7
    %v593 = vadd.s32 %v592, 80
    %594 = vset.pattern.permute.xlu0 %v593
    %595 = vperm.xlu0 %594, %v530
    %v596 = vpop.permute.xlu0 %595
    %v597 = vlaneseq
    %v598 = vshrl.u32 %v597, 7
    %v599 = vadd.s32 %v598, 88
    %600 = vset.pattern.permute.xlu0 %v599
    %601 = vperm.xlu0 %600, %v530
    %v602 = vpop.permute.xlu0 %601
    %v603 = vlaneseq
    %v604 = vshrl.u32 %v603, 7
    %v605 = vadd.s32 %v604, 96
    %606 = vset.pattern.permute.xlu0 %v605
    %607 = vperm.xlu0 %606, %v530
    %v608 = vpop.permute.xlu0 %607
    %v609 = vlaneseq
    %v610 = vshrl.u32 %v609, 7
    %v611 = vadd.s32 %v610, 104
    %612 = vset.pattern.permute.xlu0 %v611
    %613 = vperm.xlu0 %612, %v530
    %v614 = vpop.permute.xlu0 %613
    %v615 = vlaneseq
    %v616 = vshrl.u32 %v615, 7
    %v617 = vadd.s32 %v616, 112
    %618 = vset.pattern.permute.xlu0 %v617
    %619 = vperm.xlu0 %618, %v530
    %v620 = vpop.permute.xlu0 %619
    %v621 = vlaneseq
    %v622 = vshrl.u32 %v621, 7
    %v623 = vadd.s32 %v622, 120
    %624 = vset.pattern.permute.xlu0 %v623
    %625 = vperm.xlu0 %624, %v530
    %v626 = vpop.permute.xlu0 %625
    %v627 = vperm.slane %v40, 6
    %v628 = vlaneseq
    %v629 = vshrl.u32 %v628, 7
    %631 = vset.pattern.permute.xlu0 %v629
    %632 = vperm.xlu0 %631, %v627
    %v633 = vpop.permute.xlu0 %632
    %v634 = vlaneseq
    %v635 = vshrl.u32 %v634, 7
    %v636 = vadd.s32 %v635, 8
    %637 = vset.pattern.permute.xlu0 %v636
    %638 = vperm.xlu0 %637, %v627
    %v639 = vpop.permute.xlu0 %638
    %v640 = vlaneseq
    %v641 = vshrl.u32 %v640, 7
    %v642 = vadd.s32 %v641, 16
    %643 = vset.pattern.permute.xlu0 %v642
    %644 = vperm.xlu0 %643, %v627
    %v645 = vpop.permute.xlu0 %644
    %v646 = vlaneseq
    %v647 = vshrl.u32 %v646, 7
    %v648 = vadd.s32 %v647, 24
    %649 = vset.pattern.permute.xlu0 %v648
    %650 = vperm.xlu0 %649, %v627
    %v651 = vpop.permute.xlu0 %650
    %v652 = vlaneseq
    %v653 = vshrl.u32 %v652, 7
    %v654 = vadd.s32 %v653, 32
    %655 = vset.pattern.permute.xlu0 %v654
    %656 = vperm.xlu0 %655, %v627
    %v657 = vpop.permute.xlu0 %656
    %v658 = vlaneseq
    %v659 = vshrl.u32 %v658, 7
    %v660 = vadd.s32 %v659, 40
    %661 = vset.pattern.permute.xlu0 %v660
    %662 = vperm.xlu0 %661, %v627
    %v663 = vpop.permute.xlu0 %662
    %v664 = vlaneseq
    %v665 = vshrl.u32 %v664, 7
    %v666 = vadd.s32 %v665, 48
    %667 = vset.pattern.permute.xlu0 %v666
    %668 = vperm.xlu0 %667, %v627
    %v669 = vpop.permute.xlu0 %668
    %v670 = vlaneseq
    %v671 = vshrl.u32 %v670, 7
    %v672 = vadd.s32 %v671, 56
    %673 = vset.pattern.permute.xlu0 %v672
    %674 = vperm.xlu0 %673, %v627
    %v675 = vpop.permute.xlu0 %674
    %v676 = vlaneseq
    %v677 = vshrl.u32 %v676, 7
    %v678 = vadd.s32 %v677, 64
    %679 = vset.pattern.permute.xlu0 %v678
    %680 = vperm.xlu0 %679, %v627
    %v681 = vpop.permute.xlu0 %680
    %v682 = vlaneseq
    %v683 = vshrl.u32 %v682, 7
    %v684 = vadd.s32 %v683, 72
    %685 = vset.pattern.permute.xlu0 %v684
    %686 = vperm.xlu0 %685, %v627
    %v687 = vpop.permute.xlu0 %686
    %v688 = vlaneseq
    %v689 = vshrl.u32 %v688, 7
    %v690 = vadd.s32 %v689, 80
    %691 = vset.pattern.permute.xlu0 %v690
    %692 = vperm.xlu0 %691, %v627
    %v693 = vpop.permute.xlu0 %692
    %v694 = vlaneseq
    %v695 = vshrl.u32 %v694, 7
    %v696 = vadd.s32 %v695, 88
    %697 = vset.pattern.permute.xlu0 %v696
    %698 = vperm.xlu0 %697, %v627
    %v699 = vpop.permute.xlu0 %698
    %v700 = vlaneseq
    %v701 = vshrl.u32 %v700, 7
    %v702 = vadd.s32 %v701, 96
    %703 = vset.pattern.permute.xlu0 %v702
    %704 = vperm.xlu0 %703, %v627
    %v705 = vpop.permute.xlu0 %704
    %v706 = vlaneseq
    %v707 = vshrl.u32 %v706, 7
    %v708 = vadd.s32 %v707, 104
    %709 = vset.pattern.permute.xlu0 %v708
    %710 = vperm.xlu0 %709, %v627
    %v711 = vpop.permute.xlu0 %710
    %v712 = vlaneseq
    %v713 = vshrl.u32 %v712, 7
    %v714 = vadd.s32 %v713, 112
    %715 = vset.pattern.permute.xlu0 %v714
    %716 = vperm.xlu0 %715, %v627
    %v717 = vpop.permute.xlu0 %716
    %v718 = vlaneseq
    %v719 = vshrl.u32 %v718, 7
    %v720 = vadd.s32 %v719, 120
    %721 = vset.pattern.permute.xlu0 %v720
    %722 = vperm.xlu0 %721, %v627
    %v723 = vpop.permute.xlu0 %722
    %v724 = vperm.slane %v40, 7
    %v725 = vlaneseq
    %v726 = vshrl.u32 %v725, 7
    %728 = vset.pattern.permute.xlu0 %v726
    %729 = vperm.xlu0 %728, %v724
    %v730 = vpop.permute.xlu0 %729
    %v731 = vlaneseq
    %v732 = vshrl.u32 %v731, 7
    %v733 = vadd.s32 %v732, 8
    %734 = vset.pattern.permute.xlu0 %v733
    %735 = vperm.xlu0 %734, %v724
    %v736 = vpop.permute.xlu0 %735
    %v737 = vlaneseq
    %v738 = vshrl.u32 %v737, 7
    %v739 = vadd.s32 %v738, 16
    %740 = vset.pattern.permute.xlu0 %v739
    %741 = vperm.xlu0 %740, %v724
    %v742 = vpop.permute.xlu0 %741
    %v743 = vlaneseq
    %v744 = vshrl.u32 %v743, 7
    %v745 = vadd.s32 %v744, 24
    %746 = vset.pattern.permute.xlu0 %v745
    %747 = vperm.xlu0 %746, %v724
    %v748 = vpop.permute.xlu0 %747
    %v749 = vlaneseq
    %v750 = vshrl.u32 %v749, 7
    %v751 = vadd.s32 %v750, 32
    %752 = vset.pattern.permute.xlu0 %v751
    %753 = vperm.xlu0 %752, %v724
    %v754 = vpop.permute.xlu0 %753
    %v755 = vlaneseq
    %v756 = vshrl.u32 %v755, 7
    %v757 = vadd.s32 %v756, 40
    %758 = vset.pattern.permute.xlu0 %v757
    %759 = vperm.xlu0 %758, %v724
    %v760 = vpop.permute.xlu0 %759
    %v761 = vlaneseq
    %v762 = vshrl.u32 %v761, 7
    %v763 = vadd.s32 %v762, 48
    %764 = vset.pattern.permute.xlu0 %v763
    %765 = vperm.xlu0 %764, %v724
    %v766 = vpop.permute.xlu0 %765
    %v767 = vlaneseq
    %v768 = vshrl.u32 %v767, 7
    %v769 = vadd.s32 %v768, 56
    %770 = vset.pattern.permute.xlu0 %v769
    %771 = vperm.xlu0 %770, %v724
    %v772 = vpop.permute.xlu0 %771
    %v773 = vlaneseq
    %v774 = vshrl.u32 %v773, 7
    %v775 = vadd.s32 %v774, 64
    %776 = vset.pattern.permute.xlu0 %v775
    %777 = vperm.xlu0 %776, %v724
    %v778 = vpop.permute.xlu0 %777
    %v779 = vlaneseq
    %v780 = vshrl.u32 %v779, 7
    %v781 = vadd.s32 %v780, 72
    %782 = vset.pattern.permute.xlu0 %v781
    %783 = vperm.xlu0 %782, %v724
    %v784 = vpop.permute.xlu0 %783
    %v785 = vlaneseq
    %v786 = vshrl.u32 %v785, 7
    %v787 = vadd.s32 %v786, 80
    %788 = vset.pattern.permute.xlu0 %v787
    %789 = vperm.xlu0 %788, %v724
    %v790 = vpop.permute.xlu0 %789
    %v791 = vlaneseq
    %v792 = vshrl.u32 %v791, 7
    %v793 = vadd.s32 %v792, 88
    %794 = vset.pattern.permute.xlu0 %v793
    %795 = vperm.xlu0 %794, %v724
    %v796 = vpop.permute.xlu0 %795
    %v797 = vlaneseq
    %v798 = vshrl.u32 %v797, 7
    %v799 = vadd.s32 %v798, 96
    %800 = vset.pattern.permute.xlu0 %v799
    %801 = vperm.xlu0 %800, %v724
    %v802 = vpop.permute.xlu0 %801
    %v803 = vlaneseq
    %v804 = vshrl.u32 %v803, 7
    %v805 = vadd.s32 %v804, 104
    %806 = vset.pattern.permute.xlu0 %v805
    %807 = vperm.xlu0 %806, %v724
    %v808 = vpop.permute.xlu0 %807
    %v809 = vlaneseq
    %v810 = vshrl.u32 %v809, 7
    %v811 = vadd.s32 %v810, 112
    %812 = vset.pattern.permute.xlu0 %v811
    %813 = vperm.xlu0 %812, %v724
    %v814 = vpop.permute.xlu0 %813
    %v815 = vlaneseq
    %v816 = vshrl.u32 %v815, 7
    %v817 = vadd.s32 %v816, 120
    %818 = vset.pattern.permute.xlu0 %v817
    %819 = vperm.xlu0 %818, %v724
    %v820 = vpop.permute.xlu0 %819
    %vm821 = vcmask 7168
    %v822 = vsel %vm821, %v51, %v439
    %v823 = vsel %vm821, %v57, %v445
    %v824 = vsel %vm821, %v63, %v451
    %v825 = vsel %vm821, %v69, %v457
    %v826 = vsel %vm821, %v75, %v463
    %v827 = vsel %vm821, %v81, %v469
    %v828 = vsel %vm821, %v87, %v475
    %v829 = vsel %vm821, %v93, %v481
    %v830 = vsel %vm821, %v99, %v487
    %v831 = vsel %vm821, %v105, %v493
    %v832 = vsel %vm821, %v111, %v499
    %v833 = vsel %vm821, %v117, %v505
    %v834 = vsel %vm821, %v123, %v511
    %v835 = vsel %vm821, %v129, %v517
    %v836 = vsel %vm821, %v135, %v523
    %v837 = vsel %vm821, %v141, %v529
    %v838 = vsel %vm821, %v148, %v536
    %v839 = vsel %vm821, %v154, %v542
    %v840 = vsel %vm821, %v160, %v548
    %v841 = vsel %vm821, %v166, %v554
    %v842 = vsel %vm821, %v172, %v560
    %v843 = vsel %vm821, %v178, %v566
    %v844 = vsel %vm821, %v184, %v572
    %v845 = vsel %vm821, %v190, %v578
    %v846 = vsel %vm821, %v196, %v584
    %v847 = vsel %vm821, %v202, %v590
    %v848 = vsel %vm821, %v208, %v596
    %v849 = vsel %vm821, %v214, %v602
    %v850 = vsel %vm821, %v220, %v608
    %v851 = vsel %vm821, %v226, %v614
    %v852 = vsel %vm821, %v232, %v620
    %v853 = vsel %vm821, %v238, %v626
    %v854 = vsel %vm821, %v245, %v633
    %v855 = vsel %vm821, %v251, %v639
    %v856 = vsel %vm821, %v257, %v645
    %v857 = vsel %vm821, %v263, %v651
    %v858 = vsel %vm821, %v269, %v657
    %v859 = vsel %vm821, %v275, %v663
    %v860 = vsel %vm821, %v281, %v669
    %v861 = vsel %vm821, %v287, %v675
    %v862 = vsel %vm821, %v293, %v681
    %v863 = vsel %vm821, %v299, %v687
    %v864 = vsel %vm821, %v305, %v693
    %v865 = vsel %vm821, %v311, %v699
    %v866 = vsel %vm821, %v317, %v705
    %v867 = vsel %vm821, %v323, %v711
    %v868 = vsel %vm821, %v329, %v717
    %v869 = vsel %vm821, %v335, %v723
    %v870 = vsel %vm821, %v342, %v730
    %v871 = vsel %vm821, %v348, %v736
    %v872 = vsel %vm821, %v354, %v742
    %v873 = vsel %vm821, %v360, %v748
    %v874 = vsel %vm821, %v366, %v754
    %v875 = vsel %vm821, %v372, %v760
    %v876 = vsel %vm821, %v378, %v766
    %v877 = vsel %vm821, %v384, %v772
    %v878 = vsel %vm821, %v390, %v778
    %v879 = vsel %vm821, %v396, %v784
    %v880 = vsel %vm821, %v402, %v790
    %v881 = vsel %vm821, %v408, %v796
    %v882 = vsel %vm821, %v414, %v802
    %v883 = vsel %vm821, %v420, %v808
    %v884 = vsel %vm821, %v426, %v814
    %v885 = vsel %vm821, %v432, %v820
    %v886 = vrot.slane %v854, 4
    %vm887 = vcmask 1047556
    %v888 = vsel %vm887, %v886, %v822
    %v889 = vrot.slane %v822, 4
    %v890 = vsel %vm887, %v854, %v889
    %v892 = vunpack.c.l.s4 1983009808
    %v893 = vunpack.c.0.s8 %v892
    %v894 = vperm.slane %v888, %v893
    %v896 = vunpack.c.l.s4 1983009808
    %v897 = vunpack.c.0.s8 %v896
    %v898 = vperm.slane %v890, %v897
    %v899 = vrot.slane %v870, 4
    %v900 = vsel %vm887, %v899, %v838
    %v901 = vrot.slane %v838, 4
    %v902 = vsel %vm887, %v870, %v901
    %v904 = vunpack.c.l.s4 1983009808
    %v905 = vunpack.c.0.s8 %v904
    %v906 = vperm.slane %v900, %v905
    %v908 = vunpack.c.l.s4 1983009808
    %v909 = vunpack.c.0.s8 %v908
    %v910 = vperm.slane %v902, %v909
    %v911 = vrot.slane %v906, 4
    %v912 = vsel %vm887, %v911, %v894
    %v913 = vrot.slane %v894, 4
    %v914 = vsel %vm887, %v906, %v913
    %v916 = vunpack.c.l.s4 1934713408
    %v917 = vunpack.c.0.s8 %v916
    %v918 = vperm.slane %v912, %v917
    %v920 = vunpack.c.l.s4 1934713408
    %v921 = vunpack.c.0.s8 %v920
    %v922 = vperm.slane %v914, %v921
    %v923 = vrot.slane %v910, 4
    %v924 = vsel %vm887, %v923, %v898
    %v925 = vrot.slane %v898, 4
    %v926 = vsel %vm887, %v910, %v925
    %v928 = vunpack.c.l.s4 1934713408
    %v929 = vunpack.c.0.s8 %v928
    %v930 = vperm.slane %v924, %v929
    %v932 = vunpack.c.l.s4 1934713408
    %v933 = vunpack.c.0.s8 %v932
    %v934 = vperm.slane %v926, %v933
    %v935 = vrot.slane %v918, 4
    %v936 = vsel %vm887, 0.0, %v935
    %v937 = vrot.slane %v922, 4
    %v938 = vsel %vm887, 0.0, %v937
    %v939 = vrot.slane %v930, 4
    %v940 = vsel %vm887, 0.0, %v939
    %v941 = vrot.slane %v934, 4
    %v942 = vsel %vm887, 0.0, %v941
    %v943 = vrot.slane %v855, 4
    %v944 = vsel %vm887, %v943, %v823
    %v945 = vrot.slane %v823, 4
    %v946 = vsel %vm887, %v855, %v945
    %v948 = vunpack.c.l.s4 1983009808
    %v949 = vunpack.c.0.s8 %v948
    %v950 = vperm.slane %v944, %v949
    %v952 = vunpack.c.l.s4 1983009808
    %v953 = vunpack.c.0.s8 %v952
    %v954 = vperm.slane %v946, %v953
    %v955 = vrot.slane %v871, 4
    %v956 = vsel %vm887, %v955, %v839
    %v957 = vrot.slane %v839, 4
    %v958 = vsel %vm887, %v871, %v957
    %v960 = vunpack.c.l.s4 1983009808
    %v961 = vunpack.c.0.s8 %v960
    %v962 = vperm.slane %v956, %v961
    %v964 = vunpack.c.l.s4 1983009808
    %v965 = vunpack.c.0.s8 %v964
    %v966 = vperm.slane %v958, %v965
    %v967 = vrot.slane %v962, 4
    %v968 = vsel %vm887, %v967, %v950
    %v969 = vrot.slane %v950, 4
    %v970 = vsel %vm887, %v962, %v969
    %v972 = vunpack.c.l.s4 1934713408
    %v973 = vunpack.c.0.s8 %v972
    %v974 = vperm.slane %v968, %v973
    %v976 = vunpack.c.l.s4 1934713408
    %v977 = vunpack.c.0.s8 %v976
    %v978 = vperm.slane %v970, %v977
    %v979 = vrot.slane %v966, 4
    %v980 = vsel %vm887, %v979, %v954
    %v981 = vrot.slane %v954, 4
    %v982 = vsel %vm887, %v966, %v981
    %v984 = vunpack.c.l.s4 1934713408
    %v985 = vunpack.c.0.s8 %v984
    %v986 = vperm.slane %v980, %v985
    %v988 = vunpack.c.l.s4 1934713408
    %v989 = vunpack.c.0.s8 %v988
    %v990 = vperm.slane %v982, %v989
    %v991 = vrot.slane %v974, 4
    %v992 = vsel %vm887, 0.0, %v991
    %v993 = vrot.slane %v978, 4
    %v994 = vsel %vm887, 0.0, %v993
    %v995 = vrot.slane %v986, 4
    %v996 = vsel %vm887, 0.0, %v995
    %v997 = vrot.slane %v990, 4
    %v998 = vsel %vm887, 0.0, %v997
    %v999 = vrot.slane %v856, 4
    %v1000 = vsel %vm887, %v999, %v824
    %v1001 = vrot.slane %v824, 4
    %v1002 = vsel %vm887, %v856, %v1001
    %v1004 = vunpack.c.l.s4 1983009808
    %v1005 = vunpack.c.0.s8 %v1004
    %v1006 = vperm.slane %v1000, %v1005
    %v1008 = vunpack.c.l.s4 1983009808
    %v1009 = vunpack.c.0.s8 %v1008
    %v1010 = vperm.slane %v1002, %v1009
    %v1011 = vrot.slane %v872, 4
    %v1012 = vsel %vm887, %v1011, %v840
    %v1013 = vrot.slane %v840, 4
    %v1014 = vsel %vm887, %v872, %v1013
    %v1016 = vunpack.c.l.s4 1983009808
    %v1017 = vunpack.c.0.s8 %v1016
    %v1018 = vperm.slane %v1012, %v1017
    %v1020 = vunpack.c.l.s4 1983009808
    %v1021 = vunpack.c.0.s8 %v1020
    %v1022 = vperm.slane %v1014, %v1021
    %v1023 = vrot.slane %v1018, 4
    %v1024 = vsel %vm887, %v1023, %v1006
    %v1025 = vrot.slane %v1006, 4
    %v1026 = vsel %vm887, %v1018, %v1025
    %v1028 = vunpack.c.l.s4 1934713408
    %v1029 = vunpack.c.0.s8 %v1028
    %v1030 = vperm.slane %v1024, %v1029
    %v1032 = vunpack.c.l.s4 1934713408
    %v1033 = vunpack.c.0.s8 %v1032
    %v1034 = vperm.slane %v1026, %v1033
    %v1035 = vrot.slane %v1022, 4
    %v1036 = vsel %vm887, %v1035, %v1010
    %v1037 = vrot.slane %v1010, 4
    %v1038 = vsel %vm887, %v1022, %v1037
    %v1040 = vunpack.c.l.s4 1934713408
    %v1041 = vunpack.c.0.s8 %v1040
    %v1042 = vperm.slane %v1036, %v1041
    %v1044 = vunpack.c.l.s4 1934713408
    %v1045 = vunpack.c.0.s8 %v1044
    %v1046 = vperm.slane %v1038, %v1045
    %v1047 = vrot.slane %v1030, 4
    %v1048 = vsel %vm887, 0.0, %v1047
    %v1049 = vrot.slane %v1034, 4
    %v1050 = vsel %vm887, 0.0, %v1049
    %v1051 = vrot.slane %v1042, 4
    %v1052 = vsel %vm887, 0.0, %v1051
    %v1053 = vrot.slane %v1046, 4
    %v1054 = vsel %vm887, 0.0, %v1053
    %v1055 = vrot.slane %v857, 4
    %v1056 = vsel %vm887, %v1055, %v825
    %v1057 = vrot.slane %v825, 4
    %v1058 = vsel %vm887, %v857, %v1057
    %v1060 = vunpack.c.l.s4 1983009808
    %v1061 = vunpack.c.0.s8 %v1060
    %v1062 = vperm.slane %v1056, %v1061
    %v1064 = vunpack.c.l.s4 1983009808
    %v1065 = vunpack.c.0.s8 %v1064
    %v1066 = vperm.slane %v1058, %v1065
    %v1067 = vrot.slane %v873, 4
    %v1068 = vsel %vm887, %v1067, %v841
    %v1069 = vrot.slane %v841, 4
    %v1070 = vsel %vm887, %v873, %v1069
    %v1072 = vunpack.c.l.s4 1983009808
    %v1073 = vunpack.c.0.s8 %v1072
    %v1074 = vperm.slane %v1068, %v1073
    %v1076 = vunpack.c.l.s4 1983009808
    %v1077 = vunpack.c.0.s8 %v1076
    %v1078 = vperm.slane %v1070, %v1077
    %v1079 = vrot.slane %v1074, 4
    %v1080 = vsel %vm887, %v1079, %v1062
    %v1081 = vrot.slane %v1062, 4
    %v1082 = vsel %vm887, %v1074, %v1081
    %v1084 = vunpack.c.l.s4 1934713408
    %v1085 = vunpack.c.0.s8 %v1084
    %v1086 = vperm.slane %v1080, %v1085
    %v1088 = vunpack.c.l.s4 1934713408
    %v1089 = vunpack.c.0.s8 %v1088
    %v1090 = vperm.slane %v1082, %v1089
    %v1091 = vrot.slane %v1078, 4
    %v1092 = vsel %vm887, %v1091, %v1066
    %v1093 = vrot.slane %v1066, 4
    %v1094 = vsel %vm887, %v1078, %v1093
    %v1096 = vunpack.c.l.s4 1934713408
    %v1097 = vunpack.c.0.s8 %v1096
    %v1098 = vperm.slane %v1092, %v1097
    %v1100 = vunpack.c.l.s4 1934713408
    %v1101 = vunpack.c.0.s8 %v1100
    %v1102 = vperm.slane %v1094, %v1101
    %v1103 = vrot.slane %v1086, 4
    %v1104 = vsel %vm887, 0.0, %v1103
    %v1105 = vrot.slane %v1090, 4
    %v1106 = vsel %vm887, 0.0, %v1105
    %v1107 = vrot.slane %v1098, 4
    %v1108 = vsel %vm887, 0.0, %v1107
    %v1109 = vrot.slane %v1102, 4
    %v1110 = vsel %vm887, 0.0, %v1109
    %v1111 = vrot.slane %v858, 4
    %v1112 = vsel %vm887, %v1111, %v826
    %v1113 = vrot.slane %v826, 4
    %v1114 = vsel %vm887, %v858, %v1113
    %v1116 = vunpack.c.l.s4 1983009808
    %v1117 = vunpack.c.0.s8 %v1116
    %v1118 = vperm.slane %v1112, %v1117
    %v1120 = vunpack.c.l.s4 1983009808
    %v1121 = vunpack.c.0.s8 %v1120
    %v1122 = vperm.slane %v1114, %v1121
    %v1123 = vrot.slane %v874, 4
    %v1124 = vsel %vm887, %v1123, %v842
    %v1125 = vrot.slane %v842, 4
    %v1126 = vsel %vm887, %v874, %v1125
    %v1128 = vunpack.c.l.s4 1983009808
    %v1129 = vunpack.c.0.s8 %v1128
    %v1130 = vperm.slane %v1124, %v1129
    %v1132 = vunpack.c.l.s4 1983009808
    %v1133 = vunpack.c.0.s8 %v1132
    %v1134 = vperm.slane %v1126, %v1133
    %v1135 = vrot.slane %v1130, 4
    %v1136 = vsel %vm887, %v1135, %v1118
    %v1137 = vrot.slane %v1118, 4
    %v1138 = vsel %vm887, %v1130, %v1137
    %v1140 = vunpack.c.l.s4 1934713408
    %v1141 = vunpack.c.0.s8 %v1140
    %v1142 = vperm.slane %v1136, %v1141
    %v1144 = vunpack.c.l.s4 1934713408
    %v1145 = vunpack.c.0.s8 %v1144
    %v1146 = vperm.slane %v1138, %v1145
    %v1147 = vrot.slane %v1134, 4
    %v1148 = vsel %vm887, %v1147, %v1122
    %v1149 = vrot.slane %v1122, 4
    %v1150 = vsel %vm887, %v1134, %v1149
    %v1152 = vunpack.c.l.s4 1934713408
    %v1153 = vunpack.c.0.s8 %v1152
    %v1154 = vperm.slane %v1148, %v1153
    %v1156 = vunpack.c.l.s4 1934713408
    %v1157 = vunpack.c.0.s8 %v1156
    %v1158 = vperm.slane %v1150, %v1157
    %v1159 = vrot.slane %v1142, 4
    %v1160 = vsel %vm887, 0.0, %v1159
    %v1161 = vrot.slane %v1146, 4
    %v1162 = vsel %vm887, 0.0, %v1161
    %v1163 = vrot.slane %v1154, 4
    %v1164 = vsel %vm887, 0.0, %v1163
    %v1165 = vrot.slane %v1158, 4
    %v1166 = vsel %vm887, 0.0, %v1165
    %v1167 = vrot.slane %v859, 4
    %v1168 = vsel %vm887, %v1167, %v827
    %v1169 = vrot.slane %v827, 4
    %v1170 = vsel %vm887, %v859, %v1169
    %v1172 = vunpack.c.l.s4 1983009808
    %v1173 = vunpack.c.0.s8 %v1172
    %v1174 = vperm.slane %v1168, %v1173
    %v1176 = vunpack.c.l.s4 1983009808
    %v1177 = vunpack.c.0.s8 %v1176
    %v1178 = vperm.slane %v1170, %v1177
    %v1179 = vrot.slane %v875, 4
    %v1180 = vsel %vm887, %v1179, %v843
    %v1181 = vrot.slane %v843, 4
    %v1182 = vsel %vm887, %v875, %v1181
    %v1184 = vunpack.c.l.s4 1983009808
    %v1185 = vunpack.c.0.s8 %v1184
    %v1186 = vperm.slane %v1180, %v1185
    %v1188 = vunpack.c.l.s4 1983009808
    %v1189 = vunpack.c.0.s8 %v1188
    %v1190 = vperm.slane %v1182, %v1189
    %v1191 = vrot.slane %v1186, 4
    %v1192 = vsel %vm887, %v1191, %v1174
    %v1193 = vrot.slane %v1174, 4
    %v1194 = vsel %vm887, %v1186, %v1193
    %v1196 = vunpack.c.l.s4 1934713408
    %v1197 = vunpack.c.0.s8 %v1196
    %v1198 = vperm.slane %v1192, %v1197
    %v1200 = vunpack.c.l.s4 1934713408
    %v1201 = vunpack.c.0.s8 %v1200
    %v1202 = vperm.slane %v1194, %v1201
    %v1203 = vrot.slane %v1190, 4
    %v1204 = vsel %vm887, %v1203, %v1178
    %v1205 = vrot.slane %v1178, 4
    %v1206 = vsel %vm887, %v1190, %v1205
    %v1208 = vunpack.c.l.s4 1934713408
    %v1209 = vunpack.c.0.s8 %v1208
    %v1210 = vperm.slane %v1204, %v1209
    %v1212 = vunpack.c.l.s4 1934713408
    %v1213 = vunpack.c.0.s8 %v1212
    %v1214 = vperm.slane %v1206, %v1213
    %v1215 = vrot.slane %v1198, 4
    %v1216 = vsel %vm887, 0.0, %v1215
    %v1217 = vrot.slane %v1202, 4
    %v1218 = vsel %vm887, 0.0, %v1217
    %v1219 = vrot.slane %v1210, 4
    %v1220 = vsel %vm887, 0.0, %v1219
    %v1221 = vrot.slane %v1214, 4
    %v1222 = vsel %vm887, 0.0, %v1221
    %v1223 = vrot.slane %v860, 4
    %v1224 = vsel %vm887, %v1223, %v828
    %v1225 = vrot.slane %v828, 4
    %v1226 = vsel %vm887, %v860, %v1225
    %v1228 = vunpack.c.l.s4 1983009808
    %v1229 = vunpack.c.0.s8 %v1228
    %v1230 = vperm.slane %v1224, %v1229
    %v1232 = vunpack.c.l.s4 1983009808
    %v1233 = vunpack.c.0.s8 %v1232
    %v1234 = vperm.slane %v1226, %v1233
    %v1235 = vrot.slane %v876, 4
    %v1236 = vsel %vm887, %v1235, %v844
    %v1237 = vrot.slane %v844, 4
    %v1238 = vsel %vm887, %v876, %v1237
    %v1240 = vunpack.c.l.s4 1983009808
    %v1241 = vunpack.c.0.s8 %v1240
    %v1242 = vperm.slane %v1236, %v1241
    %v1244 = vunpack.c.l.s4 1983009808
    %v1245 = vunpack.c.0.s8 %v1244
    %v1246 = vperm.slane %v1238, %v1245
    %v1247 = vrot.slane %v1242, 4
    %v1248 = vsel %vm887, %v1247, %v1230
    %v1249 = vrot.slane %v1230, 4
    %v1250 = vsel %vm887, %v1242, %v1249
    %v1252 = vunpack.c.l.s4 1934713408
    %v1253 = vunpack.c.0.s8 %v1252
    %v1254 = vperm.slane %v1248, %v1253
    %v1256 = vunpack.c.l.s4 1934713408
    %v1257 = vunpack.c.0.s8 %v1256
    %v1258 = vperm.slane %v1250, %v1257
    %v1259 = vrot.slane %v1246, 4
    %v1260 = vsel %vm887, %v1259, %v1234
    %v1261 = vrot.slane %v1234, 4
    %v1262 = vsel %vm887, %v1246, %v1261
    %v1264 = vunpack.c.l.s4 1934713408
    %v1265 = vunpack.c.0.s8 %v1264
    %v1266 = vperm.slane %v1260, %v1265
    %v1268 = vunpack.c.l.s4 1934713408
    %v1269 = vunpack.c.0.s8 %v1268
    %v1270 = vperm.slane %v1262, %v1269
    %v1271 = vrot.slane %v1254, 4
    %v1272 = vsel %vm887, 0.0, %v1271
    %v1273 = vrot.slane %v1258, 4
    %v1274 = vsel %vm887, 0.0, %v1273
    %v1275 = vrot.slane %v1266, 4
    %v1276 = vsel %vm887, 0.0, %v1275
    %v1277 = vrot.slane %v1270, 4
    %v1278 = vsel %vm887, 0.0, %v1277
    %v1279 = vrot.slane %v861, 4
    %v1280 = vsel %vm887, %v1279, %v829
    %v1281 = vrot.slane %v829, 4
    %v1282 = vsel %vm887, %v861, %v1281
    %v1284 = vunpack.c.l.s4 1983009808
    %v1285 = vunpack.c.0.s8 %v1284
    %v1286 = vperm.slane %v1280, %v1285
    %v1288 = vunpack.c.l.s4 1983009808
    %v1289 = vunpack.c.0.s8 %v1288
    %v1290 = vperm.slane %v1282, %v1289
    %v1291 = vrot.slane %v877, 4
    %v1292 = vsel %vm887, %v1291, %v845
    %v1293 = vrot.slane %v845, 4
    %v1294 = vsel %vm887, %v877, %v1293
    %v1296 = vunpack.c.l.s4 1983009808
    %v1297 = vunpack.c.0.s8 %v1296
    %v1298 = vperm.slane %v1292, %v1297
    %v1300 = vunpack.c.l.s4 1983009808
    %v1301 = vunpack.c.0.s8 %v1300
    %v1302 = vperm.slane %v1294, %v1301
    %v1303 = vrot.slane %v1298, 4
    %v1304 = vsel %vm887, %v1303, %v1286
    %v1305 = vrot.slane %v1286, 4
    %v1306 = vsel %vm887, %v1298, %v1305
    %v1308 = vunpack.c.l.s4 1934713408
    %v1309 = vunpack.c.0.s8 %v1308
    %v1310 = vperm.slane %v1304, %v1309
    %v1312 = vunpack.c.l.s4 1934713408
    %v1313 = vunpack.c.0.s8 %v1312
    %v1314 = vperm.slane %v1306, %v1313
    %v1315 = vrot.slane %v1302, 4
    %v1316 = vsel %vm887, %v1315, %v1290
    %v1317 = vrot.slane %v1290, 4
    %v1318 = vsel %vm887, %v1302, %v1317
    %v1320 = vunpack.c.l.s4 1934713408
    %v1321 = vunpack.c.0.s8 %v1320
    %v1322 = vperm.slane %v1316, %v1321
    %v1324 = vunpack.c.l.s4 1934713408
    %v1325 = vunpack.c.0.s8 %v1324
    %v1326 = vperm.slane %v1318, %v1325
    %v1327 = vrot.slane %v1310, 4
    %v1328 = vsel %vm887, 0.0, %v1327
    %v1329 = vrot.slane %v1314, 4
    %v1330 = vsel %vm887, 0.0, %v1329
    %v1331 = vrot.slane %v1322, 4
    %v1332 = vsel %vm887, 0.0, %v1331
    %v1333 = vrot.slane %v1326, 4
    %v1334 = vsel %vm887, 0.0, %v1333
    %v1335 = vrot.slane %v862, 4
    %v1336 = vsel %vm887, %v1335, %v830
    %v1337 = vrot.slane %v830, 4
    %v1338 = vsel %vm887, %v862, %v1337
    %v1340 = vunpack.c.l.s4 1983009808
    %v1341 = vunpack.c.0.s8 %v1340
    %v1342 = vperm.slane %v1336, %v1341
    %v1344 = vunpack.c.l.s4 1983009808
    %v1345 = vunpack.c.0.s8 %v1344
    %v1346 = vperm.slane %v1338, %v1345
    %v1347 = vrot.slane %v878, 4
    %v1348 = vsel %vm887, %v1347, %v846
    %v1349 = vrot.slane %v846, 4
    %v1350 = vsel %vm887, %v878, %v1349
    %v1352 = vunpack.c.l.s4 1983009808
    %v1353 = vunpack.c.0.s8 %v1352
    %v1354 = vperm.slane %v1348, %v1353
    %v1356 = vunpack.c.l.s4 1983009808
    %v1357 = vunpack.c.0.s8 %v1356
    %v1358 = vperm.slane %v1350, %v1357
    %v1359 = vrot.slane %v1354, 4
    %v1360 = vsel %vm887, %v1359, %v1342
    %v1361 = vrot.slane %v1342, 4
    %v1362 = vsel %vm887, %v1354, %v1361
    %v1364 = vunpack.c.l.s4 1934713408
    %v1365 = vunpack.c.0.s8 %v1364
    %v1366 = vperm.slane %v1360, %v1365
    %v1368 = vunpack.c.l.s4 1934713408
    %v1369 = vunpack.c.0.s8 %v1368
    %v1370 = vperm.slane %v1362, %v1369
    %v1371 = vrot.slane %v1358, 4
    %v1372 = vsel %vm887, %v1371, %v1346
    %v1373 = vrot.slane %v1346, 4
    %v1374 = vsel %vm887, %v1358, %v1373
    %v1376 = vunpack.c.l.s4 1934713408
    %v1377 = vunpack.c.0.s8 %v1376
    %v1378 = vperm.slane %v1372, %v1377
    %v1380 = vunpack.c.l.s4 1934713408
    %v1381 = vunpack.c.0.s8 %v1380
    %v1382 = vperm.slane %v1374, %v1381
    %v1383 = vrot.slane %v1366, 4
    %v1384 = vsel %vm887, 0.0, %v1383
    %v1385 = vrot.slane %v1370, 4
    %v1386 = vsel %vm887, 0.0, %v1385
    %v1387 = vrot.slane %v1378, 4
    %v1388 = vsel %vm887, 0.0, %v1387
    %v1389 = vrot.slane %v1382, 4
    %v1390 = vsel %vm887, 0.0, %v1389
    %v1391 = vrot.slane %v863, 4
    %v1392 = vsel %vm887, %v1391, %v831
    %v1393 = vrot.slane %v831, 4
    %v1394 = vsel %vm887, %v863, %v1393
    %v1396 = vunpack.c.l.s4 1983009808
    %v1397 = vunpack.c.0.s8 %v1396
    %v1398 = vperm.slane %v1392, %v1397
    %v1400 = vunpack.c.l.s4 1983009808
    %v1401 = vunpack.c.0.s8 %v1400
    %v1402 = vperm.slane %v1394, %v1401
    %v1403 = vrot.slane %v879, 4
    %v1404 = vsel %vm887, %v1403, %v847
    %v1405 = vrot.slane %v847, 4
    %v1406 = vsel %vm887, %v879, %v1405
    %v1408 = vunpack.c.l.s4 1983009808
    %v1409 = vunpack.c.0.s8 %v1408
    %v1410 = vperm.slane %v1404, %v1409
    %v1412 = vunpack.c.l.s4 1983009808
    %v1413 = vunpack.c.0.s8 %v1412
    %v1414 = vperm.slane %v1406, %v1413
    %v1415 = vrot.slane %v1410, 4
    %v1416 = vsel %vm887, %v1415, %v1398
    %v1417 = vrot.slane %v1398, 4
    %v1418 = vsel %vm887, %v1410, %v1417
    %v1420 = vunpack.c.l.s4 1934713408
    %v1421 = vunpack.c.0.s8 %v1420
    %v1422 = vperm.slane %v1416, %v1421
    %v1424 = vunpack.c.l.s4 1934713408
    %v1425 = vunpack.c.0.s8 %v1424
    %v1426 = vperm.slane %v1418, %v1425
    %v1427 = vrot.slane %v1414, 4
    %v1428 = vsel %vm887, %v1427, %v1402
    %v1429 = vrot.slane %v1402, 4
    %v1430 = vsel %vm887, %v1414, %v1429
    %v1432 = vunpack.c.l.s4 1934713408
    %v1433 = vunpack.c.0.s8 %v1432
    %v1434 = vperm.slane %v1428, %v1433
    %v1436 = vunpack.c.l.s4 1934713408
    %v1437 = vunpack.c.0.s8 %v1436
    %v1438 = vperm.slane %v1430, %v1437
    %v1439 = vrot.slane %v1422, 4
    %v1440 = vsel %vm887, 0.0, %v1439
    %v1441 = vrot.slane %v1426, 4
    %v1442 = vsel %vm887, 0.0, %v1441
    %v1443 = vrot.slane %v1434, 4
    %v1444 = vsel %vm887, 0.0, %v1443
    %v1445 = vrot.slane %v1438, 4
    %v1446 = vsel %vm887, 0.0, %v1445
    %v1447 = vrot.slane %v864, 4
    %v1448 = vsel %vm887, %v1447, %v832
    %v1449 = vrot.slane %v832, 4
    %v1450 = vsel %vm887, %v864, %v1449
    %v1452 = vunpack.c.l.s4 1983009808
    %v1453 = vunpack.c.0.s8 %v1452
    %v1454 = vperm.slane %v1448, %v1453
    %v1456 = vunpack.c.l.s4 1983009808
    %v1457 = vunpack.c.0.s8 %v1456
    %v1458 = vperm.slane %v1450, %v1457
    %v1459 = vrot.slane %v880, 4
    %v1460 = vsel %vm887, %v1459, %v848
    %v1461 = vrot.slane %v848, 4
    %v1462 = vsel %vm887, %v880, %v1461
    %v1464 = vunpack.c.l.s4 1983009808
    %v1465 = vunpack.c.0.s8 %v1464
    %v1466 = vperm.slane %v1460, %v1465
    %v1468 = vunpack.c.l.s4 1983009808
    %v1469 = vunpack.c.0.s8 %v1468
    %v1470 = vperm.slane %v1462, %v1469
    %v1471 = vrot.slane %v1466, 4
    %v1472 = vsel %vm887, %v1471, %v1454
    %v1473 = vrot.slane %v1454, 4
    %v1474 = vsel %vm887, %v1466, %v1473
    %v1476 = vunpack.c.l.s4 1934713408
    %v1477 = vunpack.c.0.s8 %v1476
    %v1478 = vperm.slane %v1472, %v1477
    %v1480 = vunpack.c.l.s4 1934713408
    %v1481 = vunpack.c.0.s8 %v1480
    %v1482 = vperm.slane %v1474, %v1481
    %v1483 = vrot.slane %v1470, 4
    %v1484 = vsel %vm887, %v1483, %v1458
    %v1485 = vrot.slane %v1458, 4
    %v1486 = vsel %vm887, %v1470, %v1485
    %v1488 = vunpack.c.l.s4 1934713408
    %v1489 = vunpack.c.0.s8 %v1488
    %v1490 = vperm.slane %v1484, %v1489
    %v1492 = vunpack.c.l.s4 1934713408
    %v1493 = vunpack.c.0.s8 %v1492
    %v1494 = vperm.slane %v1486, %v1493
    %v1495 = vrot.slane %v1478, 4
    %v1496 = vsel %vm887, 0.0, %v1495
    %v1497 = vrot.slane %v1482, 4
    %v1498 = vsel %vm887, 0.0, %v1497
    %v1499 = vrot.slane %v1490, 4
    %v1500 = vsel %vm887, 0.0, %v1499
    %v1501 = vrot.slane %v1494, 4
    %v1502 = vsel %vm887, 0.0, %v1501
    %v1503 = vrot.slane %v865, 4
    %v1504 = vsel %vm887, %v1503, %v833
    %v1505 = vrot.slane %v833, 4
    %v1506 = vsel %vm887, %v865, %v1505
    %v1508 = vunpack.c.l.s4 1983009808
    %v1509 = vunpack.c.0.s8 %v1508
    %v1510 = vperm.slane %v1504, %v1509
    %v1512 = vunpack.c.l.s4 1983009808
    %v1513 = vunpack.c.0.s8 %v1512
    %v1514 = vperm.slane %v1506, %v1513
    %v1515 = vrot.slane %v881, 4
    %v1516 = vsel %vm887, %v1515, %v849
    %v1517 = vrot.slane %v849, 4
    %v1518 = vsel %vm887, %v881, %v1517
    %v1520 = vunpack.c.l.s4 1983009808
    %v1521 = vunpack.c.0.s8 %v1520
    %v1522 = vperm.slane %v1516, %v1521
    %v1524 = vunpack.c.l.s4 1983009808
    %v1525 = vunpack.c.0.s8 %v1524
    %v1526 = vperm.slane %v1518, %v1525
    %v1527 = vrot.slane %v1522, 4
    %v1528 = vsel %vm887, %v1527, %v1510
    %v1529 = vrot.slane %v1510, 4
    %v1530 = vsel %vm887, %v1522, %v1529
    %v1532 = vunpack.c.l.s4 1934713408
    %v1533 = vunpack.c.0.s8 %v1532
    %v1534 = vperm.slane %v1528, %v1533
    %v1536 = vunpack.c.l.s4 1934713408
    %v1537 = vunpack.c.0.s8 %v1536
    %v1538 = vperm.slane %v1530, %v1537
    %v1539 = vrot.slane %v1526, 4
    %v1540 = vsel %vm887, %v1539, %v1514
    %v1541 = vrot.slane %v1514, 4
    %v1542 = vsel %vm887, %v1526, %v1541
    %v1544 = vunpack.c.l.s4 1934713408
    %v1545 = vunpack.c.0.s8 %v1544
    %v1546 = vperm.slane %v1540, %v1545
    %v1548 = vunpack.c.l.s4 1934713408
    %v1549 = vunpack.c.0.s8 %v1548
    %v1550 = vperm.slane %v1542, %v1549
    %v1551 = vrot.slane %v1534, 4
    %v1552 = vsel %vm887, 0.0, %v1551
    %v1553 = vrot.slane %v1538, 4
    %v1554 = vsel %vm887, 0.0, %v1553
    %v1555 = vrot.slane %v1546, 4
    %v1556 = vsel %vm887, 0.0, %v1555
    %v1557 = vrot.slane %v1550, 4
    %v1558 = vsel %vm887, 0.0, %v1557
    %v1559 = vrot.slane %v866, 4
    %v1560 = vsel %vm887, %v1559, %v834
    %v1561 = vrot.slane %v834, 4
    %v1562 = vsel %vm887, %v866, %v1561
    %v1564 = vunpack.c.l.s4 1983009808
    %v1565 = vunpack.c.0.s8 %v1564
    %v1566 = vperm.slane %v1560, %v1565
    %v1568 = vunpack.c.l.s4 1983009808
    %v1569 = vunpack.c.0.s8 %v1568
    %v1570 = vperm.slane %v1562, %v1569
    %v1571 = vrot.slane %v882, 4
    %v1572 = vsel %vm887, %v1571, %v850
    %v1573 = vrot.slane %v850, 4
    %v1574 = vsel %vm887, %v882, %v1573
    %v1576 = vunpack.c.l.s4 1983009808
    %v1577 = vunpack.c.0.s8 %v1576
    %v1578 = vperm.slane %v1572, %v1577
    %v1580 = vunpack.c.l.s4 1983009808
    %v1581 = vunpack.c.0.s8 %v1580
    %v1582 = vperm.slane %v1574, %v1581
    %v1583 = vrot.slane %v1578, 4
    %v1584 = vsel %vm887, %v1583, %v1566
    %v1585 = vrot.slane %v1566, 4
    %v1586 = vsel %vm887, %v1578, %v1585
    %v1588 = vunpack.c.l.s4 1934713408
    %v1589 = vunpack.c.0.s8 %v1588
    %v1590 = vperm.slane %v1584, %v1589
    %v1592 = vunpack.c.l.s4 1934713408
    %v1593 = vunpack.c.0.s8 %v1592
    %v1594 = vperm.slane %v1586, %v1593
    %v1595 = vrot.slane %v1582, 4
    %v1596 = vsel %vm887, %v1595, %v1570
    %v1597 = vrot.slane %v1570, 4
    %v1598 = vsel %vm887, %v1582, %v1597
    %v1600 = vunpack.c.l.s4 1934713408
    %v1601 = vunpack.c.0.s8 %v1600
    %v1602 = vperm.slane %v1596, %v1601
    %v1604 = vunpack.c.l.s4 1934713408
    %v1605 = vunpack.c.0.s8 %v1604
    %v1606 = vperm.slane %v1598, %v1605
    %v1607 = vrot.slane %v1590, 4
    %v1608 = vsel %vm887, 0.0, %v1607
    %v1609 = vrot.slane %v1594, 4
    %v1610 = vsel %vm887, 0.0, %v1609
    %v1611 = vrot.slane %v1602, 4
    %v1612 = vsel %vm887, 0.0, %v1611
    %v1613 = vrot.slane %v1606, 4
    %v1614 = vsel %vm887, 0.0, %v1613
    %v1615 = vrot.slane %v867, 4
    %v1616 = vsel %vm887, %v1615, %v835
    %v1617 = vrot.slane %v835, 4
    %v1618 = vsel %vm887, %v867, %v1617
    %v1620 = vunpack.c.l.s4 1983009808
    %v1621 = vunpack.c.0.s8 %v1620
    %v1622 = vperm.slane %v1616, %v1621
    %v1624 = vunpack.c.l.s4 1983009808
    %v1625 = vunpack.c.0.s8 %v1624
    %v1626 = vperm.slane %v1618, %v1625
    %v1627 = vrot.slane %v883, 4
    %v1628 = vsel %vm887, %v1627, %v851
    %v1629 = vrot.slane %v851, 4
    %v1630 = vsel %vm887, %v883, %v1629
    %v1632 = vunpack.c.l.s4 1983009808
    %v1633 = vunpack.c.0.s8 %v1632
    %v1634 = vperm.slane %v1628, %v1633
    %v1636 = vunpack.c.l.s4 1983009808
    %v1637 = vunpack.c.0.s8 %v1636
    %v1638 = vperm.slane %v1630, %v1637
    %v1639 = vrot.slane %v1634, 4
    %v1640 = vsel %vm887, %v1639, %v1622
    %v1641 = vrot.slane %v1622, 4
    %v1642 = vsel %vm887, %v1634, %v1641
    %v1644 = vunpack.c.l.s4 1934713408
    %v1645 = vunpack.c.0.s8 %v1644
    %v1646 = vperm.slane %v1640, %v1645
    %v1648 = vunpack.c.l.s4 1934713408
    %v1649 = vunpack.c.0.s8 %v1648
    %v1650 = vperm.slane %v1642, %v1649
    %v1651 = vrot.slane %v1638, 4
    %v1652 = vsel %vm887, %v1651, %v1626
    %v1653 = vrot.slane %v1626, 4
    %v1654 = vsel %vm887, %v1638, %v1653
    %v1656 = vunpack.c.l.s4 1934713408
    %v1657 = vunpack.c.0.s8 %v1656
    %v1658 = vperm.slane %v1652, %v1657
    %v1660 = vunpack.c.l.s4 1934713408
    %v1661 = vunpack.c.0.s8 %v1660
    %v1662 = vperm.slane %v1654, %v1661
    %v1663 = vrot.slane %v1646, 4
    %v1664 = vsel %vm887, 0.0, %v1663
    %v1665 = vrot.slane %v1650, 4
    %v1666 = vsel %vm887, 0.0, %v1665
    %v1667 = vrot.slane %v1658, 4
    %v1668 = vsel %vm887, 0.0, %v1667
    %v1669 = vrot.slane %v1662, 4
    %v1670 = vsel %vm887, 0.0, %v1669
    %v1671 = vrot.slane %v868, 4
    %v1672 = vsel %vm887, %v1671, %v836
    %v1673 = vrot.slane %v836, 4
    %v1674 = vsel %vm887, %v868, %v1673
    %v1676 = vunpack.c.l.s4 1983009808
    %v1677 = vunpack.c.0.s8 %v1676
    %v1678 = vperm.slane %v1672, %v1677
    %v1680 = vunpack.c.l.s4 1983009808
    %v1681 = vunpack.c.0.s8 %v1680
    %v1682 = vperm.slane %v1674, %v1681
    %v1683 = vrot.slane %v884, 4
    %v1684 = vsel %vm887, %v1683, %v852
    %v1685 = vrot.slane %v852, 4
    %v1686 = vsel %vm887, %v884, %v1685
    %v1688 = vunpack.c.l.s4 1983009808
    %v1689 = vunpack.c.0.s8 %v1688
    %v1690 = vperm.slane %v1684, %v1689
    %v1692 = vunpack.c.l.s4 1983009808
    %v1693 = vunpack.c.0.s8 %v1692
    %v1694 = vperm.slane %v1686, %v1693
    %v1695 = vrot.slane %v1690, 4
    %v1696 = vsel %vm887, %v1695, %v1678
    %v1697 = vrot.slane %v1678, 4
    %v1698 = vsel %vm887, %v1690, %v1697
    %v1700 = vunpack.c.l.s4 1934713408
    %v1701 = vunpack.c.0.s8 %v1700
    %v1702 = vperm.slane %v1696, %v1701
    %v1704 = vunpack.c.l.s4 1934713408
    %v1705 = vunpack.c.0.s8 %v1704
    %v1706 = vperm.slane %v1698, %v1705
    %v1707 = vrot.slane %v1694, 4
    %v1708 = vsel %vm887, %v1707, %v1682
    %v1709 = vrot.slane %v1682, 4
    %v1710 = vsel %vm887, %v1694, %v1709
    %v1712 = vunpack.c.l.s4 1934713408
    %v1713 = vunpack.c.0.s8 %v1712
    %v1714 = vperm.slane %v1708, %v1713
    %v1716 = vunpack.c.l.s4 1934713408
    %v1717 = vunpack.c.0.s8 %v1716
    %v1718 = vperm.slane %v1710, %v1717
    %v1719 = vrot.slane %v1702, 4
    %v1720 = vsel %vm887, 0.0, %v1719
    %v1721 = vrot.slane %v1706, 4
    %v1722 = vsel %vm887, 0.0, %v1721
    %v1723 = vrot.slane %v1714, 4
    %v1724 = vsel %vm887, 0.0, %v1723
    %v1725 = vrot.slane %v1718, 4
    %v1726 = vsel %vm887, 0.0, %v1725
    %v1727 = vrot.slane %v869, 4
    %v1728 = vsel %vm887, %v1727, %v837
    %v1729 = vrot.slane %v837, 4
    %v1730 = vsel %vm887, %v869, %v1729
    %v1732 = vunpack.c.l.s4 1983009808
    %v1733 = vunpack.c.0.s8 %v1732
    %v1734 = vperm.slane %v1728, %v1733
    %v1736 = vunpack.c.l.s4 1983009808
    %v1737 = vunpack.c.0.s8 %v1736
    %v1738 = vperm.slane %v1730, %v1737
    %v1739 = vrot.slane %v885, 4
    %v1740 = vsel %vm887, %v1739, %v853
    %v1741 = vrot.slane %v853, 4
    %v1742 = vsel %vm887, %v885, %v1741
    %v1744 = vunpack.c.l.s4 1983009808
    %v1745 = vunpack.c.0.s8 %v1744
    %v1746 = vperm.slane %v1740, %v1745
    %v1748 = vunpack.c.l.s4 1983009808
    %v1749 = vunpack.c.0.s8 %v1748
    %v1750 = vperm.slane %v1742, %v1749
    %v1751 = vrot.slane %v1746, 4
    %v1752 = vsel %vm887, %v1751, %v1734
    %v1753 = vrot.slane %v1734, 4
    %v1754 = vsel %vm887, %v1746, %v1753
    %v1756 = vunpack.c.l.s4 1934713408
    %v1757 = vunpack.c.0.s8 %v1756
    %v1758 = vperm.slane %v1752, %v1757
    %v1760 = vunpack.c.l.s4 1934713408
    %v1761 = vunpack.c.0.s8 %v1760
    %v1762 = vperm.slane %v1754, %v1761
    %v1763 = vrot.slane %v1750, 4
    %v1764 = vsel %vm887, %v1763, %v1738
    %v1765 = vrot.slane %v1738, 4
    %v1766 = vsel %vm887, %v1750, %v1765
    %v1768 = vunpack.c.l.s4 1934713408
    %v1769 = vunpack.c.0.s8 %v1768
    %v1770 = vperm.slane %v1764, %v1769
    %v1772 = vunpack.c.l.s4 1934713408
    %v1773 = vunpack.c.0.s8 %v1772
    %v1774 = vperm.slane %v1766, %v1773
    %v1775 = vrot.slane %v1758, 4
    %v1776 = vsel %vm887, 0.0, %v1775
    %v1777 = vrot.slane %v1762, 4
    %v1778 = vsel %vm887, 0.0, %v1777
    %v1779 = vrot.slane %v1770, 4
    %v1780 = vsel %vm887, 0.0, %v1779
    %v1781 = vrot.slane %v1774, 4
    %v1782 = vsel %vm887, 0.0, %v1781
    %1784 = vrot.lane.b32.xlu0 %v936, 2
    %v1785 = vpop.permute.xlu0 %1784
    %1788 = vrot.lane.b32.xlu0 %v922, 4
    %v1789 = vpop.permute.xlu0 %1788
    %1792 = vrot.lane.b32.xlu0 %v938, 6
    %v1793 = vpop.permute.xlu0 %1792
    %1796 = vrot.lane.b32.xlu0 %v930, 8
    %v1797 = vpop.permute.xlu0 %1796
    %1800 = vrot.lane.b32.xlu0 %v940, 10
    %v1801 = vpop.permute.xlu0 %1800
    %1804 = vrot.lane.b32.xlu0 %v934, 12
    %v1805 = vpop.permute.xlu0 %1804
    %1808 = vrot.lane.b32.xlu0 %v942, 14
    %v1809 = vpop.permute.xlu0 %1808
    %1812 = vrot.lane.b32.xlu0 %v974, 16
    %v1813 = vpop.permute.xlu0 %1812
    %1816 = vrot.lane.b32.xlu0 %v992, 18
    %v1817 = vpop.permute.xlu0 %1816
    %1820 = vrot.lane.b32.xlu0 %v978, 20
    %v1821 = vpop.permute.xlu0 %1820
    %1824 = vrot.lane.b32.xlu0 %v994, 22
    %v1825 = vpop.permute.xlu0 %1824
    %1828 = vrot.lane.b32.xlu0 %v986, 24
    %v1829 = vpop.permute.xlu0 %1828
    %1832 = vrot.lane.b32.xlu0 %v996, 26
    %v1833 = vpop.permute.xlu0 %1832
    %1836 = vrot.lane.b32.xlu0 %v990, 28
    %v1837 = vpop.permute.xlu0 %1836
    %1840 = vrot.lane.b32.xlu0 %v998, 30
    %v1841 = vpop.permute.xlu0 %1840
    %1844 = vrot.lane.b32.xlu0 %v1030, 32
    %v1845 = vpop.permute.xlu0 %1844
    %1848 = vrot.lane.b32.xlu0 %v1048, 34
    %v1849 = vpop.permute.xlu0 %1848
    %1852 = vrot.lane.b32.xlu0 %v1034, 36
    %v1853 = vpop.permute.xlu0 %1852
    %1856 = vrot.lane.b32.xlu0 %v1050, 38
    %v1857 = vpop.permute.xlu0 %1856
    %1860 = vrot.lane.b32.xlu0 %v1042, 40
    %v1861 = vpop.permute.xlu0 %1860
    %1864 = vrot.lane.b32.xlu0 %v1052, 42
    %v1865 = vpop.permute.xlu0 %1864
    %1868 = vrot.lane.b32.xlu0 %v1046, 44
    %v1869 = vpop.permute.xlu0 %1868
    %1872 = vrot.lane.b32.xlu0 %v1054, 46
    %v1873 = vpop.permute.xlu0 %1872
    %1876 = vrot.lane.b32.xlu0 %v1086, 48
    %v1877 = vpop.permute.xlu0 %1876
    %1880 = vrot.lane.b32.xlu0 %v1104, 50
    %v1881 = vpop.permute.xlu0 %1880
    %1884 = vrot.lane.b32.xlu0 %v1090, 52
    %v1885 = vpop.permute.xlu0 %1884
    %1888 = vrot.lane.b32.xlu0 %v1106, 54
    %v1889 = vpop.permute.xlu0 %1888
    %1892 = vrot.lane.b32.xlu0 %v1098, 56
    %v1893 = vpop.permute.xlu0 %1892
    %1896 = vrot.lane.b32.xlu0 %v1108, 58
    %v1897 = vpop.permute.xlu0 %1896
    %1900 = vrot.lane.b32.xlu0 %v1102, 60
    %v1901 = vpop.permute.xlu0 %1900
    %1904 = vrot.lane.b32.xlu0 %v1110, 62
    %v1905 = vpop.permute.xlu0 %1904
    %1908 = vrot.lane.b32.xlu0 %v1142, 64
    %v1909 = vpop.permute.xlu0 %1908
    %1912 = vrot.lane.b32.xlu0 %v1160, 66
    %v1913 = vpop.permute.xlu0 %1912
    %1916 = vrot.lane.b32.xlu0 %v1146, 68
    %v1917 = vpop.permute.xlu0 %1916
    %1920 = vrot.lane.b32.xlu0 %v1162, 70
    %v1921 = vpop.permute.xlu0 %1920
    %1924 = vrot.lane.b32.xlu0 %v1154, 72
    %v1925 = vpop.permute.xlu0 %1924
    %1928 = vrot.lane.b32.xlu0 %v1164, 74
    %v1929 = vpop.permute.xlu0 %1928
    %1932 = vrot.lane.b32.xlu0 %v1158, 76
    %v1933 = vpop.permute.xlu0 %1932
    %1936 = vrot.lane.b32.xlu0 %v1166, 78
    %v1937 = vpop.permute.xlu0 %1936
    %1940 = vrot.lane.b32.xlu0 %v1198, 80
    %v1941 = vpop.permute.xlu0 %1940
    %1944 = vrot.lane.b32.xlu0 %v1216, 82
    %v1945 = vpop.permute.xlu0 %1944
    %1948 = vrot.lane.b32.xlu0 %v1202, 84
    %v1949 = vpop.permute.xlu0 %1948
    %1952 = vrot.lane.b32.xlu0 %v1218, 86
    %v1953 = vpop.permute.xlu0 %1952
    %1956 = vrot.lane.b32.xlu0 %v1210, 88
    %v1957 = vpop.permute.xlu0 %1956
    %1960 = vrot.lane.b32.xlu0 %v1220, 90
    %v1961 = vpop.permute.xlu0 %1960
    %1964 = vrot.lane.b32.xlu0 %v1214, 92
    %v1965 = vpop.permute.xlu0 %1964
    %1968 = vrot.lane.b32.xlu0 %v1222, 94
    %v1969 = vpop.permute.xlu0 %1968
    %1972 = vrot.lane.b32.xlu0 %v1254, 96
    %v1973 = vpop.permute.xlu0 %1972
    %1976 = vrot.lane.b32.xlu0 %v1272, 98
    %v1977 = vpop.permute.xlu0 %1976
    %1980 = vrot.lane.b32.xlu0 %v1258, 100
    %v1981 = vpop.permute.xlu0 %1980
    %1984 = vrot.lane.b32.xlu0 %v1274, 102
    %v1985 = vpop.permute.xlu0 %1984
    %1988 = vrot.lane.b32.xlu0 %v1266, 104
    %v1989 = vpop.permute.xlu0 %1988
    %1992 = vrot.lane.b32.xlu0 %v1276, 106
    %v1993 = vpop.permute.xlu0 %1992
    %1996 = vrot.lane.b32.xlu0 %v1270, 108
    %v1997 = vpop.permute.xlu0 %1996
    %2000 = vrot.lane.b32.xlu0 %v1278, 110
    %v2001 = vpop.permute.xlu0 %2000
    %2004 = vrot.lane.b32.xlu0 %v1310, 112
    %v2005 = vpop.permute.xlu0 %2004
    %2008 = vrot.lane.b32.xlu0 %v1328, 114
    %v2009 = vpop.permute.xlu0 %2008
    %2012 = vrot.lane.b32.xlu0 %v1314, 116
    %v2013 = vpop.permute.xlu0 %2012
    %2016 = vrot.lane.b32.xlu0 %v1330, 118
    %v2017 = vpop.permute.xlu0 %2016
    %2020 = vrot.lane.b32.xlu0 %v1322, 120
    %v2021 = vpop.permute.xlu0 %2020
    %2024 = vrot.lane.b32.xlu0 %v1332, 122
    %v2025 = vpop.permute.xlu0 %2024
    %2028 = vrot.lane.b32.xlu0 %v1326, 124
    %v2029 = vpop.permute.xlu0 %2028
    %2032 = vrot.lane.b32.xlu0 %v1334, 126
    %v2033 = vpop.permute.xlu0 %2032
    %2036 = vrot.lane.b32.xlu0 %v1384, 2
    %v2037 = vpop.permute.xlu0 %2036
    %2040 = vrot.lane.b32.xlu0 %v1370, 4
    %v2041 = vpop.permute.xlu0 %2040
    %2044 = vrot.lane.b32.xlu0 %v1386, 6
    %v2045 = vpop.permute.xlu0 %2044
    %2048 = vrot.lane.b32.xlu0 %v1378, 8
    %v2049 = vpop.permute.xlu0 %2048
    %2052 = vrot.lane.b32.xlu0 %v1388, 10
    %v2053 = vpop.permute.xlu0 %2052
    %2056 = vrot.lane.b32.xlu0 %v1382, 12
    %v2057 = vpop.permute.xlu0 %2056
    %2060 = vrot.lane.b32.xlu0 %v1390, 14
    %v2061 = vpop.permute.xlu0 %2060
    %2064 = vrot.lane.b32.xlu0 %v1422, 16
    %v2065 = vpop.permute.xlu0 %2064
    %2068 = vrot.lane.b32.xlu0 %v1440, 18
    %v2069 = vpop.permute.xlu0 %2068
    %2072 = vrot.lane.b32.xlu0 %v1426, 20
    %v2073 = vpop.permute.xlu0 %2072
    %2076 = vrot.lane.b32.xlu0 %v1442, 22
    %v2077 = vpop.permute.xlu0 %2076
    %2080 = vrot.lane.b32.xlu0 %v1434, 24
    %v2081 = vpop.permute.xlu0 %2080
    %2084 = vrot.lane.b32.xlu0 %v1444, 26
    %v2085 = vpop.permute.xlu0 %2084
    %2088 = vrot.lane.b32.xlu0 %v1438, 28
    %v2089 = vpop.permute.xlu0 %2088
    %2092 = vrot.lane.b32.xlu0 %v1446, 30
    %v2093 = vpop.permute.xlu0 %2092
    %2096 = vrot.lane.b32.xlu0 %v1478, 32
    %v2097 = vpop.permute.xlu0 %2096
    %2100 = vrot.lane.b32.xlu0 %v1496, 34
    %v2101 = vpop.permute.xlu0 %2100
    %2104 = vrot.lane.b32.xlu0 %v1482, 36
    %v2105 = vpop.permute.xlu0 %2104
    %2108 = vrot.lane.b32.xlu0 %v1498, 38
    %v2109 = vpop.permute.xlu0 %2108
    %2112 = vrot.lane.b32.xlu0 %v1490, 40
    %v2113 = vpop.permute.xlu0 %2112
    %2116 = vrot.lane.b32.xlu0 %v1500, 42
    %v2117 = vpop.permute.xlu0 %2116
    %2120 = vrot.lane.b32.xlu0 %v1494, 44
    %v2121 = vpop.permute.xlu0 %2120
    %2124 = vrot.lane.b32.xlu0 %v1502, 46
    %v2125 = vpop.permute.xlu0 %2124
    %2128 = vrot.lane.b32.xlu0 %v1534, 48
    %v2129 = vpop.permute.xlu0 %2128
    %2132 = vrot.lane.b32.xlu0 %v1552, 50
    %v2133 = vpop.permute.xlu0 %2132
    %2136 = vrot.lane.b32.xlu0 %v1538, 52
    %v2137 = vpop.permute.xlu0 %2136
    %2140 = vrot.lane.b32.xlu0 %v1554, 54
    %v2141 = vpop.permute.xlu0 %2140
    %2144 = vrot.lane.b32.xlu0 %v1546, 56
    %v2145 = vpop.permute.xlu0 %2144
    %2148 = vrot.lane.b32.xlu0 %v1556, 58
    %v2149 = vpop.permute.xlu0 %2148
    %2152 = vrot.lane.b32.xlu0 %v1550, 60
    %v2153 = vpop.permute.xlu0 %2152
    %2156 = vrot.lane.b32.xlu0 %v1558, 62
    %v2157 = vpop.permute.xlu0 %2156
    %2160 = vrot.lane.b32.xlu0 %v1590, 64
    %v2161 = vpop.permute.xlu0 %2160
    %2164 = vrot.lane.b32.xlu0 %v1608, 66
    %v2165 = vpop.permute.xlu0 %2164
    %2168 = vrot.lane.b32.xlu0 %v1594, 68
    %v2169 = vpop.permute.xlu0 %2168
    %2172 = vrot.lane.b32.xlu0 %v1610, 70
    %v2173 = vpop.permute.xlu0 %2172
    %2176 = vrot.lane.b32.xlu0 %v1602, 72
    %v2177 = vpop.permute.xlu0 %2176
    %2180 = vrot.lane.b32.xlu0 %v1612, 74
    %v2181 = vpop.permute.xlu0 %2180
    %2184 = vrot.lane.b32.xlu0 %v1606, 76
    %v2185 = vpop.permute.xlu0 %2184
    %2188 = vrot.lane.b32.xlu0 %v1614, 78
    %v2189 = vpop.permute.xlu0 %2188
    %2192 = vrot.lane.b32.xlu0 %v1646, 80
    %v2193 = vpop.permute.xlu0 %2192
    %2196 = vrot.lane.b32.xlu0 %v1664, 82
    %v2197 = vpop.permute.xlu0 %2196
    %2200 = vrot.lane.b32.xlu0 %v1650, 84
    %v2201 = vpop.permute.xlu0 %2200
    %2204 = vrot.lane.b32.xlu0 %v1666, 86
    %v2205 = vpop.permute.xlu0 %2204
    %2208 = vrot.lane.b32.xlu0 %v1658, 88
    %v2209 = vpop.permute.xlu0 %2208
    %2212 = vrot.lane.b32.xlu0 %v1668, 90
    %v2213 = vpop.permute.xlu0 %2212
    %2216 = vrot.lane.b32.xlu0 %v1662, 92
    %v2217 = vpop.permute.xlu0 %2216
    %2220 = vrot.lane.b32.xlu0 %v1670, 94
    %v2221 = vpop.permute.xlu0 %2220
    %2224 = vrot.lane.b32.xlu0 %v1702, 96
    %v2225 = vpop.permute.xlu0 %2224
    %2228 = vrot.lane.b32.xlu0 %v1720, 98
    %v2229 = vpop.permute.xlu0 %2228
    %2232 = vrot.lane.b32.xlu0 %v1706, 100
    %v2233 = vpop.permute.xlu0 %2232
    %2236 = vrot.lane.b32.xlu0 %v1722, 102
    %v2237 = vpop.permute.xlu0 %2236
    %2240 = vrot.lane.b32.xlu0 %v1714, 104
    %v2241 = vpop.permute.xlu0 %2240
    %2244 = vrot.lane.b32.xlu0 %v1724, 106
    %v2245 = vpop.permute.xlu0 %2244
    %2248 = vrot.lane.b32.xlu0 %v1718, 108
    %v2249 = vpop.permute.xlu0 %2248
    %2252 = vrot.lane.b32.xlu0 %v1726, 110
    %v2253 = vpop.permute.xlu0 %2252
    %2256 = vrot.lane.b32.xlu0 %v1758, 112
    %v2257 = vpop.permute.xlu0 %2256
    %2260 = vrot.lane.b32.xlu0 %v1776, 114
    %v2261 = vpop.permute.xlu0 %2260
    %2264 = vrot.lane.b32.xlu0 %v1762, 116
    %v2265 = vpop.permute.xlu0 %2264
    %2268 = vrot.lane.b32.xlu0 %v1778, 118
    %v2269 = vpop.permute.xlu0 %2268
    %2272 = vrot.lane.b32.xlu0 %v1770, 120
    %v2273 = vpop.permute.xlu0 %2272
    %2276 = vrot.lane.b32.xlu0 %v1780, 122
    %v2277 = vpop.permute.xlu0 %2276
    %2280 = vrot.lane.b32.xlu0 %v1774, 124
    %v2281 = vpop.permute.xlu0 %2280
    %2284 = vrot.lane.b32.xlu0 %v1782, 126
    %v2285 = vpop.permute.xlu0 %2284
    %vm2287 = vcmask 15360
    %v2288 = vsel %vm2287, %v918, %v1785
    %vm2289 = vcmask 31744
    %v2290 = vsel %vm2289, %v2288, %v1789
    %vm2291 = vcmask 48128
    %v2292 = vsel %vm2291, %v2290, %v1793
    %v2293 = vsel %vm15, %v2292, %v1797
    %vm2294 = vcmask 80896
    %v2295 = vsel %vm2294, %v2293, %v1801
    %vm2296 = vcmask 97280
    %v2297 = vsel %vm2296, %v2295, %v1805
    %vm2298 = vcmask 113664
    %v2299 = vsel %vm2298, %v2297, %v1809
    %vm2300 = vcmask 130048
    %v2301 = vsel %vm2300, %v2299, %v1813
    %vm2302 = vcmask 146432
    %v2303 = vsel %vm2302, %v2301, %v1817
    %vm2304 = vcmask 162816
    %v2305 = vsel %vm2304, %v2303, %v1821
    %vm2306 = vcmask 179200
    %v2307 = vsel %vm2306, %v2305, %v1825
    %vm2308 = vcmask 195584
    %v2309 = vsel %vm2308, %v2307, %v1829
    %vm2310 = vcmask 211968
    %v2311 = vsel %vm2310, %v2309, %v1833
    %vm2312 = vcmask 228352
    %v2313 = vsel %vm2312, %v2311, %v1837
    %vm2314 = vcmask 244736
    %v2315 = vsel %vm2314, %v2313, %v1841
    %vm2316 = vcmask 261120
    %v2317 = vsel %vm2316, %v2315, %v1845
    %vm2318 = vcmask 277504
    %v2319 = vsel %vm2318, %v2317, %v1849
    %vm2320 = vcmask 293888
    %v2321 = vsel %vm2320, %v2319, %v1853
    %vm2322 = vcmask 310272
    %v2323 = vsel %vm2322, %v2321, %v1857
    %vm2324 = vcmask 326656
    %v2325 = vsel %vm2324, %v2323, %v1861
    %vm2326 = vcmask 343040
    %v2327 = vsel %vm2326, %v2325, %v1865
    %vm2328 = vcmask 359424
    %v2329 = vsel %vm2328, %v2327, %v1869
    %vm2330 = vcmask 375808
    %v2331 = vsel %vm2330, %v2329, %v1873
    %vm2332 = vcmask 392192
    %v2333 = vsel %vm2332, %v2331, %v1877
    %vm2334 = vcmask 408576
    %v2335 = vsel %vm2334, %v2333, %v1881
    %vm2336 = vcmask 424960
    %v2337 = vsel %vm2336, %v2335, %v1885
    %vm2338 = vcmask 441344
    %v2339 = vsel %vm2338, %v2337, %v1889
    %vm2340 = vcmask 457728
    %v2341 = vsel %vm2340, %v2339, %v1893
    %vm2342 = vcmask 474112
    %v2343 = vsel %vm2342, %v2341, %v1897
    %vm2344 = vcmask 490496
    %v2345 = vsel %vm2344, %v2343, %v1901
    %vm2346 = vcmask 506880
    %v2347 = vsel %vm2346, %v2345, %v1905
    %vm2348 = vcmask 523264
    %v2349 = vsel %vm2348, %v2347, %v1909
    %vm2350 = vcmask 539648
    %v2351 = vsel %vm2350, %v2349, %v1913
    %vm2352 = vcmask 556032
    %v2353 = vsel %vm2352, %v2351, %v1917
    %vm2354 = vcmask 572416
    %v2355 = vsel %vm2354, %v2353, %v1921
    %vm2356 = vcmask 588800
    %v2357 = vsel %vm2356, %v2355, %v1925
    %vm2358 = vcmask 605184
    %v2359 = vsel %vm2358, %v2357, %v1929
    %vm2360 = vcmask 621568
    %v2361 = vsel %vm2360, %v2359, %v1933
    %vm2362 = vcmask 637952
    %v2363 = vsel %vm2362, %v2361, %v1937
    %vm2364 = vcmask 654336
    %v2365 = vsel %vm2364, %v2363, %v1941
    %vm2366 = vcmask 670720
    %v2367 = vsel %vm2366, %v2365, %v1945
    %vm2368 = vcmask 687104
    %v2369 = vsel %vm2368, %v2367, %v1949
    %vm2370 = vcmask 703488
    %v2371 = vsel %vm2370, %v2369, %v1953
    %vm2372 = vcmask 719872
    %v2373 = vsel %vm2372, %v2371, %v1957
    %vm2374 = vcmask 736256
    %v2375 = vsel %vm2374, %v2373, %v1961
    %vm2376 = vcmask 752640
    %v2377 = vsel %vm2376, %v2375, %v1965
    %vm2378 = vcmask 769024
    %v2379 = vsel %vm2378, %v2377, %v1969
    %vm2380 = vcmask 785408
    %v2381 = vsel %vm2380, %v2379, %v1973
    %vm2382 = vcmask 801792
    %v2383 = vsel %vm2382, %v2381, %v1977
    %vm2384 = vcmask 818176
    %v2385 = vsel %vm2384, %v2383, %v1981
    %vm2386 = vcmask 834560
    %v2387 = vsel %vm2386, %v2385, %v1985
    %vm2388 = vcmask 850944
    %v2389 = vsel %vm2388, %v2387, %v1989
    %vm2390 = vcmask 867328
    %v2391 = vsel %vm2390, %v2389, %v1993
    %vm2392 = vcmask 883712
    %v2393 = vsel %vm2392, %v2391, %v1997
    %vm2394 = vcmask 900096
    %v2395 = vsel %vm2394, %v2393, %v2001
    %vm2396 = vcmask 916480
    %v2397 = vsel %vm2396, %v2395, %v2005
    %vm2398 = vcmask 932864
    %v2399 = vsel %vm2398, %v2397, %v2009
    %vm2400 = vcmask 949248
    %v2401 = vsel %vm2400, %v2399, %v2013
    %vm2402 = vcmask 965632
    %v2403 = vsel %vm2402, %v2401, %v2017
    %vm2404 = vcmask 982016
    %v2405 = vsel %vm2404, %v2403, %v2021
    %vm2406 = vcmask 998400
    %v2407 = vsel %vm2406, %v2405, %v2025
    %vm2408 = vcmask 1014784
    %v2409 = vsel %vm2408, %v2407, %v2029
    %vm2410 = vcmask 1031168
    %v2411 = vsel %vm2410, %v2409, %v2033
    %v2412 = vsel %vm2287, %v1366, %v2037
    %v2413 = vsel %vm2289, %v2412, %v2041
    %v2414 = vsel %vm2291, %v2413, %v2045
    %v2415 = vsel %vm15, %v2414, %v2049
    %v2416 = vsel %vm2294, %v2415, %v2053
    %v2417 = vsel %vm2296, %v2416, %v2057
    %v2418 = vsel %vm2298, %v2417, %v2061
    %v2419 = vsel %vm2300, %v2418, %v2065
    %v2420 = vsel %vm2302, %v2419, %v2069
    %v2421 = vsel %vm2304, %v2420, %v2073
    %v2422 = vsel %vm2306, %v2421, %v2077
    %v2423 = vsel %vm2308, %v2422, %v2081
    %v2424 = vsel %vm2310, %v2423, %v2085
    %v2425 = vsel %vm2312, %v2424, %v2089
    %v2426 = vsel %vm2314, %v2425, %v2093
    %v2427 = vsel %vm2316, %v2426, %v2097
    %v2428 = vsel %vm2318, %v2427, %v2101
    %v2429 = vsel %vm2320, %v2428, %v2105
    %v2430 = vsel %vm2322, %v2429, %v2109
    %v2431 = vsel %vm2324, %v2430, %v2113
    %v2432 = vsel %vm2326, %v2431, %v2117
    %v2433 = vsel %vm2328, %v2432, %v2121
    %v2434 = vsel %vm2330, %v2433, %v2125
    %v2435 = vsel %vm2332, %v2434, %v2129
    %v2436 = vsel %vm2334, %v2435, %v2133
    %v2437 = vsel %vm2336, %v2436, %v2137
    %v2438 = vsel %vm2338, %v2437, %v2141
    %v2439 = vsel %vm2340, %v2438, %v2145
    %v2440 = vsel %vm2342, %v2439, %v2149
    %v2441 = vsel %vm2344, %v2440, %v2153
    %v2442 = vsel %vm2346, %v2441, %v2157
    %v2443 = vsel %vm2348, %v2442, %v2161
    %v2444 = vsel %vm2350, %v2443, %v2165
    %v2445 = vsel %vm2352, %v2444, %v2169
    %v2446 = vsel %vm2354, %v2445, %v2173
    %v2447 = vsel %vm2356, %v2446, %v2177
    %v2448 = vsel %vm2358, %v2447, %v2181
    %v2449 = vsel %vm2360, %v2448, %v2185
    %v2450 = vsel %vm2362, %v2449, %v2189
    %v2451 = vsel %vm2364, %v2450, %v2193
    %v2452 = vsel %vm2366, %v2451, %v2197
    %v2453 = vsel %vm2368, %v2452, %v2201
    %v2454 = vsel %vm2370, %v2453, %v2205
    %v2455 = vsel %vm2372, %v2454, %v2209
    %v2456 = vsel %vm2374, %v2455, %v2213
    %v2457 = vsel %vm2376, %v2456, %v2217
    %v2458 = vsel %vm2378, %v2457, %v2221
    %v2459 = vsel %vm2380, %v2458, %v2225
    %v2460 = vsel %vm2382, %v2459, %v2229
    %v2461 = vsel %vm2384, %v2460, %v2233
    %v2462 = vsel %vm2386, %v2461, %v2237
    %v2463 = vsel %vm2388, %v2462, %v2241
    %v2464 = vsel %vm2390, %v2463, %v2245
    %v2465 = vsel %vm2392, %v2464, %v2249
    %v2466 = vsel %vm2394, %v2465, %v2253
    %v2467 = vsel %vm2396, %v2466, %v2257
    %v2468 = vsel %vm2398, %v2467, %v2261
    %v2469 = vsel %vm2400, %v2468, %v2265
    %v2470 = vsel %vm2402, %v2469, %v2269
    %v2471 = vsel %vm2404, %v2470, %v2273
    %v2472 = vsel %vm2406, %v2471, %v2277
    %v2473 = vsel %vm2408, %v2472, %v2281
    %v2474 = vsel %vm2410, %v2473, %v2285
    %v2476 = vrot.slane %v2411, 1
    %v2477 = vrot.slane %v2411, 2
    %v2478 = vrot.slane %v2411, 3
    %vm2482 = vcmask 253952
    %2483 = vst.msk [vmem:[#allocation2] sm:$0x1] %vm2482, %v2411
    %2484 = vst.msk [vmem:[#allocation2 + $0x10] sm:$0x1] %vm2482, %v2476
    %2485 = vst.msk [vmem:[#allocation2 + $0x20] sm:$0x1] %vm2482, %v2477
    %2486 = vst.msk [vmem:[#allocation2 + $0x30] sm:$0x1] %vm2482, %v2478
    %v2487 = vperm.slane %v2411, 0
    %v2488 = vperm.slane %v2476, 0
    %v2489 = vperm.slane %v2477, 0
    %v2490 = vperm.slane %v2478, 0
    %2491 = vrot.lane.b32.xlu0 %v2487, 96
    %v2492 = vpop.permute.xlu0 %2491
    %2493 = vrot.lane.b32.xlu0 %v2488, 96
    %v2494 = vpop.permute.xlu0 %2493
    %2495 = vrot.lane.b32.xlu0 %v2489, 96
    %v2496 = vpop.permute.xlu0 %2495
    %2497 = vrot.lane.b32.xlu0 %v2490, 96
    %v2498 = vpop.permute.xlu0 %2497
    %s2503 = scalar_lea.vmem [#allocation2], 2
    %2504 = vst.msk [vmem:[%s2503] sm:$0x1] %vm2482, %v2492
    %2505 = vst.msk [vmem:[%s2503 + $0x10] sm:$0x1] %vm2482, %v2494
    %2506 = vst.msk [vmem:[%s2503 + $0x20] sm:$0x1] %vm2482, %v2496
    %2507 = vst.msk [vmem:[%s2503 + $0x30] sm:$0x1] %vm2482, %v2498
    %2508 = vrot.lane.b32.xlu0 %v2487, 64
    %v2509 = vpop.permute.xlu0 %2508
    %2510 = vrot.lane.b32.xlu0 %v2488, 64
    %v2511 = vpop.permute.xlu0 %2510
    %2512 = vrot.lane.b32.xlu0 %v2489, 64
    %v2513 = vpop.permute.xlu0 %2512
    %2514 = vrot.lane.b32.xlu0 %v2490, 64
    %v2515 = vpop.permute.xlu0 %2514
    %s2520 = scalar_lea.vmem [#allocation2], 4
    %2521 = vst.msk [vmem:[%s2520] sm:$0x1] %vm2482, %v2509
    %2522 = vst.msk [vmem:[%s2520 + $0x10] sm:$0x1] %vm2482, %v2511
    %2523 = vst.msk [vmem:[%s2520 + $0x20] sm:$0x1] %vm2482, %v2513
    %2524 = vst.msk [vmem:[%s2520 + $0x30] sm:$0x1] %vm2482, %v2515
    %2525 = vrot.lane.b32.xlu0 %v2487, 32
    %v2526 = vpop.permute.xlu0 %2525
    %2527 = vrot.lane.b32.xlu0 %v2488, 32
    %v2528 = vpop.permute.xlu0 %2527
    %2529 = vrot.lane.b32.xlu0 %v2489, 32
    %v2530 = vpop.permute.xlu0 %2529
    %2531 = vrot.lane.b32.xlu0 %v2490, 32
    %v2532 = vpop.permute.xlu0 %2531
    %s2537 = scalar_lea.vmem [#allocation2], 6
    %2538 = vst.msk [vmem:[%s2537] sm:$0x1] %vm2482, %v2526
    %2539 = vst.msk [vmem:[%s2537 + $0x10] sm:$0x1] %vm2482, %v2528
    %2540 = vst.msk [vmem:[%s2537 + $0x20] sm:$0x1] %vm2482, %v2530
    %2541 = vst.msk [vmem:[%s2537 + $0x30] sm:$0x1] %vm2482, %v2532
    %v2543 = vrot.slane %v2474, 1
    %v2544 = vrot.slane %v2474, 2
    %v2545 = vrot.slane %v2474, 3
    %s2549 = scalar_lea.vmem [#allocation2], 8
    %2550 = vst.msk [vmem:[%s2549] sm:$0x1] %vm2482, %v2474
    %2551 = vst.msk [vmem:[%s2549 + $0x10] sm:$0x1] %vm2482, %v2543
    %2552 = vst.msk [vmem:[%s2549 + $0x20] sm:$0x1] %vm2482, %v2544
    %2553 = vst.msk [vmem:[%s2549 + $0x30] sm:$0x1] %vm2482, %v2545
    %v2554 = vperm.slane %v2474, 0
    %v2555 = vperm.slane %v2543, 0
    %v2556 = vperm.slane %v2544, 0
    %v2557 = vperm.slane %v2545, 0
    %2558 = vrot.lane.b32.xlu0 %v2554, 96
    %v2559 = vpop.permute.xlu0 %2558
    %2560 = vrot.lane.b32.xlu0 %v2555, 96
    %v2561 = vpop.permute.xlu0 %2560
    %2562 = vrot.lane.b32.xlu0 %v2556, 96
    %v2563 = vpop.permute.xlu0 %2562
    %2564 = vrot.lane.b32.xlu0 %v2557, 96
    %v2565 = vpop.permute.xlu0 %2564
    %s2570 = scalar_lea.vmem [#allocation2], 10
    %2571 = vst.msk [vmem:[%s2570] sm:$0x1] %vm2482, %v2559
    %2572 = vst.msk [vmem:[%s2570 + $0x10] sm:$0x1] %vm2482, %v2561
    %2573 = vst.msk [vmem:[%s2570 + $0x20] sm:$0x1] %vm2482, %v2563
    %2574 = vst.msk [vmem:[%s2570 + $0x30] sm:$0x1] %vm2482, %v2565
    %2575 = vrot.lane.b32.xlu0 %v2554, 64
    %v2576 = vpop.permute.xlu0 %2575
    %2577 = vrot.lane.b32.xlu0 %v2555, 64
    %v2578 = vpop.permute.xlu0 %2577
    %2579 = vrot.lane.b32.xlu0 %v2556, 64
    %v2580 = vpop.permute.xlu0 %2579
    %2581 = vrot.lane.b32.xlu0 %v2557, 64
    %v2582 = vpop.permute.xlu0 %2581
    %s2587 = scalar_lea.vmem [#allocation2], 12
    %2588 = vst.msk [vmem:[%s2587] sm:$0x1] %vm2482, %v2576
    %2589 = vst.msk [vmem:[%s2587 + $0x10] sm:$0x1] %vm2482, %v2578
    %2590 = vst.msk [vmem:[%s2587 + $0x20] sm:$0x1] %vm2482, %v2580
    %2591 = vst.msk [vmem:[%s2587 + $0x30] sm:$0x1] %vm2482, %v2582
    %2592 = vrot.lane.b32.xlu0 %v2554, 32
    %v2593 = vpop.permute.xlu0 %2592
    %2594 = vrot.lane.b32.xlu0 %v2555, 32
    %v2595 = vpop.permute.xlu0 %2594
    %2596 = vrot.lane.b32.xlu0 %v2556, 32
    %v2597 = vpop.permute.xlu0 %2596
    %2598 = vrot.lane.b32.xlu0 %v2557, 32
    %v2599 = vpop.permute.xlu0 %2598
    %s2604 = scalar_lea.vmem [#allocation2], 14
    %2605 = vst.msk [vmem:[%s2604] sm:$0x1] %vm2482, %v2593
    %2606 = vst.msk [vmem:[%s2604 + $0x10] sm:$0x1] %vm2482, %v2595
    %2607 = vst.msk [vmem:[%s2604 + $0x20] sm:$0x1] %vm2482, %v2597
    %2608 = vst.msk [vmem:[%s2604 + $0x30] sm:$0x1] %vm2482, %v2599
    %v2609 = vperm.slane %v43, 0
    %v2610 = vlaneseq
    %v2611 = vshrl.u32 %v2610, 7
    %2613 = vset.pattern.permute.xlu0 %v2611
    %2614 = vperm.xlu0 %2613, %v2609
    %v2615 = vpop.permute.xlu0 %2614
    %v2616 = vlaneseq
    %v2617 = vshrl.u32 %v2616, 7
    %v2618 = vadd.s32 %v2617, 8
    %2619 = vset.pattern.permute.xlu0 %v2618
    %2620 = vperm.xlu0 %2619, %v2609
    %v2621 = vpop.permute.xlu0 %2620
    %v2622 = vlaneseq
    %v2623 = vshrl.u32 %v2622, 7
    %v2624 = vadd.s32 %v2623, 16
    %2625 = vset.pattern.permute.xlu0 %v2624
    %2626 = vperm.xlu0 %2625, %v2609
    %v2627 = vpop.permute.xlu0 %2626
    %v2628 = vlaneseq
    %v2629 = vshrl.u32 %v2628, 7
    %v2630 = vadd.s32 %v2629, 24
    %2631 = vset.pattern.permute.xlu0 %v2630
    %2632 = vperm.xlu0 %2631, %v2609
    %v2633 = vpop.permute.xlu0 %2632
    %v2634 = vlaneseq
    %v2635 = vshrl.u32 %v2634, 7
    %v2636 = vadd.s32 %v2635, 32
    %2637 = vset.pattern.permute.xlu0 %v2636
    %2638 = vperm.xlu0 %2637, %v2609
    %v2639 = vpop.permute.xlu0 %2638
    %v2640 = vlaneseq
    %v2641 = vshrl.u32 %v2640, 7
    %v2642 = vadd.s32 %v2641, 40
    %2643 = vset.pattern.permute.xlu0 %v2642
    %2644 = vperm.xlu0 %2643, %v2609
    %v2645 = vpop.permute.xlu0 %2644
    %v2646 = vlaneseq
    %v2647 = vshrl.u32 %v2646, 7
    %v2648 = vadd.s32 %v2647, 48
    %2649 = vset.pattern.permute.xlu0 %v2648
    %2650 = vperm.xlu0 %2649, %v2609
    %v2651 = vpop.permute.xlu0 %2650
    %v2652 = vlaneseq
    %v2653 = vshrl.u32 %v2652, 7
    %v2654 = vadd.s32 %v2653, 56
    %2655 = vset.pattern.permute.xlu0 %v2654
    %2656 = vperm.xlu0 %2655, %v2609
    %v2657 = vpop.permute.xlu0 %2656
    %v2658 = vlaneseq
    %v2659 = vshrl.u32 %v2658, 7
    %v2660 = vadd.s32 %v2659, 64
    %2661 = vset.pattern.permute.xlu0 %v2660
    %2662 = vperm.xlu0 %2661, %v2609
    %v2663 = vpop.permute.xlu0 %2662
    %v2664 = vlaneseq
    %v2665 = vshrl.u32 %v2664, 7
    %v2666 = vadd.s32 %v2665, 72
    %2667 = vset.pattern.permute.xlu0 %v2666
    %2668 = vperm.xlu0 %2667, %v2609
    %v2669 = vpop.permute.xlu0 %2668
    %v2670 = vlaneseq
    %v2671 = vshrl.u32 %v2670, 7
    %v2672 = vadd.s32 %v2671, 80
    %2673 = vset.pattern.permute.xlu0 %v2672
    %2674 = vperm.xlu0 %2673, %v2609
    %v2675 = vpop.permute.xlu0 %2674
    %v2676 = vlaneseq
    %v2677 = vshrl.u32 %v2676, 7
    %v2678 = vadd.s32 %v2677, 88
    %2679 = vset.pattern.permute.xlu0 %v2678
    %2680 = vperm.xlu0 %2679, %v2609
    %v2681 = vpop.permute.xlu0 %2680
    %v2682 = vlaneseq
    %v2683 = vshrl.u32 %v2682, 7
    %v2684 = vadd.s32 %v2683, 96
    %2685 = vset.pattern.permute.xlu0 %v2684
    %2686 = vperm.xlu0 %2685, %v2609
    %v2687 = vpop.permute.xlu0 %2686
    %v2688 = vlaneseq
    %v2689 = vshrl.u32 %v2688, 7
    %v2690 = vadd.s32 %v2689, 104
    %2691 = vset.pattern.permute.xlu0 %v2690
    %2692 = vperm.xlu0 %2691, %v2609
    %v2693 = vpop.permute.xlu0 %2692
    %v2694 = vlaneseq
    %v2695 = vshrl.u32 %v2694, 7
    %v2696 = vadd.s32 %v2695, 112
    %2697 = vset.pattern.permute.xlu0 %v2696
    %2698 = vperm.xlu0 %2697, %v2609
    %v2699 = vpop.permute.xlu0 %2698
    %v2700 = vlaneseq
    %v2701 = vshrl.u32 %v2700, 7
    %v2702 = vadd.s32 %v2701, 120
    %2703 = vset.pattern.permute.xlu0 %v2702
    %2704 = vperm.xlu0 %2703, %v2609
    %v2705 = vpop.permute.xlu0 %2704
    %v2706 = vperm.slane %v43, 1
    %v2707 = vlaneseq
    %v2708 = vshrl.u32 %v2707, 7
    %2710 = vset.pattern.permute.xlu0 %v2708
    %2711 = vperm.xlu0 %2710, %v2706
    %v2712 = vpop.permute.xlu0 %2711
    %v2713 = vlaneseq
    %v2714 = vshrl.u32 %v2713, 7
    %v2715 = vadd.s32 %v2714, 8
    %2716 = vset.pattern.permute.xlu0 %v2715
    %2717 = vperm.xlu0 %2716, %v2706
    %v2718 = vpop.permute.xlu0 %2717
    %v2719 = vlaneseq
    %v2720 = vshrl.u32 %v2719, 7
    %v2721 = vadd.s32 %v2720, 16
    %2722 = vset.pattern.permute.xlu0 %v2721
    %2723 = vperm.xlu0 %2722, %v2706
    %v2724 = vpop.permute.xlu0 %2723
    %v2725 = vlaneseq
    %v2726 = vshrl.u32 %v2725, 7
    %v2727 = vadd.s32 %v2726, 24
    %2728 = vset.pattern.permute.xlu0 %v2727
    %2729 = vperm.xlu0 %2728, %v2706
    %v2730 = vpop.permute.xlu0 %2729
    %v2731 = vlaneseq
    %v2732 = vshrl.u32 %v2731, 7
    %v2733 = vadd.s32 %v2732, 32
    %2734 = vset.pattern.permute.xlu0 %v2733
    %2735 = vperm.xlu0 %2734, %v2706
    %v2736 = vpop.permute.xlu0 %2735
    %v2737 = vlaneseq
    %v2738 = vshrl.u32 %v2737, 7
    %v2739 = vadd.s32 %v2738, 40
    %2740 = vset.pattern.permute.xlu0 %v2739
    %2741 = vperm.xlu0 %2740, %v2706
    %v2742 = vpop.permute.xlu0 %2741
    %v2743 = vlaneseq
    %v2744 = vshrl.u32 %v2743, 7
    %v2745 = vadd.s32 %v2744, 48
    %2746 = vset.pattern.permute.xlu0 %v2745
    %2747 = vperm.xlu0 %2746, %v2706
    %v2748 = vpop.permute.xlu0 %2747
    %v2749 = vlaneseq
    %v2750 = vshrl.u32 %v2749, 7
    %v2751 = vadd.s32 %v2750, 56
    %2752 = vset.pattern.permute.xlu0 %v2751
    %2753 = vperm.xlu0 %2752, %v2706
    %v2754 = vpop.permute.xlu0 %2753
    %v2755 = vlaneseq
    %v2756 = vshrl.u32 %v2755, 7
    %v2757 = vadd.s32 %v2756, 64
    %2758 = vset.pattern.permute.xlu0 %v2757
    %2759 = vperm.xlu0 %2758, %v2706
    %v2760 = vpop.permute.xlu0 %2759
    %v2761 = vlaneseq
    %v2762 = vshrl.u32 %v2761, 7
    %v2763 = vadd.s32 %v2762, 72
    %2764 = vset.pattern.permute.xlu0 %v2763
    %2765 = vperm.xlu0 %2764, %v2706
    %v2766 = vpop.permute.xlu0 %2765
    %v2767 = vlaneseq
    %v2768 = vshrl.u32 %v2767, 7
    %v2769 = vadd.s32 %v2768, 80
    %2770 = vset.pattern.permute.xlu0 %v2769
    %2771 = vperm.xlu0 %2770, %v2706
    %v2772 = vpop.permute.xlu0 %2771
    %v2773 = vlaneseq
    %v2774 = vshrl.u32 %v2773, 7
    %v2775 = vadd.s32 %v2774, 88
    %2776 = vset.pattern.permute.xlu0 %v2775
    %2777 = vperm.xlu0 %2776, %v2706
    %v2778 = vpop.permute.xlu0 %2777
    %v2779 = vlaneseq
    %v2780 = vshrl.u32 %v2779, 7
    %v2781 = vadd.s32 %v2780, 96
    %2782 = vset.pattern.permute.xlu0 %v2781
    %2783 = vperm.xlu0 %2782, %v2706
    %v2784 = vpop.permute.xlu0 %2783
    %v2785 = vlaneseq
    %v2786 = vshrl.u32 %v2785, 7
    %v2787 = vadd.s32 %v2786, 104
    %2788 = vset.pattern.permute.xlu0 %v2787
    %2789 = vperm.xlu0 %2788, %v2706
    %v2790 = vpop.permute.xlu0 %2789
    %v2791 = vlaneseq
    %v2792 = vshrl.u32 %v2791, 7
    %v2793 = vadd.s32 %v2792, 112
    %2794 = vset.pattern.permute.xlu0 %v2793
    %2795 = vperm.xlu0 %2794, %v2706
    %v2796 = vpop.permute.xlu0 %2795
    %v2797 = vlaneseq
    %v2798 = vshrl.u32 %v2797, 7
    %v2799 = vadd.s32 %v2798, 120
    %2800 = vset.pattern.permute.xlu0 %v2799
    %2801 = vperm.xlu0 %2800, %v2706
    %v2802 = vpop.permute.xlu0 %2801
    %v2803 = vperm.slane %v43, 2
    %v2804 = vlaneseq
    %v2805 = vshrl.u32 %v2804, 7
    %2807 = vset.pattern.permute.xlu0 %v2805
    %2808 = vperm.xlu0 %2807, %v2803
    %v2809 = vpop.permute.xlu0 %2808
    %v2810 = vlaneseq
    %v2811 = vshrl.u32 %v2810, 7
    %v2812 = vadd.s32 %v2811, 8
    %2813 = vset.pattern.permute.xlu0 %v2812
    %2814 = vperm.xlu0 %2813, %v2803
    %v2815 = vpop.permute.xlu0 %2814
    %v2816 = vlaneseq
    %v2817 = vshrl.u32 %v2816, 7
    %v2818 = vadd.s32 %v2817, 16
    %2819 = vset.pattern.permute.xlu0 %v2818
    %2820 = vperm.xlu0 %2819, %v2803
    %v2821 = vpop.permute.xlu0 %2820
    %v2822 = vlaneseq
    %v2823 = vshrl.u32 %v2822, 7
    %v2824 = vadd.s32 %v2823, 24
    %2825 = vset.pattern.permute.xlu0 %v2824
    %2826 = vperm.xlu0 %2825, %v2803
    %v2827 = vpop.permute.xlu0 %2826
    %v2828 = vlaneseq
    %v2829 = vshrl.u32 %v2828, 7
    %v2830 = vadd.s32 %v2829, 32
    %2831 = vset.pattern.permute.xlu0 %v2830
    %2832 = vperm.xlu0 %2831, %v2803
    %v2833 = vpop.permute.xlu0 %2832
    %v2834 = vlaneseq
    %v2835 = vshrl.u32 %v2834, 7
    %v2836 = vadd.s32 %v2835, 40
    %2837 = vset.pattern.permute.xlu0 %v2836
    %2838 = vperm.xlu0 %2837, %v2803
    %v2839 = vpop.permute.xlu0 %2838
    %v2840 = vlaneseq
    %v2841 = vshrl.u32 %v2840, 7
    %v2842 = vadd.s32 %v2841, 48
    %2843 = vset.pattern.permute.xlu0 %v2842
    %2844 = vperm.xlu0 %2843, %v2803
    %v2845 = vpop.permute.xlu0 %2844
    %v2846 = vlaneseq
    %v2847 = vshrl.u32 %v2846, 7
    %v2848 = vadd.s32 %v2847, 56
    %2849 = vset.pattern.permute.xlu0 %v2848
    %2850 = vperm.xlu0 %2849, %v2803
    %v2851 = vpop.permute.xlu0 %2850
    %v2852 = vlaneseq
    %v2853 = vshrl.u32 %v2852, 7
    %v2854 = vadd.s32 %v2853, 64
    %2855 = vset.pattern.permute.xlu0 %v2854
    %2856 = vperm.xlu0 %2855, %v2803
    %v2857 = vpop.permute.xlu0 %2856
    %v2858 = vlaneseq
    %v2859 = vshrl.u32 %v2858, 7
    %v2860 = vadd.s32 %v2859, 72
    %2861 = vset.pattern.permute.xlu0 %v2860
    %2862 = vperm.xlu0 %2861, %v2803
    %v2863 = vpop.permute.xlu0 %2862
    %v2864 = vlaneseq
    %v2865 = vshrl.u32 %v2864, 7
    %v2866 = vadd.s32 %v2865, 80
    %2867 = vset.pattern.permute.xlu0 %v2866
    %2868 = vperm.xlu0 %2867, %v2803
    %v2869 = vpop.permute.xlu0 %2868
    %v2870 = vlaneseq
    %v2871 = vshrl.u32 %v2870, 7
    %v2872 = vadd.s32 %v2871, 88
    %2873 = vset.pattern.permute.xlu0 %v2872
    %2874 = vperm.xlu0 %2873, %v2803
    %v2875 = vpop.permute.xlu0 %2874
    %v2876 = vlaneseq
    %v2877 = vshrl.u32 %v2876, 7
    %v2878 = vadd.s32 %v2877, 96
    %2879 = vset.pattern.permute.xlu0 %v2878
    %2880 = vperm.xlu0 %2879, %v2803
    %v2881 = vpop.permute.xlu0 %2880
    %v2882 = vlaneseq
    %v2883 = vshrl.u32 %v2882, 7
    %v2884 = vadd.s32 %v2883, 104
    %2885 = vset.pattern.permute.xlu0 %v2884
    %2886 = vperm.xlu0 %2885, %v2803
    %v2887 = vpop.permute.xlu0 %2886
    %v2888 = vlaneseq
    %v2889 = vshrl.u32 %v2888, 7
    %v2890 = vadd.s32 %v2889, 112
    %2891 = vset.pattern.permute.xlu0 %v2890
    %2892 = vperm.xlu0 %2891, %v2803
    %v2893 = vpop.permute.xlu0 %2892
    %v2894 = vlaneseq
    %v2895 = vshrl.u32 %v2894, 7
    %v2896 = vadd.s32 %v2895, 120
    %2897 = vset.pattern.permute.xlu0 %v2896
    %2898 = vperm.xlu0 %2897, %v2803
    %v2899 = vpop.permute.xlu0 %2898
    %v2900 = vperm.slane %v43, 3
    %v2901 = vlaneseq
    %v2902 = vshrl.u32 %v2901, 7
    %2904 = vset.pattern.permute.xlu0 %v2902
    %2905 = vperm.xlu0 %2904, %v2900
    %v2906 = vpop.permute.xlu0 %2905
    %v2907 = vlaneseq
    %v2908 = vshrl.u32 %v2907, 7
    %v2909 = vadd.s32 %v2908, 8
    %2910 = vset.pattern.permute.xlu0 %v2909
    %2911 = vperm.xlu0 %2910, %v2900
    %v2912 = vpop.permute.xlu0 %2911
    %v2913 = vlaneseq
    %v2914 = vshrl.u32 %v2913, 7
    %v2915 = vadd.s32 %v2914, 16
    %2916 = vset.pattern.permute.xlu0 %v2915
    %2917 = vperm.xlu0 %2916, %v2900
    %v2918 = vpop.permute.xlu0 %2917
    %v2919 = vlaneseq
    %v2920 = vshrl.u32 %v2919, 7
    %v2921 = vadd.s32 %v2920, 24
    %2922 = vset.pattern.permute.xlu0 %v2921
    %2923 = vperm.xlu0 %2922, %v2900
    %v2924 = vpop.permute.xlu0 %2923
    %v2925 = vlaneseq
    %v2926 = vshrl.u32 %v2925, 7
    %v2927 = vadd.s32 %v2926, 32
    %2928 = vset.pattern.permute.xlu0 %v2927
    %2929 = vperm.xlu0 %2928, %v2900
    %v2930 = vpop.permute.xlu0 %2929
    %v2931 = vlaneseq
    %v2932 = vshrl.u32 %v2931, 7
    %v2933 = vadd.s32 %v2932, 40
    %2934 = vset.pattern.permute.xlu0 %v2933
    %2935 = vperm.xlu0 %2934, %v2900
    %v2936 = vpop.permute.xlu0 %2935
    %v2937 = vlaneseq
    %v2938 = vshrl.u32 %v2937, 7
    %v2939 = vadd.s32 %v2938, 48
    %2940 = vset.pattern.permute.xlu0 %v2939
    %2941 = vperm.xlu0 %2940, %v2900
    %v2942 = vpop.permute.xlu0 %2941
    %v2943 = vlaneseq
    %v2944 = vshrl.u32 %v2943, 7
    %v2945 = vadd.s32 %v2944, 56
    %2946 = vset.pattern.permute.xlu0 %v2945
    %2947 = vperm.xlu0 %2946, %v2900
    %v2948 = vpop.permute.xlu0 %2947
    %v2949 = vlaneseq
    %v2950 = vshrl.u32 %v2949, 7
    %v2951 = vadd.s32 %v2950, 64
    %2952 = vset.pattern.permute.xlu0 %v2951
    %2953 = vperm.xlu0 %2952, %v2900
    %v2954 = vpop.permute.xlu0 %2953
    %v2955 = vlaneseq
    %v2956 = vshrl.u32 %v2955, 7
    %v2957 = vadd.s32 %v2956, 72
    %2958 = vset.pattern.permute.xlu0 %v2957
    %2959 = vperm.xlu0 %2958, %v2900
    %v2960 = vpop.permute.xlu0 %2959
    %v2961 = vlaneseq
    %v2962 = vshrl.u32 %v2961, 7
    %v2963 = vadd.s32 %v2962, 80
    %2964 = vset.pattern.permute.xlu0 %v2963
    %2965 = vperm.xlu0 %2964, %v2900
    %v2966 = vpop.permute.xlu0 %2965
    %v2967 = vlaneseq
    %v2968 = vshrl.u32 %v2967, 7
    %v2969 = vadd.s32 %v2968, 88
    %2970 = vset.pattern.permute.xlu0 %v2969
    %2971 = vperm.xlu0 %2970, %v2900
    %v2972 = vpop.permute.xlu0 %2971
    %v2973 = vlaneseq
    %v2974 = vshrl.u32 %v2973, 7
    %v2975 = vadd.s32 %v2974, 96
    %2976 = vset.pattern.permute.xlu0 %v2975
    %2977 = vperm.xlu0 %2976, %v2900
    %v2978 = vpop.permute.xlu0 %2977
    %v2979 = vlaneseq
    %v2980 = vshrl.u32 %v2979, 7
    %v2981 = vadd.s32 %v2980, 104
    %2982 = vset.pattern.permute.xlu0 %v2981
    %2983 = vperm.xlu0 %2982, %v2900
    %v2984 = vpop.permute.xlu0 %2983
    %v2985 = vlaneseq
    %v2986 = vshrl.u32 %v2985, 7
    %v2987 = vadd.s32 %v2986, 112
    %2988 = vset.pattern.permute.xlu0 %v2987
    %2989 = vperm.xlu0 %2988, %v2900
    %v2990 = vpop.permute.xlu0 %2989
    %v2991 = vlaneseq
    %v2992 = vshrl.u32 %v2991, 7
    %v2993 = vadd.s32 %v2992, 120
    %2994 = vset.pattern.permute.xlu0 %v2993
    %2995 = vperm.xlu0 %2994, %v2900
    %v2996 = vpop.permute.xlu0 %2995
    %v2997 = vperm.slane %v43, 4
    %v2998 = vlaneseq
    %v2999 = vshrl.u32 %v2998, 7
    %3001 = vset.pattern.permute.xlu0 %v2999
    %3002 = vperm.xlu0 %3001, %v2997
    %v3003 = vpop.permute.xlu0 %3002
    %v3004 = vlaneseq
    %v3005 = vshrl.u32 %v3004, 7
    %v3006 = vadd.s32 %v3005, 8
    %3007 = vset.pattern.permute.xlu0 %v3006
    %3008 = vperm.xlu0 %3007, %v2997
    %v3009 = vpop.permute.xlu0 %3008
    %v3010 = vlaneseq
    %v3011 = vshrl.u32 %v3010, 7
    %v3012 = vadd.s32 %v3011, 16
    %3013 = vset.pattern.permute.xlu0 %v3012
    %3014 = vperm.xlu0 %3013, %v2997
    %v3015 = vpop.permute.xlu0 %3014
    %v3016 = vlaneseq
    %v3017 = vshrl.u32 %v3016, 7
    %v3018 = vadd.s32 %v3017, 24
    %3019 = vset.pattern.permute.xlu0 %v3018
    %3020 = vperm.xlu0 %3019, %v2997
    %v3021 = vpop.permute.xlu0 %3020
    %v3022 = vlaneseq
    %v3023 = vshrl.u32 %v3022, 7
    %v3024 = vadd.s32 %v3023, 32
    %3025 = vset.pattern.permute.xlu0 %v3024
    %3026 = vperm.xlu0 %3025, %v2997
    %v3027 = vpop.permute.xlu0 %3026
    %v3028 = vlaneseq
    %v3029 = vshrl.u32 %v3028, 7
    %v3030 = vadd.s32 %v3029, 40
    %3031 = vset.pattern.permute.xlu0 %v3030
    %3032 = vperm.xlu0 %3031, %v2997
    %v3033 = vpop.permute.xlu0 %3032
    %v3034 = vlaneseq
    %v3035 = vshrl.u32 %v3034, 7
    %v3036 = vadd.s32 %v3035, 48
    %3037 = vset.pattern.permute.xlu0 %v3036
    %3038 = vperm.xlu0 %3037, %v2997
    %v3039 = vpop.permute.xlu0 %3038
    %v3040 = vlaneseq
    %v3041 = vshrl.u32 %v3040, 7
    %v3042 = vadd.s32 %v3041, 56
    %3043 = vset.pattern.permute.xlu0 %v3042
    %3044 = vperm.xlu0 %3043, %v2997
    %v3045 = vpop.permute.xlu0 %3044
    %v3046 = vlaneseq
    %v3047 = vshrl.u32 %v3046, 7
    %v3048 = vadd.s32 %v3047, 64
    %3049 = vset.pattern.permute.xlu0 %v3048
    %3050 = vperm.xlu0 %3049, %v2997
    %v3051 = vpop.permute.xlu0 %3050
    %v3052 = vlaneseq
    %v3053 = vshrl.u32 %v3052, 7
    %v3054 = vadd.s32 %v3053, 72
    %3055 = vset.pattern.permute.xlu0 %v3054
    %3056 = vperm.xlu0 %3055, %v2997
    %v3057 = vpop.permute.xlu0 %3056
    %v3058 = vlaneseq
    %v3059 = vshrl.u32 %v3058, 7
    %v3060 = vadd.s32 %v3059, 80
    %3061 = vset.pattern.permute.xlu0 %v3060
    %3062 = vperm.xlu0 %3061, %v2997
    %v3063 = vpop.permute.xlu0 %3062
    %v3064 = vlaneseq
    %v3065 = vshrl.u32 %v3064, 7
    %v3066 = vadd.s32 %v3065, 88
    %3067 = vset.pattern.permute.xlu0 %v3066
    %3068 = vperm.xlu0 %3067, %v2997
    %v3069 = vpop.permute.xlu0 %3068
    %v3070 = vlaneseq
    %v3071 = vshrl.u32 %v3070, 7
    %v3072 = vadd.s32 %v3071, 96
    %3073 = vset.pattern.permute.xlu0 %v3072
    %3074 = vperm.xlu0 %3073, %v2997
    %v3075 = vpop.permute.xlu0 %3074
    %v3076 = vlaneseq
    %v3077 = vshrl.u32 %v3076, 7
    %v3078 = vadd.s32 %v3077, 104
    %3079 = vset.pattern.permute.xlu0 %v3078
    %3080 = vperm.xlu0 %3079, %v2997
    %v3081 = vpop.permute.xlu0 %3080
    %v3082 = vlaneseq
    %v3083 = vshrl.u32 %v3082, 7
    %v3084 = vadd.s32 %v3083, 112
    %3085 = vset.pattern.permute.xlu0 %v3084
    %3086 = vperm.xlu0 %3085, %v2997
    %v3087 = vpop.permute.xlu0 %3086
    %v3088 = vlaneseq
    %v3089 = vshrl.u32 %v3088, 7
    %v3090 = vadd.s32 %v3089, 120
    %3091 = vset.pattern.permute.xlu0 %v3090
    %3092 = vperm.xlu0 %3091, %v2997
    %v3093 = vpop.permute.xlu0 %3092
    %v3094 = vperm.slane %v43, 5
    %v3095 = vlaneseq
    %v3096 = vshrl.u32 %v3095, 7
    %3098 = vset.pattern.permute.xlu0 %v3096
    %3099 = vperm.xlu0 %3098, %v3094
    %v3100 = vpop.permute.xlu0 %3099
    %v3101 = vlaneseq
    %v3102 = vshrl.u32 %v3101, 7
    %v3103 = vadd.s32 %v3102, 8
    %3104 = vset.pattern.permute.xlu0 %v3103
    %3105 = vperm.xlu0 %3104, %v3094
    %v3106 = vpop.permute.xlu0 %3105
    %v3107 = vlaneseq
    %v3108 = vshrl.u32 %v3107, 7
    %v3109 = vadd.s32 %v3108, 16
    %3110 = vset.pattern.permute.xlu0 %v3109
    %3111 = vperm.xlu0 %3110, %v3094
    %v3112 = vpop.permute.xlu0 %3111
    %v3113 = vlaneseq
    %v3114 = vshrl.u32 %v3113, 7
    %v3115 = vadd.s32 %v3114, 24
    %3116 = vset.pattern.permute.xlu0 %v3115
    %3117 = vperm.xlu0 %3116, %v3094
    %v3118 = vpop.permute.xlu0 %3117
    %v3119 = vlaneseq
    %v3120 = vshrl.u32 %v3119, 7
    %v3121 = vadd.s32 %v3120, 32
    %3122 = vset.pattern.permute.xlu0 %v3121
    %3123 = vperm.xlu0 %3122, %v3094
    %v3124 = vpop.permute.xlu0 %3123
    %v3125 = vlaneseq
    %v3126 = vshrl.u32 %v3125, 7
    %v3127 = vadd.s32 %v3126, 40
    %3128 = vset.pattern.permute.xlu0 %v3127
    %3129 = vperm.xlu0 %3128, %v3094
    %v3130 = vpop.permute.xlu0 %3129
    %v3131 = vlaneseq
    %v3132 = vshrl.u32 %v3131, 7
    %v3133 = vadd.s32 %v3132, 48
    %3134 = vset.pattern.permute.xlu0 %v3133
    %3135 = vperm.xlu0 %3134, %v3094
    %v3136 = vpop.permute.xlu0 %3135
    %v3137 = vlaneseq
    %v3138 = vshrl.u32 %v3137, 7
    %v3139 = vadd.s32 %v3138, 56
    %3140 = vset.pattern.permute.xlu0 %v3139
    %3141 = vperm.xlu0 %3140, %v3094
    %v3142 = vpop.permute.xlu0 %3141
    %v3143 = vlaneseq
    %v3144 = vshrl.u32 %v3143, 7
    %v3145 = vadd.s32 %v3144, 64
    %3146 = vset.pattern.permute.xlu0 %v3145
    %3147 = vperm.xlu0 %3146, %v3094
    %v3148 = vpop.permute.xlu0 %3147
    %v3149 = vlaneseq
    %v3150 = vshrl.u32 %v3149, 7
    %v3151 = vadd.s32 %v3150, 72
    %3152 = vset.pattern.permute.xlu0 %v3151
    %3153 = vperm.xlu0 %3152, %v3094
    %v3154 = vpop.permute.xlu0 %3153
    %v3155 = vlaneseq
    %v3156 = vshrl.u32 %v3155, 7
    %v3157 = vadd.s32 %v3156, 80
    %3158 = vset.pattern.permute.xlu0 %v3157
    %3159 = vperm.xlu0 %3158, %v3094
    %v3160 = vpop.permute.xlu0 %3159
    %v3161 = vlaneseq
    %v3162 = vshrl.u32 %v3161, 7
    %v3163 = vadd.s32 %v3162, 88
    %3164 = vset.pattern.permute.xlu0 %v3163
    %3165 = vperm.xlu0 %3164, %v3094
    %v3166 = vpop.permute.xlu0 %3165
    %v3167 = vlaneseq
    %v3168 = vshrl.u32 %v3167, 7
    %v3169 = vadd.s32 %v3168, 96
    %3170 = vset.pattern.permute.xlu0 %v3169
    %3171 = vperm.xlu0 %3170, %v3094
    %v3172 = vpop.permute.xlu0 %3171
    %v3173 = vlaneseq
    %v3174 = vshrl.u32 %v3173, 7
    %v3175 = vadd.s32 %v3174, 104
    %3176 = vset.pattern.permute.xlu0 %v3175
    %3177 = vperm.xlu0 %3176, %v3094
    %v3178 = vpop.permute.xlu0 %3177
    %v3179 = vlaneseq
    %v3180 = vshrl.u32 %v3179, 7
    %v3181 = vadd.s32 %v3180, 112
    %3182 = vset.pattern.permute.xlu0 %v3181
    %3183 = vperm.xlu0 %3182, %v3094
    %v3184 = vpop.permute.xlu0 %3183
    %v3185 = vlaneseq
    %v3186 = vshrl.u32 %v3185, 7
    %v3187 = vadd.s32 %v3186, 120
    %3188 = vset.pattern.permute.xlu0 %v3187
    %3189 = vperm.xlu0 %3188, %v3094
    %v3190 = vpop.permute.xlu0 %3189
    %v3191 = vperm.slane %v43, 6
    %v3192 = vlaneseq
    %v3193 = vshrl.u32 %v3192, 7
    %3195 = vset.pattern.permute.xlu0 %v3193
    %3196 = vperm.xlu0 %3195, %v3191
    %v3197 = vpop.permute.xlu0 %3196
    %v3198 = vlaneseq
    %v3199 = vshrl.u32 %v3198, 7
    %v3200 = vadd.s32 %v3199, 8
    %3201 = vset.pattern.permute.xlu0 %v3200
    %3202 = vperm.xlu0 %3201, %v3191
    %v3203 = vpop.permute.xlu0 %3202
    %v3204 = vlaneseq
    %v3205 = vshrl.u32 %v3204, 7
    %v3206 = vadd.s32 %v3205, 16
    %3207 = vset.pattern.permute.xlu0 %v3206
    %3208 = vperm.xlu0 %3207, %v3191
    %v3209 = vpop.permute.xlu0 %3208
    %v3210 = vlaneseq
    %v3211 = vshrl.u32 %v3210, 7
    %v3212 = vadd.s32 %v3211, 24
    %3213 = vset.pattern.permute.xlu0 %v3212
    %3214 = vperm.xlu0 %3213, %v3191
    %v3215 = vpop.permute.xlu0 %3214
    %v3216 = vlaneseq
    %v3217 = vshrl.u32 %v3216, 7
    %v3218 = vadd.s32 %v3217, 32
    %3219 = vset.pattern.permute.xlu0 %v3218
    %3220 = vperm.xlu0 %3219, %v3191
    %v3221 = vpop.permute.xlu0 %3220
    %v3222 = vlaneseq
    %v3223 = vshrl.u32 %v3222, 7
    %v3224 = vadd.s32 %v3223, 40
    %3225 = vset.pattern.permute.xlu0 %v3224
    %3226 = vperm.xlu0 %3225, %v3191
    %v3227 = vpop.permute.xlu0 %3226
    %v3228 = vlaneseq
    %v3229 = vshrl.u32 %v3228, 7
    %v3230 = vadd.s32 %v3229, 48
    %3231 = vset.pattern.permute.xlu0 %v3230
    %3232 = vperm.xlu0 %3231, %v3191
    %v3233 = vpop.permute.xlu0 %3232
    %v3234 = vlaneseq
    %v3235 = vshrl.u32 %v3234, 7
    %v3236 = vadd.s32 %v3235, 56
    %3237 = vset.pattern.permute.xlu0 %v3236
    %3238 = vperm.xlu0 %3237, %v3191
    %v3239 = vpop.permute.xlu0 %3238
    %v3240 = vlaneseq
    %v3241 = vshrl.u32 %v3240, 7
    %v3242 = vadd.s32 %v3241, 64
    %3243 = vset.pattern.permute.xlu0 %v3242
    %3244 = vperm.xlu0 %3243, %v3191
    %v3245 = vpop.permute.xlu0 %3244
    %v3246 = vlaneseq
    %v3247 = vshrl.u32 %v3246, 7
    %v3248 = vadd.s32 %v3247, 72
    %3249 = vset.pattern.permute.xlu0 %v3248
    %3250 = vperm.xlu0 %3249, %v3191
    %v3251 = vpop.permute.xlu0 %3250
    %v3252 = vlaneseq
    %v3253 = vshrl.u32 %v3252, 7
    %v3254 = vadd.s32 %v3253, 80
    %3255 = vset.pattern.permute.xlu0 %v3254
    %3256 = vperm.xlu0 %3255, %v3191
    %v3257 = vpop.permute.xlu0 %3256
    %v3258 = vlaneseq
    %v3259 = vshrl.u32 %v3258, 7
    %v3260 = vadd.s32 %v3259, 88
    %3261 = vset.pattern.permute.xlu0 %v3260
    %3262 = vperm.xlu0 %3261, %v3191
    %v3263 = vpop.permute.xlu0 %3262
    %v3264 = vlaneseq
    %v3265 = vshrl.u32 %v3264, 7
    %v3266 = vadd.s32 %v3265, 96
    %3267 = vset.pattern.permute.xlu0 %v3266
    %3268 = vperm.xlu0 %3267, %v3191
    %v3269 = vpop.permute.xlu0 %3268
    %v3270 = vlaneseq
    %v3271 = vshrl.u32 %v3270, 7
    %v3272 = vadd.s32 %v3271, 104
    %3273 = vset.pattern.permute.xlu0 %v3272
    %3274 = vperm.xlu0 %3273, %v3191
    %v3275 = vpop.permute.xlu0 %3274
    %v3276 = vlaneseq
    %v3277 = vshrl.u32 %v3276, 7
    %v3278 = vadd.s32 %v3277, 112
    %3279 = vset.pattern.permute.xlu0 %v3278
    %3280 = vperm.xlu0 %3279, %v3191
    %v3281 = vpop.permute.xlu0 %3280
    %v3282 = vlaneseq
    %v3283 = vshrl.u32 %v3282, 7
    %v3284 = vadd.s32 %v3283, 120
    %3285 = vset.pattern.permute.xlu0 %v3284
    %3286 = vperm.xlu0 %3285, %v3191
    %v3287 = vpop.permute.xlu0 %3286
    %v3288 = vperm.slane %v43, 7
    %v3289 = vlaneseq
    %v3290 = vshrl.u32 %v3289, 7
    %3292 = vset.pattern.permute.xlu0 %v3290
    %3293 = vperm.xlu0 %3292, %v3288
    %v3294 = vpop.permute.xlu0 %3293
    %v3295 = vlaneseq
    %v3296 = vshrl.u32 %v3295, 7
    %v3297 = vadd.s32 %v3296, 8
    %3298 = vset.pattern.permute.xlu0 %v3297
    %3299 = vperm.xlu0 %3298, %v3288
    %v3300 = vpop.permute.xlu0 %3299
    %v3301 = vlaneseq
    %v3302 = vshrl.u32 %v3301, 7
    %v3303 = vadd.s32 %v3302, 16
    %3304 = vset.pattern.permute.xlu0 %v3303
    %3305 = vperm.xlu0 %3304, %v3288
    %v3306 = vpop.permute.xlu0 %3305
    %v3307 = vlaneseq
    %v3308 = vshrl.u32 %v3307, 7
    %v3309 = vadd.s32 %v3308, 24
    %3310 = vset.pattern.permute.xlu0 %v3309
    %3311 = vperm.xlu0 %3310, %v3288
    %v3312 = vpop.permute.xlu0 %3311
    %v3313 = vlaneseq
    %v3314 = vshrl.u32 %v3313, 7
    %v3315 = vadd.s32 %v3314, 32
    %3316 = vset.pattern.permute.xlu0 %v3315
    %3317 = vperm.xlu0 %3316, %v3288
    %v3318 = vpop.permute.xlu0 %3317
    %v3319 = vlaneseq
    %v3320 = vshrl.u32 %v3319, 7
    %v3321 = vadd.s32 %v3320, 40
    %3322 = vset.pattern.permute.xlu0 %v3321
    %3323 = vperm.xlu0 %3322, %v3288
    %v3324 = vpop.permute.xlu0 %3323
    %v3325 = vlaneseq
    %v3326 = vshrl.u32 %v3325, 7
    %v3327 = vadd.s32 %v3326, 48
    %3328 = vset.pattern.permute.xlu0 %v3327
    %3329 = vperm.xlu0 %3328, %v3288
    %v3330 = vpop.permute.xlu0 %3329
    %v3331 = vlaneseq
    %v3332 = vshrl.u32 %v3331, 7
    %v3333 = vadd.s32 %v3332, 56
    %3334 = vset.pattern.permute.xlu0 %v3333
    %3335 = vperm.xlu0 %3334, %v3288
    %v3336 = vpop.permute.xlu0 %3335
    %v3337 = vlaneseq
    %v3338 = vshrl.u32 %v3337, 7
    %v3339 = vadd.s32 %v3338, 64
    %3340 = vset.pattern.permute.xlu0 %v3339
    %3341 = vperm.xlu0 %3340, %v3288
    %v3342 = vpop.permute.xlu0 %3341
    %v3343 = vlaneseq
    %v3344 = vshrl.u32 %v3343, 7
    %v3345 = vadd.s32 %v3344, 72
    %3346 = vset.pattern.permute.xlu0 %v3345
    %3347 = vperm.xlu0 %3346, %v3288
    %v3348 = vpop.permute.xlu0 %3347
    %v3349 = vlaneseq
    %v3350 = vshrl.u32 %v3349, 7
    %v3351 = vadd.s32 %v3350, 80
    %3352 = vset.pattern.permute.xlu0 %v3351
    %3353 = vperm.xlu0 %3352, %v3288
    %v3354 = vpop.permute.xlu0 %3353
    %v3355 = vlaneseq
    %v3356 = vshrl.u32 %v3355, 7
    %v3357 = vadd.s32 %v3356, 88
    %3358 = vset.pattern.permute.xlu0 %v3357
    %3359 = vperm.xlu0 %3358, %v3288
    %v3360 = vpop.permute.xlu0 %3359
    %v3361 = vlaneseq
    %v3362 = vshrl.u32 %v3361, 7
    %v3363 = vadd.s32 %v3362, 96
    %3364 = vset.pattern.permute.xlu0 %v3363
    %3365 = vperm.xlu0 %3364, %v3288
    %v3366 = vpop.permute.xlu0 %3365
    %v3367 = vlaneseq
    %v3368 = vshrl.u32 %v3367, 7
    %v3369 = vadd.s32 %v3368, 104
    %3370 = vset.pattern.permute.xlu0 %v3369
    %3371 = vperm.xlu0 %3370, %v3288
    %v3372 = vpop.permute.xlu0 %3371
    %v3373 = vlaneseq
    %v3374 = vshrl.u32 %v3373, 7
    %v3375 = vadd.s32 %v3374, 112
    %3376 = vset.pattern.permute.xlu0 %v3375
    %3377 = vperm.xlu0 %3376, %v3288
    %v3378 = vpop.permute.xlu0 %3377
    %v3379 = vlaneseq
    %v3380 = vshrl.u32 %v3379, 7
    %v3381 = vadd.s32 %v3380, 120
    %3382 = vset.pattern.permute.xlu0 %v3381
    %3383 = vperm.xlu0 %3382, %v3288
    %v3384 = vpop.permute.xlu0 %3383
    %v3385 = vsel %vm821, %v2615, %v3003
    %v3386 = vsel %vm821, %v2621, %v3009
    %v3387 = vsel %vm821, %v2627, %v3015
    %v3388 = vsel %vm821, %v2633, %v3021
    %v3389 = vsel %vm821, %v2639, %v3027
    %v3390 = vsel %vm821, %v2645, %v3033
    %v3391 = vsel %vm821, %v2651, %v3039
    %v3392 = vsel %vm821, %v2657, %v3045
    %v3393 = vsel %vm821, %v2663, %v3051
    %v3394 = vsel %vm821, %v2669, %v3057
    %v3395 = vsel %vm821, %v2675, %v3063
    %v3396 = vsel %vm821, %v2681, %v3069
    %v3397 = vsel %vm821, %v2687, %v3075
    %v3398 = vsel %vm821, %v2693, %v3081
    %v3399 = vsel %vm821, %v2699, %v3087
    %v3400 = vsel %vm821, %v2705, %v3093
    %v3401 = vsel %vm821, %v2712, %v3100
    %v3402 = vsel %vm821, %v2718, %v3106
    %v3403 = vsel %vm821, %v2724, %v3112
    %v3404 = vsel %vm821, %v2730, %v3118
    %v3405 = vsel %vm821, %v2736, %v3124
    %v3406 = vsel %vm821, %v2742, %v3130
    %v3407 = vsel %vm821, %v2748, %v3136
    %v3408 = vsel %vm821, %v2754, %v3142
    %v3409 = vsel %vm821, %v2760, %v3148
    %v3410 = vsel %vm821, %v2766, %v3154
    %v3411 = vsel %vm821, %v2772, %v3160
    %v3412 = vsel %vm821, %v2778, %v3166
    %v3413 = vsel %vm821, %v2784, %v3172
    %v3414 = vsel %vm821, %v2790, %v3178
    %v3415 = vsel %vm821, %v2796, %v3184
    %v3416 = vsel %vm821, %v2802, %v3190
    %v3417 = vsel %vm821, %v2809, %v3197
    %v3418 = vsel %vm821, %v2815, %v3203
    %v3419 = vsel %vm821, %v2821, %v3209
    %v3420 = vsel %vm821, %v2827, %v3215
    %v3421 = vsel %vm821, %v2833, %v3221
    %v3422 = vsel %vm821, %v2839, %v3227
    %v3423 = vsel %vm821, %v2845, %v3233
    %v3424 = vsel %vm821, %v2851, %v3239
    %v3425 = vsel %vm821, %v2857, %v3245
    %v3426 = vsel %vm821, %v2863, %v3251
    %v3427 = vsel %vm821, %v2869, %v3257
    %v3428 = vsel %vm821, %v2875, %v3263
    %v3429 = vsel %vm821, %v2881, %v3269
    %v3430 = vsel %vm821, %v2887, %v3275
    %v3431 = vsel %vm821, %v2893, %v3281
    %v3432 = vsel %vm821, %v2899, %v3287
    %v3433 = vsel %vm821, %v2906, %v3294
    %v3434 = vsel %vm821, %v2912, %v3300
    %v3435 = vsel %vm821, %v2918, %v3306
    %v3436 = vsel %vm821, %v2924, %v3312
    %v3437 = vsel %vm821, %v2930, %v3318
    %v3438 = vsel %vm821, %v2936, %v3324
    %v3439 = vsel %vm821, %v2942, %v3330
    %v3440 = vsel %vm821, %v2948, %v3336
    %v3441 = vsel %vm821, %v2954, %v3342
    %v3442 = vsel %vm821, %v2960, %v3348
    %v3443 = vsel %vm821, %v2966, %v3354
    %v3444 = vsel %vm821, %v2972, %v3360
    %v3445 = vsel %vm821, %v2978, %v3366
    %v3446 = vsel %vm821, %v2984, %v3372
    %v3447 = vsel %vm821, %v2990, %v3378
    %v3448 = vsel %vm821, %v2996, %v3384
    %v3449 = vrot.slane %v3417, 4
    %v3450 = vsel %vm887, %v3449, %v3385
    %v3451 = vrot.slane %v3385, 4
    %v3452 = vsel %vm887, %v3417, %v3451
    %v3454 = vunpack.c.l.s4 1983009808
    %v3455 = vunpack.c.0.s8 %v3454
    %v3456 = vperm.slane %v3450, %v3455
    %v3458 = vunpack.c.l.s4 1983009808
    %v3459 = vunpack.c.0.s8 %v3458
    %v3460 = vperm.slane %v3452, %v3459
    %v3461 = vrot.slane %v3433, 4
    %v3462 = vsel %vm887, %v3461, %v3401
    %v3463 = vrot.slane %v3401, 4
    %v3464 = vsel %vm887, %v3433, %v3463
    %v3466 = vunpack.c.l.s4 1983009808
    %v3467 = vunpack.c.0.s8 %v3466
    %v3468 = vperm.slane %v3462, %v3467
    %v3470 = vunpack.c.l.s4 1983009808
    %v3471 = vunpack.c.0.s8 %v3470
    %v3472 = vperm.slane %v3464, %v3471
    %v3473 = vrot.slane %v3468, 4
    %v3474 = vsel %vm887, %v3473, %v3456
    %v3475 = vrot.slane %v3456, 4
    %v3476 = vsel %vm887, %v3468, %v3475
    %v3478 = vunpack.c.l.s4 1934713408
    %v3479 = vunpack.c.0.s8 %v3478
    %v3480 = vperm.slane %v3474, %v3479
    %v3482 = vunpack.c.l.s4 1934713408
    %v3483 = vunpack.c.0.s8 %v3482
    %v3484 = vperm.slane %v3476, %v3483
    %v3485 = vrot.slane %v3472, 4
    %v3486 = vsel %vm887, %v3485, %v3460
    %v3487 = vrot.slane %v3460, 4
    %v3488 = vsel %vm887, %v3472, %v3487
    %v3490 = vunpack.c.l.s4 1934713408
    %v3491 = vunpack.c.0.s8 %v3490
    %v3492 = vperm.slane %v3486, %v3491
    %v3494 = vunpack.c.l.s4 1934713408
    %v3495 = vunpack.c.0.s8 %v3494
    %v3496 = vperm.slane %v3488, %v3495
    %v3497 = vrot.slane %v3480, 4
    %v3498 = vsel %vm887, 0.0, %v3497
    %v3499 = vrot.slane %v3484, 4
    %v3500 = vsel %vm887, 0.0, %v3499
    %v3501 = vrot.slane %v3492, 4
    %v3502 = vsel %vm887, 0.0, %v3501
    %v3503 = vrot.slane %v3496, 4
    %v3504 = vsel %vm887, 0.0, %v3503
    %v3505 = vrot.slane %v3418, 4
    %v3506 = vsel %vm887, %v3505, %v3386
    %v3507 = vrot.slane %v3386, 4
    %v3508 = vsel %vm887, %v3418, %v3507
    %v3510 = vunpack.c.l.s4 1983009808
    %v3511 = vunpack.c.0.s8 %v3510
    %v3512 = vperm.slane %v3506, %v3511
    %v3514 = vunpack.c.l.s4 1983009808
    %v3515 = vunpack.c.0.s8 %v3514
    %v3516 = vperm.slane %v3508, %v3515
    %v3517 = vrot.slane %v3434, 4
    %v3518 = vsel %vm887, %v3517, %v3402
    %v3519 = vrot.slane %v3402, 4
    %v3520 = vsel %vm887, %v3434, %v3519
    %v3522 = vunpack.c.l.s4 1983009808
    %v3523 = vunpack.c.0.s8 %v3522
    %v3524 = vperm.slane %v3518, %v3523
    %v3526 = vunpack.c.l.s4 1983009808
    %v3527 = vunpack.c.0.s8 %v3526
    %v3528 = vperm.slane %v3520, %v3527
    %v3529 = vrot.slane %v3524, 4
    %v3530 = vsel %vm887, %v3529, %v3512
    %v3531 = vrot.slane %v3512, 4
    %v3532 = vsel %vm887, %v3524, %v3531
    %v3534 = vunpack.c.l.s4 1934713408
    %v3535 = vunpack.c.0.s8 %v3534
    %v3536 = vperm.slane %v3530, %v3535
    %v3538 = vunpack.c.l.s4 1934713408
    %v3539 = vunpack.c.0.s8 %v3538
    %v3540 = vperm.slane %v3532, %v3539
    %v3541 = vrot.slane %v3528, 4
    %v3542 = vsel %vm887, %v3541, %v3516
    %v3543 = vrot.slane %v3516, 4
    %v3544 = vsel %vm887, %v3528, %v3543
    %v3546 = vunpack.c.l.s4 1934713408
    %v3547 = vunpack.c.0.s8 %v3546
    %v3548 = vperm.slane %v3542, %v3547
    %v3550 = vunpack.c.l.s4 1934713408
    %v3551 = vunpack.c.0.s8 %v3550
    %v3552 = vperm.slane %v3544, %v3551
    %v3553 = vrot.slane %v3536, 4
    %v3554 = vsel %vm887, 0.0, %v3553
    %v3555 = vrot.slane %v3540, 4
    %v3556 = vsel %vm887, 0.0, %v3555
    %v3557 = vrot.slane %v3548, 4
    %v3558 = vsel %vm887, 0.0, %v3557
    %v3559 = vrot.slane %v3552, 4
    %v3560 = vsel %vm887, 0.0, %v3559
    %v3561 = vrot.slane %v3419, 4
    %v3562 = vsel %vm887, %v3561, %v3387
    %v3563 = vrot.slane %v3387, 4
    %v3564 = vsel %vm887, %v3419, %v3563
    %v3566 = vunpack.c.l.s4 1983009808
    %v3567 = vunpack.c.0.s8 %v3566
    %v3568 = vperm.slane %v3562, %v3567
    %v3570 = vunpack.c.l.s4 1983009808
    %v3571 = vunpack.c.0.s8 %v3570
    %v3572 = vperm.slane %v3564, %v3571
    %v3573 = vrot.slane %v3435, 4
    %v3574 = vsel %vm887, %v3573, %v3403
    %v3575 = vrot.slane %v3403, 4
    %v3576 = vsel %vm887, %v3435, %v3575
    %v3578 = vunpack.c.l.s4 1983009808
    %v3579 = vunpack.c.0.s8 %v3578
    %v3580 = vperm.slane %v3574, %v3579
    %v3582 = vunpack.c.l.s4 1983009808
    %v3583 = vunpack.c.0.s8 %v3582
    %v3584 = vperm.slane %v3576, %v3583
    %v3585 = vrot.slane %v3580, 4
    %v3586 = vsel %vm887, %v3585, %v3568
    %v3587 = vrot.slane %v3568, 4
    %v3588 = vsel %vm887, %v3580, %v3587
    %v3590 = vunpack.c.l.s4 1934713408
    %v3591 = vunpack.c.0.s8 %v3590
    %v3592 = vperm.slane %v3586, %v3591
    %v3594 = vunpack.c.l.s4 1934713408
    %v3595 = vunpack.c.0.s8 %v3594
    %v3596 = vperm.slane %v3588, %v3595
    %v3597 = vrot.slane %v3584, 4
    %v3598 = vsel %vm887, %v3597, %v3572
    %v3599 = vrot.slane %v3572, 4
    %v3600 = vsel %vm887, %v3584, %v3599
    %v3602 = vunpack.c.l.s4 1934713408
    %v3603 = vunpack.c.0.s8 %v3602
    %v3604 = vperm.slane %v3598, %v3603
    %v3606 = vunpack.c.l.s4 1934713408
    %v3607 = vunpack.c.0.s8 %v3606
    %v3608 = vperm.slane %v3600, %v3607
    %v3609 = vrot.slane %v3592, 4
    %v3610 = vsel %vm887, 0.0, %v3609
    %v3611 = vrot.slane %v3596, 4
    %v3612 = vsel %vm887, 0.0, %v3611
    %v3613 = vrot.slane %v3604, 4
    %v3614 = vsel %vm887, 0.0, %v3613
    %v3615 = vrot.slane %v3608, 4
    %v3616 = vsel %vm887, 0.0, %v3615
    %v3617 = vrot.slane %v3420, 4
    %v3618 = vsel %vm887, %v3617, %v3388
    %v3619 = vrot.slane %v3388, 4
    %v3620 = vsel %vm887, %v3420, %v3619
    %v3622 = vunpack.c.l.s4 1983009808
    %v3623 = vunpack.c.0.s8 %v3622
    %v3624 = vperm.slane %v3618, %v3623
    %v3626 = vunpack.c.l.s4 1983009808
    %v3627 = vunpack.c.0.s8 %v3626
    %v3628 = vperm.slane %v3620, %v3627
    %v3629 = vrot.slane %v3436, 4
    %v3630 = vsel %vm887, %v3629, %v3404
    %v3631 = vrot.slane %v3404, 4
    %v3632 = vsel %vm887, %v3436, %v3631
    %v3634 = vunpack.c.l.s4 1983009808
    %v3635 = vunpack.c.0.s8 %v3634
    %v3636 = vperm.slane %v3630, %v3635
    %v3638 = vunpack.c.l.s4 1983009808
    %v3639 = vunpack.c.0.s8 %v3638
    %v3640 = vperm.slane %v3632, %v3639
    %v3641 = vrot.slane %v3636, 4
    %v3642 = vsel %vm887, %v3641, %v3624
    %v3643 = vrot.slane %v3624, 4
    %v3644 = vsel %vm887, %v3636, %v3643
    %v3646 = vunpack.c.l.s4 1934713408
    %v3647 = vunpack.c.0.s8 %v3646
    %v3648 = vperm.slane %v3642, %v3647
    %v3650 = vunpack.c.l.s4 1934713408
    %v3651 = vunpack.c.0.s8 %v3650
    %v3652 = vperm.slane %v3644, %v3651
    %v3653 = vrot.slane %v3640, 4
    %v3654 = vsel %vm887, %v3653, %v3628
    %v3655 = vrot.slane %v3628, 4
    %v3656 = vsel %vm887, %v3640, %v3655
    %v3658 = vunpack.c.l.s4 1934713408
    %v3659 = vunpack.c.0.s8 %v3658
    %v3660 = vperm.slane %v3654, %v3659
    %v3662 = vunpack.c.l.s4 1934713408
    %v3663 = vunpack.c.0.s8 %v3662
    %v3664 = vperm.slane %v3656, %v3663
    %v3665 = vrot.slane %v3648, 4
    %v3666 = vsel %vm887, 0.0, %v3665
    %v3667 = vrot.slane %v3652, 4
    %v3668 = vsel %vm887, 0.0, %v3667
    %v3669 = vrot.slane %v3660, 4
    %v3670 = vsel %vm887, 0.0, %v3669
    %v3671 = vrot.slane %v3664, 4
    %v3672 = vsel %vm887, 0.0, %v3671
    %v3673 = vrot.slane %v3421, 4
    %v3674 = vsel %vm887, %v3673, %v3389
    %v3675 = vrot.slane %v3389, 4
    %v3676 = vsel %vm887, %v3421, %v3675
    %v3678 = vunpack.c.l.s4 1983009808
    %v3679 = vunpack.c.0.s8 %v3678
    %v3680 = vperm.slane %v3674, %v3679
    %v3682 = vunpack.c.l.s4 1983009808
    %v3683 = vunpack.c.0.s8 %v3682
    %v3684 = vperm.slane %v3676, %v3683
    %v3685 = vrot.slane %v3437, 4
    %v3686 = vsel %vm887, %v3685, %v3405
    %v3687 = vrot.slane %v3405, 4
    %v3688 = vsel %vm887, %v3437, %v3687
    %v3690 = vunpack.c.l.s4 1983009808
    %v3691 = vunpack.c.0.s8 %v3690
    %v3692 = vperm.slane %v3686, %v3691
    %v3694 = vunpack.c.l.s4 1983009808
    %v3695 = vunpack.c.0.s8 %v3694
    %v3696 = vperm.slane %v3688, %v3695
    %v3697 = vrot.slane %v3692, 4
    %v3698 = vsel %vm887, %v3697, %v3680
    %v3699 = vrot.slane %v3680, 4
    %v3700 = vsel %vm887, %v3692, %v3699
    %v3702 = vunpack.c.l.s4 1934713408
    %v3703 = vunpack.c.0.s8 %v3702
    %v3704 = vperm.slane %v3698, %v3703
    %v3706 = vunpack.c.l.s4 1934713408
    %v3707 = vunpack.c.0.s8 %v3706
    %v3708 = vperm.slane %v3700, %v3707
    %v3709 = vrot.slane %v3696, 4
    %v3710 = vsel %vm887, %v3709, %v3684
    %v3711 = vrot.slane %v3684, 4
    %v3712 = vsel %vm887, %v3696, %v3711
    %v3714 = vunpack.c.l.s4 1934713408
    %v3715 = vunpack.c.0.s8 %v3714
    %v3716 = vperm.slane %v3710, %v3715
    %v3718 = vunpack.c.l.s4 1934713408
    %v3719 = vunpack.c.0.s8 %v3718
    %v3720 = vperm.slane %v3712, %v3719
    %v3721 = vrot.slane %v3704, 4
    %v3722 = vsel %vm887, 0.0, %v3721
    %v3723 = vrot.slane %v3708, 4
    %v3724 = vsel %vm887, 0.0, %v3723
    %v3725 = vrot.slane %v3716, 4
    %v3726 = vsel %vm887, 0.0, %v3725
    %v3727 = vrot.slane %v3720, 4
    %v3728 = vsel %vm887, 0.0, %v3727
    %v3729 = vrot.slane %v3422, 4
    %v3730 = vsel %vm887, %v3729, %v3390
    %v3731 = vrot.slane %v3390, 4
    %v3732 = vsel %vm887, %v3422, %v3731
    %v3734 = vunpack.c.l.s4 1983009808
    %v3735 = vunpack.c.0.s8 %v3734
    %v3736 = vperm.slane %v3730, %v3735
    %v3738 = vunpack.c.l.s4 1983009808
    %v3739 = vunpack.c.0.s8 %v3738
    %v3740 = vperm.slane %v3732, %v3739
    %v3741 = vrot.slane %v3438, 4
    %v3742 = vsel %vm887, %v3741, %v3406
    %v3743 = vrot.slane %v3406, 4
    %v3744 = vsel %vm887, %v3438, %v3743
    %v3746 = vunpack.c.l.s4 1983009808
    %v3747 = vunpack.c.0.s8 %v3746
    %v3748 = vperm.slane %v3742, %v3747
    %v3750 = vunpack.c.l.s4 1983009808
    %v3751 = vunpack.c.0.s8 %v3750
    %v3752 = vperm.slane %v3744, %v3751
    %v3753 = vrot.slane %v3748, 4
    %v3754 = vsel %vm887, %v3753, %v3736
    %v3755 = vrot.slane %v3736, 4
    %v3756 = vsel %vm887, %v3748, %v3755
    %v3758 = vunpack.c.l.s4 1934713408
    %v3759 = vunpack.c.0.s8 %v3758
    %v3760 = vperm.slane %v3754, %v3759
    %v3762 = vunpack.c.l.s4 1934713408
    %v3763 = vunpack.c.0.s8 %v3762
    %v3764 = vperm.slane %v3756, %v3763
    %v3765 = vrot.slane %v3752, 4
    %v3766 = vsel %vm887, %v3765, %v3740
    %v3767 = vrot.slane %v3740, 4
    %v3768 = vsel %vm887, %v3752, %v3767
    %v3770 = vunpack.c.l.s4 1934713408
    %v3771 = vunpack.c.0.s8 %v3770
    %v3772 = vperm.slane %v3766, %v3771
    %v3774 = vunpack.c.l.s4 1934713408
    %v3775 = vunpack.c.0.s8 %v3774
    %v3776 = vperm.slane %v3768, %v3775
    %v3777 = vrot.slane %v3760, 4
    %v3778 = vsel %vm887, 0.0, %v3777
    %v3779 = vrot.slane %v3764, 4
    %v3780 = vsel %vm887, 0.0, %v3779
    %v3781 = vrot.slane %v3772, 4
    %v3782 = vsel %vm887, 0.0, %v3781
    %v3783 = vrot.slane %v3776, 4
    %v3784 = vsel %vm887, 0.0, %v3783
    %v3785 = vrot.slane %v3423, 4
    %v3786 = vsel %vm887, %v3785, %v3391
    %v3787 = vrot.slane %v3391, 4
    %v3788 = vsel %vm887, %v3423, %v3787
    %v3790 = vunpack.c.l.s4 1983009808
    %v3791 = vunpack.c.0.s8 %v3790
    %v3792 = vperm.slane %v3786, %v3791
    %v3794 = vunpack.c.l.s4 1983009808
    %v3795 = vunpack.c.0.s8 %v3794
    %v3796 = vperm.slane %v3788, %v3795
    %v3797 = vrot.slane %v3439, 4
    %v3798 = vsel %vm887, %v3797, %v3407
    %v3799 = vrot.slane %v3407, 4
    %v3800 = vsel %vm887, %v3439, %v3799
    %v3802 = vunpack.c.l.s4 1983009808
    %v3803 = vunpack.c.0.s8 %v3802
    %v3804 = vperm.slane %v3798, %v3803
    %v3806 = vunpack.c.l.s4 1983009808
    %v3807 = vunpack.c.0.s8 %v3806
    %v3808 = vperm.slane %v3800, %v3807
    %v3809 = vrot.slane %v3804, 4
    %v3810 = vsel %vm887, %v3809, %v3792
    %v3811 = vrot.slane %v3792, 4
    %v3812 = vsel %vm887, %v3804, %v3811
    %v3814 = vunpack.c.l.s4 1934713408
    %v3815 = vunpack.c.0.s8 %v3814
    %v3816 = vperm.slane %v3810, %v3815
    %v3818 = vunpack.c.l.s4 1934713408
    %v3819 = vunpack.c.0.s8 %v3818
    %v3820 = vperm.slane %v3812, %v3819
    %v3821 = vrot.slane %v3808, 4
    %v3822 = vsel %vm887, %v3821, %v3796
    %v3823 = vrot.slane %v3796, 4
    %v3824 = vsel %vm887, %v3808, %v3823
    %v3826 = vunpack.c.l.s4 1934713408
    %v3827 = vunpack.c.0.s8 %v3826
    %v3828 = vperm.slane %v3822, %v3827
    %v3830 = vunpack.c.l.s4 1934713408
    %v3831 = vunpack.c.0.s8 %v3830
    %v3832 = vperm.slane %v3824, %v3831
    %v3833 = vrot.slane %v3816, 4
    %v3834 = vsel %vm887, 0.0, %v3833
    %v3835 = vrot.slane %v3820, 4
    %v3836 = vsel %vm887, 0.0, %v3835
    %v3837 = vrot.slane %v3828, 4
    %v3838 = vsel %vm887, 0.0, %v3837
    %v3839 = vrot.slane %v3832, 4
    %v3840 = vsel %vm887, 0.0, %v3839
    %v3841 = vrot.slane %v3424, 4
    %v3842 = vsel %vm887, %v3841, %v3392
    %v3843 = vrot.slane %v3392, 4
    %v3844 = vsel %vm887, %v3424, %v3843
    %v3846 = vunpack.c.l.s4 1983009808
    %v3847 = vunpack.c.0.s8 %v3846
    %v3848 = vperm.slane %v3842, %v3847
    %v3850 = vunpack.c.l.s4 1983009808
    %v3851 = vunpack.c.0.s8 %v3850
    %v3852 = vperm.slane %v3844, %v3851
    %v3853 = vrot.slane %v3440, 4
    %v3854 = vsel %vm887, %v3853, %v3408
    %v3855 = vrot.slane %v3408, 4
    %v3856 = vsel %vm887, %v3440, %v3855
    %v3858 = vunpack.c.l.s4 1983009808
    %v3859 = vunpack.c.0.s8 %v3858
    %v3860 = vperm.slane %v3854, %v3859
    %v3862 = vunpack.c.l.s4 1983009808
    %v3863 = vunpack.c.0.s8 %v3862
    %v3864 = vperm.slane %v3856, %v3863
    %v3865 = vrot.slane %v3860, 4
    %v3866 = vsel %vm887, %v3865, %v3848
    %v3867 = vrot.slane %v3848, 4
    %v3868 = vsel %vm887, %v3860, %v3867
    %v3870 = vunpack.c.l.s4 1934713408
    %v3871 = vunpack.c.0.s8 %v3870
    %v3872 = vperm.slane %v3866, %v3871
    %v3874 = vunpack.c.l.s4 1934713408
    %v3875 = vunpack.c.0.s8 %v3874
    %v3876 = vperm.slane %v3868, %v3875
    %v3877 = vrot.slane %v3864, 4
    %v3878 = vsel %vm887, %v3877, %v3852
    %v3879 = vrot.slane %v3852, 4
    %v3880 = vsel %vm887, %v3864, %v3879
    %v3882 = vunpack.c.l.s4 1934713408
    %v3883 = vunpack.c.0.s8 %v3882
    %v3884 = vperm.slane %v3878, %v3883
    %v3886 = vunpack.c.l.s4 1934713408
    %v3887 = vunpack.c.0.s8 %v3886
    %v3888 = vperm.slane %v3880, %v3887
    %v3889 = vrot.slane %v3872, 4
    %v3890 = vsel %vm887, 0.0, %v3889
    %v3891 = vrot.slane %v3876, 4
    %v3892 = vsel %vm887, 0.0, %v3891
    %v3893 = vrot.slane %v3884, 4
    %v3894 = vsel %vm887, 0.0, %v3893
    %v3895 = vrot.slane %v3888, 4
    %v3896 = vsel %vm887, 0.0, %v3895
    %v3897 = vrot.slane %v3425, 4
    %v3898 = vsel %vm887, %v3897, %v3393
    %v3899 = vrot.slane %v3393, 4
    %v3900 = vsel %vm887, %v3425, %v3899
    %v3902 = vunpack.c.l.s4 1983009808
    %v3903 = vunpack.c.0.s8 %v3902
    %v3904 = vperm.slane %v3898, %v3903
    %v3906 = vunpack.c.l.s4 1983009808
    %v3907 = vunpack.c.0.s8 %v3906
    %v3908 = vperm.slane %v3900, %v3907
    %v3909 = vrot.slane %v3441, 4
    %v3910 = vsel %vm887, %v3909, %v3409
    %v3911 = vrot.slane %v3409, 4
    %v3912 = vsel %vm887, %v3441, %v3911
    %v3914 = vunpack.c.l.s4 1983009808
    %v3915 = vunpack.c.0.s8 %v3914
    %v3916 = vperm.slane %v3910, %v3915
    %v3918 = vunpack.c.l.s4 1983009808
    %v3919 = vunpack.c.0.s8 %v3918
    %v3920 = vperm.slane %v3912, %v3919
    %v3921 = vrot.slane %v3916, 4
    %v3922 = vsel %vm887, %v3921, %v3904
    %v3923 = vrot.slane %v3904, 4
    %v3924 = vsel %vm887, %v3916, %v3923
    %v3926 = vunpack.c.l.s4 1934713408
    %v3927 = vunpack.c.0.s8 %v3926
    %v3928 = vperm.slane %v3922, %v3927
    %v3930 = vunpack.c.l.s4 1934713408
    %v3931 = vunpack.c.0.s8 %v3930
    %v3932 = vperm.slane %v3924, %v3931
    %v3933 = vrot.slane %v3920, 4
    %v3934 = vsel %vm887, %v3933, %v3908
    %v3935 = vrot.slane %v3908, 4
    %v3936 = vsel %vm887, %v3920, %v3935
    %v3938 = vunpack.c.l.s4 1934713408
    %v3939 = vunpack.c.0.s8 %v3938
    %v3940 = vperm.slane %v3934, %v3939
    %v3942 = vunpack.c.l.s4 1934713408
    %v3943 = vunpack.c.0.s8 %v3942
    %v3944 = vperm.slane %v3936, %v3943
    %v3945 = vrot.slane %v3928, 4
    %v3946 = vsel %vm887, 0.0, %v3945
    %v3947 = vrot.slane %v3932, 4
    %v3948 = vsel %vm887, 0.0, %v3947
    %v3949 = vrot.slane %v3940, 4
    %v3950 = vsel %vm887, 0.0, %v3949
    %v3951 = vrot.slane %v3944, 4
    %v3952 = vsel %vm887, 0.0, %v3951
    %v3953 = vrot.slane %v3426, 4
    %v3954 = vsel %vm887, %v3953, %v3394
    %v3955 = vrot.slane %v3394, 4
    %v3956 = vsel %vm887, %v3426, %v3955
    %v3958 = vunpack.c.l.s4 1983009808
    %v3959 = vunpack.c.0.s8 %v3958
    %v3960 = vperm.slane %v3954, %v3959
    %v3962 = vunpack.c.l.s4 1983009808
    %v3963 = vunpack.c.0.s8 %v3962
    %v3964 = vperm.slane %v3956, %v3963
    %v3965 = vrot.slane %v3442, 4
    %v3966 = vsel %vm887, %v3965, %v3410
    %v3967 = vrot.slane %v3410, 4
    %v3968 = vsel %vm887, %v3442, %v3967
    %v3970 = vunpack.c.l.s4 1983009808
    %v3971 = vunpack.c.0.s8 %v3970
    %v3972 = vperm.slane %v3966, %v3971
    %v3974 = vunpack.c.l.s4 1983009808
    %v3975 = vunpack.c.0.s8 %v3974
    %v3976 = vperm.slane %v3968, %v3975
    %v3977 = vrot.slane %v3972, 4
    %v3978 = vsel %vm887, %v3977, %v3960
    %v3979 = vrot.slane %v3960, 4
    %v3980 = vsel %vm887, %v3972, %v3979
    %v3982 = vunpack.c.l.s4 1934713408
    %v3983 = vunpack.c.0.s8 %v3982
    %v3984 = vperm.slane %v3978, %v3983
    %v3986 = vunpack.c.l.s4 1934713408
    %v3987 = vunpack.c.0.s8 %v3986
    %v3988 = vperm.slane %v3980, %v3987
    %v3989 = vrot.slane %v3976, 4
    %v3990 = vsel %vm887, %v3989, %v3964
    %v3991 = vrot.slane %v3964, 4
    %v3992 = vsel %vm887, %v3976, %v3991
    %v3994 = vunpack.c.l.s4 1934713408
    %v3995 = vunpack.c.0.s8 %v3994
    %v3996 = vperm.slane %v3990, %v3995
    %v3998 = vunpack.c.l.s4 1934713408
    %v3999 = vunpack.c.0.s8 %v3998
    %v4000 = vperm.slane %v3992, %v3999
    %v4001 = vrot.slane %v3984, 4
    %v4002 = vsel %vm887, 0.0, %v4001
    %v4003 = vrot.slane %v3988, 4
    %v4004 = vsel %vm887, 0.0, %v4003
    %v4005 = vrot.slane %v3996, 4
    %v4006 = vsel %vm887, 0.0, %v4005
    %v4007 = vrot.slane %v4000, 4
    %v4008 = vsel %vm887, 0.0, %v4007
    %v4009 = vrot.slane %v3427, 4
    %v4010 = vsel %vm887, %v4009, %v3395
    %v4011 = vrot.slane %v3395, 4
    %v4012 = vsel %vm887, %v3427, %v4011
    %v4014 = vunpack.c.l.s4 1983009808
    %v4015 = vunpack.c.0.s8 %v4014
    %v4016 = vperm.slane %v4010, %v4015
    %v4018 = vunpack.c.l.s4 1983009808
    %v4019 = vunpack.c.0.s8 %v4018
    %v4020 = vperm.slane %v4012, %v4019
    %v4021 = vrot.slane %v3443, 4
    %v4022 = vsel %vm887, %v4021, %v3411
    %v4023 = vrot.slane %v3411, 4
    %v4024 = vsel %vm887, %v3443, %v4023
    %v4026 = vunpack.c.l.s4 1983009808
    %v4027 = vunpack.c.0.s8 %v4026
    %v4028 = vperm.slane %v4022, %v4027
    %v4030 = vunpack.c.l.s4 1983009808
    %v4031 = vunpack.c.0.s8 %v4030
    %v4032 = vperm.slane %v4024, %v4031
    %v4033 = vrot.slane %v4028, 4
    %v4034 = vsel %vm887, %v4033, %v4016
    %v4035 = vrot.slane %v4016, 4
    %v4036 = vsel %vm887, %v4028, %v4035
    %v4038 = vunpack.c.l.s4 1934713408
    %v4039 = vunpack.c.0.s8 %v4038
    %v4040 = vperm.slane %v4034, %v4039
    %v4042 = vunpack.c.l.s4 1934713408
    %v4043 = vunpack.c.0.s8 %v4042
    %v4044 = vperm.slane %v4036, %v4043
    %v4045 = vrot.slane %v4032, 4
    %v4046 = vsel %vm887, %v4045, %v4020
    %v4047 = vrot.slane %v4020, 4
    %v4048 = vsel %vm887, %v4032, %v4047
    %v4050 = vunpack.c.l.s4 1934713408
    %v4051 = vunpack.c.0.s8 %v4050
    %v4052 = vperm.slane %v4046, %v4051
    %v4054 = vunpack.c.l.s4 1934713408
    %v4055 = vunpack.c.0.s8 %v4054
    %v4056 = vperm.slane %v4048, %v4055
    %v4057 = vrot.slane %v4040, 4
    %v4058 = vsel %vm887, 0.0, %v4057
    %v4059 = vrot.slane %v4044, 4
    %v4060 = vsel %vm887, 0.0, %v4059
    %v4061 = vrot.slane %v4052, 4
    %v4062 = vsel %vm887, 0.0, %v4061
    %v4063 = vrot.slane %v4056, 4
    %v4064 = vsel %vm887, 0.0, %v4063
    %v4065 = vrot.slane %v3428, 4
    %v4066 = vsel %vm887, %v4065, %v3396
    %v4067 = vrot.slane %v3396, 4
    %v4068 = vsel %vm887, %v3428, %v4067
    %v4070 = vunpack.c.l.s4 1983009808
    %v4071 = vunpack.c.0.s8 %v4070
    %v4072 = vperm.slane %v4066, %v4071
    %v4074 = vunpack.c.l.s4 1983009808
    %v4075 = vunpack.c.0.s8 %v4074
    %v4076 = vperm.slane %v4068, %v4075
    %v4077 = vrot.slane %v3444, 4
    %v4078 = vsel %vm887, %v4077, %v3412
    %v4079 = vrot.slane %v3412, 4
    %v4080 = vsel %vm887, %v3444, %v4079
    %v4082 = vunpack.c.l.s4 1983009808
    %v4083 = vunpack.c.0.s8 %v4082
    %v4084 = vperm.slane %v4078, %v4083
    %v4086 = vunpack.c.l.s4 1983009808
    %v4087 = vunpack.c.0.s8 %v4086
    %v4088 = vperm.slane %v4080, %v4087
    %v4089 = vrot.slane %v4084, 4
    %v4090 = vsel %vm887, %v4089, %v4072
    %v4091 = vrot.slane %v4072, 4
    %v4092 = vsel %vm887, %v4084, %v4091
    %v4094 = vunpack.c.l.s4 1934713408
    %v4095 = vunpack.c.0.s8 %v4094
    %v4096 = vperm.slane %v4090, %v4095
    %v4098 = vunpack.c.l.s4 1934713408
    %v4099 = vunpack.c.0.s8 %v4098
    %v4100 = vperm.slane %v4092, %v4099
    %v4101 = vrot.slane %v4088, 4
    %v4102 = vsel %vm887, %v4101, %v4076
    %v4103 = vrot.slane %v4076, 4
    %v4104 = vsel %vm887, %v4088, %v4103
    %v4106 = vunpack.c.l.s4 1934713408
    %v4107 = vunpack.c.0.s8 %v4106
    %v4108 = vperm.slane %v4102, %v4107
    %v4110 = vunpack.c.l.s4 1934713408
    %v4111 = vunpack.c.0.s8 %v4110
    %v4112 = vperm.slane %v4104, %v4111
    %v4113 = vrot.slane %v4096, 4
    %v4114 = vsel %vm887, 0.0, %v4113
    %v4115 = vrot.slane %v4100, 4
    %v4116 = vsel %vm887, 0.0, %v4115
    %v4117 = vrot.slane %v4108, 4
    %v4118 = vsel %vm887, 0.0, %v4117
    %v4119 = vrot.slane %v4112, 4
    %v4120 = vsel %vm887, 0.0, %v4119
    %v4121 = vrot.slane %v3429, 4
    %v4122 = vsel %vm887, %v4121, %v3397
    %v4123 = vrot.slane %v3397, 4
    %v4124 = vsel %vm887, %v3429, %v4123
    %v4126 = vunpack.c.l.s4 1983009808
    %v4127 = vunpack.c.0.s8 %v4126
    %v4128 = vperm.slane %v4122, %v4127
    %v4130 = vunpack.c.l.s4 1983009808
    %v4131 = vunpack.c.0.s8 %v4130
    %v4132 = vperm.slane %v4124, %v4131
    %v4133 = vrot.slane %v3445, 4
    %v4134 = vsel %vm887, %v4133, %v3413
    %v4135 = vrot.slane %v3413, 4
    %v4136 = vsel %vm887, %v3445, %v4135
    %v4138 = vunpack.c.l.s4 1983009808
    %v4139 = vunpack.c.0.s8 %v4138
    %v4140 = vperm.slane %v4134, %v4139
    %v4142 = vunpack.c.l.s4 1983009808
    %v4143 = vunpack.c.0.s8 %v4142
    %v4144 = vperm.slane %v4136, %v4143
    %v4145 = vrot.slane %v4140, 4
    %v4146 = vsel %vm887, %v4145, %v4128
    %v4147 = vrot.slane %v4128, 4
    %v4148 = vsel %vm887, %v4140, %v4147
    %v4150 = vunpack.c.l.s4 1934713408
    %v4151 = vunpack.c.0.s8 %v4150
    %v4152 = vperm.slane %v4146, %v4151
    %v4154 = vunpack.c.l.s4 1934713408
    %v4155 = vunpack.c.0.s8 %v4154
    %v4156 = vperm.slane %v4148, %v4155
    %v4157 = vrot.slane %v4144, 4
    %v4158 = vsel %vm887, %v4157, %v4132
    %v4159 = vrot.slane %v4132, 4
    %v4160 = vsel %vm887, %v4144, %v4159
    %v4162 = vunpack.c.l.s4 1934713408
    %v4163 = vunpack.c.0.s8 %v4162
    %v4164 = vperm.slane %v4158, %v4163
    %v4166 = vunpack.c.l.s4 1934713408
    %v4167 = vunpack.c.0.s8 %v4166
    %v4168 = vperm.slane %v4160, %v4167
    %v4169 = vrot.slane %v4152, 4
    %v4170 = vsel %vm887, 0.0, %v4169
    %v4171 = vrot.slane %v4156, 4
    %v4172 = vsel %vm887, 0.0, %v4171
    %v4173 = vrot.slane %v4164, 4
    %v4174 = vsel %vm887, 0.0, %v4173
    %v4175 = vrot.slane %v4168, 4
    %v4176 = vsel %vm887, 0.0, %v4175
    %v4177 = vrot.slane %v3430, 4
    %v4178 = vsel %vm887, %v4177, %v3398
    %v4179 = vrot.slane %v3398, 4
    %v4180 = vsel %vm887, %v3430, %v4179
    %v4182 = vunpack.c.l.s4 1983009808
    %v4183 = vunpack.c.0.s8 %v4182
    %v4184 = vperm.slane %v4178, %v4183
    %v4186 = vunpack.c.l.s4 1983009808
    %v4187 = vunpack.c.0.s8 %v4186
    %v4188 = vperm.slane %v4180, %v4187
    %v4189 = vrot.slane %v3446, 4
    %v4190 = vsel %vm887, %v4189, %v3414
    %v4191 = vrot.slane %v3414, 4
    %v4192 = vsel %vm887, %v3446, %v4191
    %v4194 = vunpack.c.l.s4 1983009808
    %v4195 = vunpack.c.0.s8 %v4194
    %v4196 = vperm.slane %v4190, %v4195
    %v4198 = vunpack.c.l.s4 1983009808
    %v4199 = vunpack.c.0.s8 %v4198
    %v4200 = vperm.slane %v4192, %v4199
    %v4201 = vrot.slane %v4196, 4
    %v4202 = vsel %vm887, %v4201, %v4184
    %v4203 = vrot.slane %v4184, 4
    %v4204 = vsel %vm887, %v4196, %v4203
    %v4206 = vunpack.c.l.s4 1934713408
    %v4207 = vunpack.c.0.s8 %v4206
    %v4208 = vperm.slane %v4202, %v4207
    %v4210 = vunpack.c.l.s4 1934713408
    %v4211 = vunpack.c.0.s8 %v4210
    %v4212 = vperm.slane %v4204, %v4211
    %v4213 = vrot.slane %v4200, 4
    %v4214 = vsel %vm887, %v4213, %v4188
    %v4215 = vrot.slane %v4188, 4
    %v4216 = vsel %vm887, %v4200, %v4215
    %v4218 = vunpack.c.l.s4 1934713408
    %v4219 = vunpack.c.0.s8 %v4218
    %v4220 = vperm.slane %v4214, %v4219
    %v4222 = vunpack.c.l.s4 1934713408
    %v4223 = vunpack.c.0.s8 %v4222
    %v4224 = vperm.slane %v4216, %v4223
    %v4225 = vrot.slane %v4208, 4
    %v4226 = vsel %vm887, 0.0, %v4225
    %v4227 = vrot.slane %v4212, 4
    %v4228 = vsel %vm887, 0.0, %v4227
    %v4229 = vrot.slane %v4220, 4
    %v4230 = vsel %vm887, 0.0, %v4229
    %v4231 = vrot.slane %v4224, 4
    %v4232 = vsel %vm887, 0.0, %v4231
    %v4233 = vrot.slane %v3431, 4
    %v4234 = vsel %vm887, %v4233, %v3399
    %v4235 = vrot.slane %v3399, 4
    %v4236 = vsel %vm887, %v3431, %v4235
    %v4238 = vunpack.c.l.s4 1983009808
    %v4239 = vunpack.c.0.s8 %v4238
    %v4240 = vperm.slane %v4234, %v4239
    %v4242 = vunpack.c.l.s4 1983009808
    %v4243 = vunpack.c.0.s8 %v4242
    %v4244 = vperm.slane %v4236, %v4243
    %v4245 = vrot.slane %v3447, 4
    %v4246 = vsel %vm887, %v4245, %v3415
    %v4247 = vrot.slane %v3415, 4
    %v4248 = vsel %vm887, %v3447, %v4247
    %v4250 = vunpack.c.l.s4 1983009808
    %v4251 = vunpack.c.0.s8 %v4250
    %v4252 = vperm.slane %v4246, %v4251
    %v4254 = vunpack.c.l.s4 1983009808
    %v4255 = vunpack.c.0.s8 %v4254
    %v4256 = vperm.slane %v4248, %v4255
    %v4257 = vrot.slane %v4252, 4
    %v4258 = vsel %vm887, %v4257, %v4240
    %v4259 = vrot.slane %v4240, 4
    %v4260 = vsel %vm887, %v4252, %v4259
    %v4262 = vunpack.c.l.s4 1934713408
    %v4263 = vunpack.c.0.s8 %v4262
    %v4264 = vperm.slane %v4258, %v4263
    %v4266 = vunpack.c.l.s4 1934713408
    %v4267 = vunpack.c.0.s8 %v4266
    %v4268 = vperm.slane %v4260, %v4267
    %v4269 = vrot.slane %v4256, 4
    %v4270 = vsel %vm887, %v4269, %v4244
    %v4271 = vrot.slane %v4244, 4
    %v4272 = vsel %vm887, %v4256, %v4271
    %v4274 = vunpack.c.l.s4 1934713408
    %v4275 = vunpack.c.0.s8 %v4274
    %v4276 = vperm.slane %v4270, %v4275
    %v4278 = vunpack.c.l.s4 1934713408
    %v4279 = vunpack.c.0.s8 %v4278
    %v4280 = vperm.slane %v4272, %v4279
    %v4281 = vrot.slane %v4264, 4
    %v4282 = vsel %vm887, 0.0, %v4281
    %v4283 = vrot.slane %v4268, 4
    %v4284 = vsel %vm887, 0.0, %v4283
    %v4285 = vrot.slane %v4276, 4
    %v4286 = vsel %vm887, 0.0, %v4285
    %v4287 = vrot.slane %v4280, 4
    %v4288 = vsel %vm887, 0.0, %v4287
    %v4289 = vrot.slane %v3432, 4
    %v4290 = vsel %vm887, %v4289, %v3400
    %v4291 = vrot.slane %v3400, 4
    %v4292 = vsel %vm887, %v3432, %v4291
    %v4294 = vunpack.c.l.s4 1983009808
    %v4295 = vunpack.c.0.s8 %v4294
    %v4296 = vperm.slane %v4290, %v4295
    %v4298 = vunpack.c.l.s4 1983009808
    %v4299 = vunpack.c.0.s8 %v4298
    %v4300 = vperm.slane %v4292, %v4299
    %v4301 = vrot.slane %v3448, 4
    %v4302 = vsel %vm887, %v4301, %v3416
    %v4303 = vrot.slane %v3416, 4
    %v4304 = vsel %vm887, %v3448, %v4303
    %v4306 = vunpack.c.l.s4 1983009808
    %v4307 = vunpack.c.0.s8 %v4306
    %v4308 = vperm.slane %v4302, %v4307
    %v4310 = vunpack.c.l.s4 1983009808
    %v4311 = vunpack.c.0.s8 %v4310
    %v4312 = vperm.slane %v4304, %v4311
    %v4313 = vrot.slane %v4308, 4
    %v4314 = vsel %vm887, %v4313, %v4296
    %v4315 = vrot.slane %v4296, 4
    %v4316 = vsel %vm887, %v4308, %v4315
    %v4318 = vunpack.c.l.s4 1934713408
    %v4319 = vunpack.c.0.s8 %v4318
    %v4320 = vperm.slane %v4314, %v4319
    %v4322 = vunpack.c.l.s4 1934713408
    %v4323 = vunpack.c.0.s8 %v4322
    %v4324 = vperm.slane %v4316, %v4323
    %v4325 = vrot.slane %v4312, 4
    %v4326 = vsel %vm887, %v4325, %v4300
    %v4327 = vrot.slane %v4300, 4
    %v4328 = vsel %vm887, %v4312, %v4327
    %v4330 = vunpack.c.l.s4 1934713408
    %v4331 = vunpack.c.0.s8 %v4330
    %v4332 = vperm.slane %v4326, %v4331
    %v4334 = vunpack.c.l.s4 1934713408
    %v4335 = vunpack.c.0.s8 %v4334
    %v4336 = vperm.slane %v4328, %v4335
    %v4337 = vrot.slane %v4320, 4
    %v4338 = vsel %vm887, 0.0, %v4337
    %v4339 = vrot.slane %v4324, 4
    %v4340 = vsel %vm887, 0.0, %v4339
    %v4341 = vrot.slane %v4332, 4
    %v4342 = vsel %vm887, 0.0, %v4341
    %v4343 = vrot.slane %v4336, 4
    %v4344 = vsel %vm887, 0.0, %v4343
    %4346 = vrot.lane.b32.xlu0 %v3498, 2
    %v4347 = vpop.permute.xlu0 %4346
    %4350 = vrot.lane.b32.xlu0 %v3484, 4
    %v4351 = vpop.permute.xlu0 %4350
    %4354 = vrot.lane.b32.xlu0 %v3500, 6
    %v4355 = vpop.permute.xlu0 %4354
    %4358 = vrot.lane.b32.xlu0 %v3492, 8
    %v4359 = vpop.permute.xlu0 %4358
    %4362 = vrot.lane.b32.xlu0 %v3502, 10
    %v4363 = vpop.permute.xlu0 %4362
    %4366 = vrot.lane.b32.xlu0 %v3496, 12
    %v4367 = vpop.permute.xlu0 %4366
    %4370 = vrot.lane.b32.xlu0 %v3504, 14
    %v4371 = vpop.permute.xlu0 %4370
    %4374 = vrot.lane.b32.xlu0 %v3536, 16
    %v4375 = vpop.permute.xlu0 %4374
    %4378 = vrot.lane.b32.xlu0 %v3554, 18
    %v4379 = vpop.permute.xlu0 %4378
    %4382 = vrot.lane.b32.xlu0 %v3540, 20
    %v4383 = vpop.permute.xlu0 %4382
    %4386 = vrot.lane.b32.xlu0 %v3556, 22
    %v4387 = vpop.permute.xlu0 %4386
    %4390 = vrot.lane.b32.xlu0 %v3548, 24
    %v4391 = vpop.permute.xlu0 %4390
    %4394 = vrot.lane.b32.xlu0 %v3558, 26
    %v4395 = vpop.permute.xlu0 %4394
    %4398 = vrot.lane.b32.xlu0 %v3552, 28
    %v4399 = vpop.permute.xlu0 %4398
    %4402 = vrot.lane.b32.xlu0 %v3560, 30
    %v4403 = vpop.permute.xlu0 %4402
    %4406 = vrot.lane.b32.xlu0 %v3592, 32
    %v4407 = vpop.permute.xlu0 %4406
    %4410 = vrot.lane.b32.xlu0 %v3610, 34
    %v4411 = vpop.permute.xlu0 %4410
    %4414 = vrot.lane.b32.xlu0 %v3596, 36
    %v4415 = vpop.permute.xlu0 %4414
    %4418 = vrot.lane.b32.xlu0 %v3612, 38
    %v4419 = vpop.permute.xlu0 %4418
    %4422 = vrot.lane.b32.xlu0 %v3604, 40
    %v4423 = vpop.permute.xlu0 %4422
    %4426 = vrot.lane.b32.xlu0 %v3614, 42
    %v4427 = vpop.permute.xlu0 %4426
    %4430 = vrot.lane.b32.xlu0 %v3608, 44
    %v4431 = vpop.permute.xlu0 %4430
    %4434 = vrot.lane.b32.xlu0 %v3616, 46
    %v4435 = vpop.permute.xlu0 %4434
    %4438 = vrot.lane.b32.xlu0 %v3648, 48
    %v4439 = vpop.permute.xlu0 %4438
    %4442 = vrot.lane.b32.xlu0 %v3666, 50
    %v4443 = vpop.permute.xlu0 %4442
    %4446 = vrot.lane.b32.xlu0 %v3652, 52
    %v4447 = vpop.permute.xlu0 %4446
    %4450 = vrot.lane.b32.xlu0 %v3668, 54
    %v4451 = vpop.permute.xlu0 %4450
    %4454 = vrot.lane.b32.xlu0 %v3660, 56
    %v4455 = vpop.permute.xlu0 %4454
    %4458 = vrot.lane.b32.xlu0 %v3670, 58
    %v4459 = vpop.permute.xlu0 %4458
    %4462 = vrot.lane.b32.xlu0 %v3664, 60
    %v4463 = vpop.permute.xlu0 %4462
    %4466 = vrot.lane.b32.xlu0 %v3672, 62
    %v4467 = vpop.permute.xlu0 %4466
    %4470 = vrot.lane.b32.xlu0 %v3704, 64
    %v4471 = vpop.permute.xlu0 %4470
    %4474 = vrot.lane.b32.xlu0 %v3722, 66
    %v4475 = vpop.permute.xlu0 %4474
    %4478 = vrot.lane.b32.xlu0 %v3708, 68
    %v4479 = vpop.permute.xlu0 %4478
    %4482 = vrot.lane.b32.xlu0 %v3724, 70
    %v4483 = vpop.permute.xlu0 %4482
    %4486 = vrot.lane.b32.xlu0 %v3716, 72
    %v4487 = vpop.permute.xlu0 %4486
    %4490 = vrot.lane.b32.xlu0 %v3726, 74
    %v4491 = vpop.permute.xlu0 %4490
    %4494 = vrot.lane.b32.xlu0 %v3720, 76
    %v4495 = vpop.permute.xlu0 %4494
    %4498 = vrot.lane.b32.xlu0 %v3728, 78
    %v4499 = vpop.permute.xlu0 %4498
    %4502 = vrot.lane.b32.xlu0 %v3760, 80
    %v4503 = vpop.permute.xlu0 %4502
    %4506 = vrot.lane.b32.xlu0 %v3778, 82
    %v4507 = vpop.permute.xlu0 %4506
    %4510 = vrot.lane.b32.xlu0 %v3764, 84
    %v4511 = vpop.permute.xlu0 %4510
    %4514 = vrot.lane.b32.xlu0 %v3780, 86
    %v4515 = vpop.permute.xlu0 %4514
    %4518 = vrot.lane.b32.xlu0 %v3772, 88
    %v4519 = vpop.permute.xlu0 %4518
    %4522 = vrot.lane.b32.xlu0 %v3782, 90
    %v4523 = vpop.permute.xlu0 %4522
    %4526 = vrot.lane.b32.xlu0 %v3776, 92
    %v4527 = vpop.permute.xlu0 %4526
    %4530 = vrot.lane.b32.xlu0 %v3784, 94
    %v4531 = vpop.permute.xlu0 %4530
    %4534 = vrot.lane.b32.xlu0 %v3816, 96
    %v4535 = vpop.permute.xlu0 %4534
    %4538 = vrot.lane.b32.xlu0 %v3834, 98
    %v4539 = vpop.permute.xlu0 %4538
    %4542 = vrot.lane.b32.xlu0 %v3820, 100
    %v4543 = vpop.permute.xlu0 %4542
    %4546 = vrot.lane.b32.xlu0 %v3836, 102
    %v4547 = vpop.permute.xlu0 %4546
    %4550 = vrot.lane.b32.xlu0 %v3828, 104
    %v4551 = vpop.permute.xlu0 %4550
    %4554 = vrot.lane.b32.xlu0 %v3838, 106
    %v4555 = vpop.permute.xlu0 %4554
    %4558 = vrot.lane.b32.xlu0 %v3832, 108
    %v4559 = vpop.permute.xlu0 %4558
    %4562 = vrot.lane.b32.xlu0 %v3840, 110
    %v4563 = vpop.permute.xlu0 %4562
    %4566 = vrot.lane.b32.xlu0 %v3872, 112
    %v4567 = vpop.permute.xlu0 %4566
    %4570 = vrot.lane.b32.xlu0 %v3890, 114
    %v4571 = vpop.permute.xlu0 %4570
    %4574 = vrot.lane.b32.xlu0 %v3876, 116
    %v4575 = vpop.permute.xlu0 %4574
    %4578 = vrot.lane.b32.xlu0 %v3892, 118
    %v4579 = vpop.permute.xlu0 %4578
    %4582 = vrot.lane.b32.xlu0 %v3884, 120
    %v4583 = vpop.permute.xlu0 %4582
    %4586 = vrot.lane.b32.xlu0 %v3894, 122
    %v4587 = vpop.permute.xlu0 %4586
    %4590 = vrot.lane.b32.xlu0 %v3888, 124
    %v4591 = vpop.permute.xlu0 %4590
    %4594 = vrot.lane.b32.xlu0 %v3896, 126
    %v4595 = vpop.permute.xlu0 %4594
    %4598 = vrot.lane.b32.xlu0 %v3946, 2
    %v4599 = vpop.permute.xlu0 %4598
    %4602 = vrot.lane.b32.xlu0 %v3932, 4
    %v4603 = vpop.permute.xlu0 %4602
    %4606 = vrot.lane.b32.xlu0 %v3948, 6
    %v4607 = vpop.permute.xlu0 %4606
    %4610 = vrot.lane.b32.xlu0 %v3940, 8
    %v4611 = vpop.permute.xlu0 %4610
    %4614 = vrot.lane.b32.xlu0 %v3950, 10
    %v4615 = vpop.permute.xlu0 %4614
    %4618 = vrot.lane.b32.xlu0 %v3944, 12
    %v4619 = vpop.permute.xlu0 %4618
    %4622 = vrot.lane.b32.xlu0 %v3952, 14
    %v4623 = vpop.permute.xlu0 %4622
    %4626 = vrot.lane.b32.xlu0 %v3984, 16
    %v4627 = vpop.permute.xlu0 %4626
    %4630 = vrot.lane.b32.xlu0 %v4002, 18
    %v4631 = vpop.permute.xlu0 %4630
    %4634 = vrot.lane.b32.xlu0 %v3988, 20
    %v4635 = vpop.permute.xlu0 %4634
    %4638 = vrot.lane.b32.xlu0 %v4004, 22
    %v4639 = vpop.permute.xlu0 %4638
    %4642 = vrot.lane.b32.xlu0 %v3996, 24
    %v4643 = vpop.permute.xlu0 %4642
    %4646 = vrot.lane.b32.xlu0 %v4006, 26
    %v4647 = vpop.permute.xlu0 %4646
    %4650 = vrot.lane.b32.xlu0 %v4000, 28
    %v4651 = vpop.permute.xlu0 %4650
    %4654 = vrot.lane.b32.xlu0 %v4008, 30
    %v4655 = vpop.permute.xlu0 %4654
    %4658 = vrot.lane.b32.xlu0 %v4040, 32
    %v4659 = vpop.permute.xlu0 %4658
    %4662 = vrot.lane.b32.xlu0 %v4058, 34
    %v4663 = vpop.permute.xlu0 %4662
    %4666 = vrot.lane.b32.xlu0 %v4044, 36
    %v4667 = vpop.permute.xlu0 %4666
    %4670 = vrot.lane.b32.xlu0 %v4060, 38
    %v4671 = vpop.permute.xlu0 %4670
    %4674 = vrot.lane.b32.xlu0 %v4052, 40
    %v4675 = vpop.permute.xlu0 %4674
    %4678 = vrot.lane.b32.xlu0 %v4062, 42
    %v4679 = vpop.permute.xlu0 %4678
    %4682 = vrot.lane.b32.xlu0 %v4056, 44
    %v4683 = vpop.permute.xlu0 %4682
    %4686 = vrot.lane.b32.xlu0 %v4064, 46
    %v4687 = vpop.permute.xlu0 %4686
    %4690 = vrot.lane.b32.xlu0 %v4096, 48
    %v4691 = vpop.permute.xlu0 %4690
    %4694 = vrot.lane.b32.xlu0 %v4114, 50
    %v4695 = vpop.permute.xlu0 %4694
    %4698 = vrot.lane.b32.xlu0 %v4100, 52
    %v4699 = vpop.permute.xlu0 %4698
    %4702 = vrot.lane.b32.xlu0 %v4116, 54
    %v4703 = vpop.permute.xlu0 %4702
    %4706 = vrot.lane.b32.xlu0 %v4108, 56
    %v4707 = vpop.permute.xlu0 %4706
    %4710 = vrot.lane.b32.xlu0 %v4118, 58
    %v4711 = vpop.permute.xlu0 %4710
    %4714 = vrot.lane.b32.xlu0 %v4112, 60
    %v4715 = vpop.permute.xlu0 %4714
    %4718 = vrot.lane.b32.xlu0 %v4120, 62
    %v4719 = vpop.permute.xlu0 %4718
    %4722 = vrot.lane.b32.xlu0 %v4152, 64
    %v4723 = vpop.permute.xlu0 %4722
    %4726 = vrot.lane.b32.xlu0 %v4170, 66
    %v4727 = vpop.permute.xlu0 %4726
    %4730 = vrot.lane.b32.xlu0 %v4156, 68
    %v4731 = vpop.permute.xlu0 %4730
    %4734 = vrot.lane.b32.xlu0 %v4172, 70
    %v4735 = vpop.permute.xlu0 %4734
    %4738 = vrot.lane.b32.xlu0 %v4164, 72
    %v4739 = vpop.permute.xlu0 %4738
    %4742 = vrot.lane.b32.xlu0 %v4174, 74
    %v4743 = vpop.permute.xlu0 %4742
    %4746 = vrot.lane.b32.xlu0 %v4168, 76
    %v4747 = vpop.permute.xlu0 %4746
    %4750 = vrot.lane.b32.xlu0 %v4176, 78
    %v4751 = vpop.permute.xlu0 %4750
    %4754 = vrot.lane.b32.xlu0 %v4208, 80
    %v4755 = vpop.permute.xlu0 %4754
    %4758 = vrot.lane.b32.xlu0 %v4226, 82
    %v4759 = vpop.permute.xlu0 %4758
    %4762 = vrot.lane.b32.xlu0 %v4212, 84
    %v4763 = vpop.permute.xlu0 %4762
    %4766 = vrot.lane.b32.xlu0 %v4228, 86
    %v4767 = vpop.permute.xlu0 %4766
    %4770 = vrot.lane.b32.xlu0 %v4220, 88
    %v4771 = vpop.permute.xlu0 %4770
    %4774 = vrot.lane.b32.xlu0 %v4230, 90
    %v4775 = vpop.permute.xlu0 %4774
    %4778 = vrot.lane.b32.xlu0 %v4224, 92
    %v4779 = vpop.permute.xlu0 %4778
    %4782 = vrot.lane.b32.xlu0 %v4232, 94
    %v4783 = vpop.permute.xlu0 %4782
    %4786 = vrot.lane.b32.xlu0 %v4264, 96
    %v4787 = vpop.permute.xlu0 %4786
    %4790 = vrot.lane.b32.xlu0 %v4282, 98
    %v4791 = vpop.permute.xlu0 %4790
    %4794 = vrot.lane.b32.xlu0 %v4268, 100
    %v4795 = vpop.permute.xlu0 %4794
    %4798 = vrot.lane.b32.xlu0 %v4284, 102
    %v4799 = vpop.permute.xlu0 %4798
    %4802 = vrot.lane.b32.xlu0 %v4276, 104
    %v4803 = vpop.permute.xlu0 %4802
    %4806 = vrot.lane.b32.xlu0 %v4286, 106
    %v4807 = vpop.permute.xlu0 %4806
    %4810 = vrot.lane.b32.xlu0 %v4280, 108
    %v4811 = vpop.permute.xlu0 %4810
    %4814 = vrot.lane.b32.xlu0 %v4288, 110
    %v4815 = vpop.permute.xlu0 %4814
    %4818 = vrot.lane.b32.xlu0 %v4320, 112
    %v4819 = vpop.permute.xlu0 %4818
    %4822 = vrot.lane.b32.xlu0 %v4338, 114
    %v4823 = vpop.permute.xlu0 %4822
    %4826 = vrot.lane.b32.xlu0 %v4324, 116
    %v4827 = vpop.permute.xlu0 %4826
    %4830 = vrot.lane.b32.xlu0 %v4340, 118
    %v4831 = vpop.permute.xlu0 %4830
    %4834 = vrot.lane.b32.xlu0 %v4332, 120
    %v4835 = vpop.permute.xlu0 %4834
    %4838 = vrot.lane.b32.xlu0 %v4342, 122
    %v4839 = vpop.permute.xlu0 %4838
    %4842 = vrot.lane.b32.xlu0 %v4336, 124
    %v4843 = vpop.permute.xlu0 %4842
    %4846 = vrot.lane.b32.xlu0 %v4344, 126
    %v4847 = vpop.permute.xlu0 %4846
    %v4849 = vsel %vm2287, %v3480, %v4347
    %v4850 = vsel %vm2289, %v4849, %v4351
    %v4851 = vsel %vm2291, %v4850, %v4355
    %v4852 = vsel %vm15, %v4851, %v4359
    %v4853 = vsel %vm2294, %v4852, %v4363
    %v4854 = vsel %vm2296, %v4853, %v4367
    %v4855 = vsel %vm2298, %v4854, %v4371
    %v4856 = vsel %vm2300, %v4855, %v4375
    %v4857 = vsel %vm2302, %v4856, %v4379
    %v4858 = vsel %vm2304, %v4857, %v4383
    %v4859 = vsel %vm2306, %v4858, %v4387
    %v4860 = vsel %vm2308, %v4859, %v4391
    %v4861 = vsel %vm2310, %v4860, %v4395
    %v4862 = vsel %vm2312, %v4861, %v4399
    %v4863 = vsel %vm2314, %v4862, %v4403
    %v4864 = vsel %vm2316, %v4863, %v4407
    %v4865 = vsel %vm2318, %v4864, %v4411
    %v4866 = vsel %vm2320, %v4865, %v4415
    %v4867 = vsel %vm2322, %v4866, %v4419
    %v4868 = vsel %vm2324, %v4867, %v4423
    %v4869 = vsel %vm2326, %v4868, %v4427
    %v4870 = vsel %vm2328, %v4869, %v4431
    %v4871 = vsel %vm2330, %v4870, %v4435
    %v4872 = vsel %vm2332, %v4871, %v4439
    %v4873 = vsel %vm2334, %v4872, %v4443
    %v4874 = vsel %vm2336, %v4873, %v4447
    %v4875 = vsel %vm2338, %v4874, %v4451
    %v4876 = vsel %vm2340, %v4875, %v4455
    %v4877 = vsel %vm2342, %v4876, %v4459
    %v4878 = vsel %vm2344, %v4877, %v4463
    %v4879 = vsel %vm2346, %v4878, %v4467
    %v4880 = vsel %vm2348, %v4879, %v4471
    %v4881 = vsel %vm2350, %v4880, %v4475
    %v4882 = vsel %vm2352, %v4881, %v4479
    %v4883 = vsel %vm2354, %v4882, %v4483
    %v4884 = vsel %vm2356, %v4883, %v4487
    %v4885 = vsel %vm2358, %v4884, %v4491
    %v4886 = vsel %vm2360, %v4885, %v4495
    %v4887 = vsel %vm2362, %v4886, %v4499
    %v4888 = vsel %vm2364, %v4887, %v4503
    %v4889 = vsel %vm2366, %v4888, %v4507
    %v4890 = vsel %vm2368, %v4889, %v4511
    %v4891 = vsel %vm2370, %v4890, %v4515
    %v4892 = vsel %vm2372, %v4891, %v4519
    %v4893 = vsel %vm2374, %v4892, %v4523
    %v4894 = vsel %vm2376, %v4893, %v4527
    %v4895 = vsel %vm2378, %v4894, %v4531
    %v4896 = vsel %vm2380, %v4895, %v4535
    %v4897 = vsel %vm2382, %v4896, %v4539
    %v4898 = vsel %vm2384, %v4897, %v4543
    %v4899 = vsel %vm2386, %v4898, %v4547
    %v4900 = vsel %vm2388, %v4899, %v4551
    %v4901 = vsel %vm2390, %v4900, %v4555
    %v4902 = vsel %vm2392, %v4901, %v4559
    %v4903 = vsel %vm2394, %v4902, %v4563
    %v4904 = vsel %vm2396, %v4903, %v4567
    %v4905 = vsel %vm2398, %v4904, %v4571
    %v4906 = vsel %vm2400, %v4905, %v4575
    %v4907 = vsel %vm2402, %v4906, %v4579
    %v4908 = vsel %vm2404, %v4907, %v4583
    %v4909 = vsel %vm2406, %v4908, %v4587
    %v4910 = vsel %vm2408, %v4909, %v4591
    %v4911 = vsel %vm2410, %v4910, %v4595
    %v4912 = vsel %vm2287, %v3928, %v4599
    %v4913 = vsel %vm2289, %v4912, %v4603
    %v4914 = vsel %vm2291, %v4913, %v4607
    %v4915 = vsel %vm15, %v4914, %v4611
    %v4916 = vsel %vm2294, %v4915, %v4615
    %v4917 = vsel %vm2296, %v4916, %v4619
    %v4918 = vsel %vm2298, %v4917, %v4623
    %v4919 = vsel %vm2300, %v4918, %v4627
    %v4920 = vsel %vm2302, %v4919, %v4631
    %v4921 = vsel %vm2304, %v4920, %v4635
    %v4922 = vsel %vm2306, %v4921, %v4639
    %v4923 = vsel %vm2308, %v4922, %v4643
    %v4924 = vsel %vm2310, %v4923, %v4647
    %v4925 = vsel %vm2312, %v4924, %v4651
    %v4926 = vsel %vm2314, %v4925, %v4655
    %v4927 = vsel %vm2316, %v4926, %v4659
    %v4928 = vsel %vm2318, %v4927, %v4663
    %v4929 = vsel %vm2320, %v4928, %v4667
    %v4930 = vsel %vm2322, %v4929, %v4671
    %v4931 = vsel %vm2324, %v4930, %v4675
    %v4932 = vsel %vm2326, %v4931, %v4679
    %v4933 = vsel %vm2328, %v4932, %v4683
    %v4934 = vsel %vm2330, %v4933, %v4687
    %v4935 = vsel %vm2332, %v4934, %v4691
    %v4936 = vsel %vm2334, %v4935, %v4695
    %v4937 = vsel %vm2336, %v4936, %v4699
    %v4938 = vsel %vm2338, %v4937, %v4703
    %v4939 = vsel %vm2340, %v4938, %v4707
    %v4940 = vsel %vm2342, %v4939, %v4711
    %v4941 = vsel %vm2344, %v4940, %v4715
    %v4942 = vsel %vm2346, %v4941, %v4719
    %v4943 = vsel %vm2348, %v4942, %v4723
    %v4944 = vsel %vm2350, %v4943, %v4727
    %v4945 = vsel %vm2352, %v4944, %v4731
    %v4946 = vsel %vm2354, %v4945, %v4735
    %v4947 = vsel %vm2356, %v4946, %v4739
    %v4948 = vsel %vm2358, %v4947, %v4743
    %v4949 = vsel %vm2360, %v4948, %v4747
    %v4950 = vsel %vm2362, %v4949, %v4751
    %v4951 = vsel %vm2364, %v4950, %v4755
    %v4952 = vsel %vm2366, %v4951, %v4759
    %v4953 = vsel %vm2368, %v4952, %v4763
    %v4954 = vsel %vm2370, %v4953, %v4767
    %v4955 = vsel %vm2372, %v4954, %v4771
    %v4956 = vsel %vm2374, %v4955, %v4775
    %v4957 = vsel %vm2376, %v4956, %v4779
    %v4958 = vsel %vm2378, %v4957, %v4783
    %v4959 = vsel %vm2380, %v4958, %v4787
    %v4960 = vsel %vm2382, %v4959, %v4791
    %v4961 = vsel %vm2384, %v4960, %v4795
    %v4962 = vsel %vm2386, %v4961, %v4799
    %v4963 = vsel %vm2388, %v4962, %v4803
    %v4964 = vsel %vm2390, %v4963, %v4807
    %v4965 = vsel %vm2392, %v4964, %v4811
    %v4966 = vsel %vm2394, %v4965, %v4815
    %v4967 = vsel %vm2396, %v4966, %v4819
    %v4968 = vsel %vm2398, %v4967, %v4823
    %v4969 = vsel %vm2400, %v4968, %v4827
    %v4970 = vsel %vm2402, %v4969, %v4831
    %v4971 = vsel %vm2404, %v4970, %v4835
    %v4972 = vsel %vm2406, %v4971, %v4839
    %v4973 = vsel %vm2408, %v4972, %v4843
    %v4974 = vsel %vm2410, %v4973, %v4847
    %v4976 = vrot.slane %v4911, 1
    %v4977 = vrot.slane %v4911, 2
    %v4978 = vrot.slane %v4911, 3
    %4982 = vst.msk [vmem:[#allocation2 + $0x1] sm:$0x1] %vm2482, %v4911
    %4983 = vst.msk [vmem:[#allocation2 + $0x11] sm:$0x1] %vm2482, %v4976
    %4984 = vst.msk [vmem:[#allocation2 + $0x21] sm:$0x1] %vm2482, %v4977
    %4985 = vst.msk [vmem:[#allocation2 + $0x31] sm:$0x1] %vm2482, %v4978
    %v4986 = vperm.slane %v4911, 0
    %v4987 = vperm.slane %v4976, 0
    %v4988 = vperm.slane %v4977, 0
    %v4989 = vperm.slane %v4978, 0
    %4990 = vrot.lane.b32.xlu0 %v4986, 96
    %v4991 = vpop.permute.xlu0 %4990
    %4992 = vrot.lane.b32.xlu0 %v4987, 96
    %v4993 = vpop.permute.xlu0 %4992
    %4994 = vrot.lane.b32.xlu0 %v4988, 96
    %v4995 = vpop.permute.xlu0 %4994
    %4996 = vrot.lane.b32.xlu0 %v4989, 96
    %v4997 = vpop.permute.xlu0 %4996
    %5002 = vst.msk [vmem:[%s2503 + $0x1] sm:$0x1] %vm2482, %v4991
    %5003 = vst.msk [vmem:[%s2503 + $0x11] sm:$0x1] %vm2482, %v4993
    %5004 = vst.msk [vmem:[%s2503 + $0x21] sm:$0x1] %vm2482, %v4995
    %5005 = vst.msk [vmem:[%s2503 + $0x31] sm:$0x1] %vm2482, %v4997
    %5006 = vrot.lane.b32.xlu0 %v4986, 64
    %v5007 = vpop.permute.xlu0 %5006
    %5008 = vrot.lane.b32.xlu0 %v4987, 64
    %v5009 = vpop.permute.xlu0 %5008
    %5010 = vrot.lane.b32.xlu0 %v4988, 64
    %v5011 = vpop.permute.xlu0 %5010
    %5012 = vrot.lane.b32.xlu0 %v4989, 64
    %v5013 = vpop.permute.xlu0 %5012
    %5018 = vst.msk [vmem:[%s2520 + $0x1] sm:$0x1] %vm2482, %v5007
    %5019 = vst.msk [vmem:[%s2520 + $0x11] sm:$0x1] %vm2482, %v5009
    %5020 = vst.msk [vmem:[%s2520 + $0x21] sm:$0x1] %vm2482, %v5011
    %5021 = vst.msk [vmem:[%s2520 + $0x31] sm:$0x1] %vm2482, %v5013
    %5022 = vrot.lane.b32.xlu0 %v4986, 32
    %v5023 = vpop.permute.xlu0 %5022
    %5024 = vrot.lane.b32.xlu0 %v4987, 32
    %v5025 = vpop.permute.xlu0 %5024
    %5026 = vrot.lane.b32.xlu0 %v4988, 32
    %v5027 = vpop.permute.xlu0 %5026
    %5028 = vrot.lane.b32.xlu0 %v4989, 32
    %v5029 = vpop.permute.xlu0 %5028
    %5034 = vst.msk [vmem:[%s2537 + $0x1] sm:$0x1] %vm2482, %v5023
    %5035 = vst.msk [vmem:[%s2537 + $0x11] sm:$0x1] %vm2482, %v5025
    %5036 = vst.msk [vmem:[%s2537 + $0x21] sm:$0x1] %vm2482, %v5027
    %5037 = vst.msk [vmem:[%s2537 + $0x31] sm:$0x1] %vm2482, %v5029
    %v5039 = vrot.slane %v4974, 1
    %v5040 = vrot.slane %v4974, 2
    %v5041 = vrot.slane %v4974, 3
    %5045 = vst.msk [vmem:[%s2549 + $0x1] sm:$0x1] %vm2482, %v4974
    %5046 = vst.msk [vmem:[%s2549 + $0x11] sm:$0x1] %vm2482, %v5039
    %5047 = vst.msk [vmem:[%s2549 + $0x21] sm:$0x1] %vm2482, %v5040
    %5048 = vst.msk [vmem:[%s2549 + $0x31] sm:$0x1] %vm2482, %v5041
    %v5049 = vperm.slane %v4974, 0
    %v5050 = vperm.slane %v5039, 0
    %v5051 = vperm.slane %v5040, 0
    %v5052 = vperm.slane %v5041, 0
    %5053 = vrot.lane.b32.xlu0 %v5049, 96
    %v5054 = vpop.permute.xlu0 %5053
    %5055 = vrot.lane.b32.xlu0 %v5050, 96
    %v5056 = vpop.permute.xlu0 %5055
    %5057 = vrot.lane.b32.xlu0 %v5051, 96
    %v5058 = vpop.permute.xlu0 %5057
    %5059 = vrot.lane.b32.xlu0 %v5052, 96
    %v5060 = vpop.permute.xlu0 %5059
    %5065 = vst.msk [vmem:[%s2570 + $0x1] sm:$0x1] %vm2482, %v5054
    %5066 = vst.msk [vmem:[%s2570 + $0x11] sm:$0x1] %vm2482, %v5056
    %5067 = vst.msk [vmem:[%s2570 + $0x21] sm:$0x1] %vm2482, %v5058
    %5068 = vst.msk [vmem:[%s2570 + $0x31] sm:$0x1] %vm2482, %v5060
    %5069 = vrot.lane.b32.xlu0 %v5049, 64
    %v5070 = vpop.permute.xlu0 %5069
    %5071 = vrot.lane.b32.xlu0 %v5050, 64
    %v5072 = vpop.permute.xlu0 %5071
    %5073 = vrot.lane.b32.xlu0 %v5051, 64
    %v5074 = vpop.permute.xlu0 %5073
    %5075 = vrot.lane.b32.xlu0 %v5052, 64
    %v5076 = vpop.permute.xlu0 %5075
    %5081 = vst.msk [vmem:[%s2587 + $0x1] sm:$0x1] %vm2482, %v5070
    %5082 = vst.msk [vmem:[%s2587 + $0x11] sm:$0x1] %vm2482, %v5072
    %5083 = vst.msk [vmem:[%s2587 + $0x21] sm:$0x1] %vm2482, %v5074
    %5084 = vst.msk [vmem:[%s2587 + $0x31] sm:$0x1] %vm2482, %v5076
    %5085 = vrot.lane.b32.xlu0 %v5049, 32
    %v5086 = vpop.permute.xlu0 %5085
    %5087 = vrot.lane.b32.xlu0 %v5050, 32
    %v5088 = vpop.permute.xlu0 %5087
    %5089 = vrot.lane.b32.xlu0 %v5051, 32
    %v5090 = vpop.permute.xlu0 %5089
    %5091 = vrot.lane.b32.xlu0 %v5052, 32
    %v5092 = vpop.permute.xlu0 %5091
    %5097 = vst.msk [vmem:[%s2604 + $0x1] sm:$0x1] %vm2482, %v5086
    %5098 = vst.msk [vmem:[%s2604 + $0x11] sm:$0x1] %vm2482, %v5088
    %5099 = vst.msk [vmem:[%s2604 + $0x21] sm:$0x1] %vm2482, %v5090
    %5100 = vst.msk [vmem:[%s2604 + $0x31] sm:$0x1] %vm2482, %v5092
    // Predicated region
    $region10: #{tpu_custom_call.1} parent=1 // pred_check
      _
    $region11: #{tpu_custom_call.1} parent=1 // pred_check_branch
      %5102 = sbr.rel (0) target = $region13
    $region12: #{tpu_custom_call.1} parent=1 // pred_region
      %5104 = vsyncadd [#allocation3], 0
      %s5105 = sshll.u32 [#allocation2], 4
      %s5106 = int_to_ptr.vmem [resolvable:$true] %s5105
      %s5107 = sshll.u32 %s2, 4
      %s5108 = int_to_ptr.hbm [resolvable:$true] %s5107
      %5113 = dma.vmem_to_hbm [thread:$0]  %s5106, 1024, %s5108, [#allocation3], 32, 32, 2
    $region13: #{tpu_custom_call.1} parent=1 // pred_fallthru
      _
    // Predicated region
    $region14: #{tpu_custom_call.1} parent=1 // pred_check
      _
    $region15: #{tpu_custom_call.1} parent=1 // pred_check_branch
      %5115 = sbr.rel (0) target = $region17
    $region16: #{tpu_custom_call.1} parent=1 // pred_region
      %5117 = dma.done [#allocation3], 1024
    $region17: #{tpu_custom_call.1} parent=1 // pred_fallthru
      _
    %5118 = vsyncpa [#allocation3], 1

// kernel: tpu_custom_call.1
$region0: #{tpu_custom_call.1}
  #allocation0 [shape = 'u32[]', space=smem, size = 0x4, offset = 0x4, fixed_abs, tag = 'smem constant byte address 0x4 - core index']
  #allocation1 [shape = 'u32[72,128]{1,0:T(1,128)}', space=vmem, size = 0x9000, scoped, tag = 'internal scratch']
  %s0 = inlined_call_operand.hbm [shape: f32[2,4,256], index: 0, kind: input, shape index: {}]
  %s1 = inlined_call_operand.vmem [shape: f32[8,4], index: 1, kind: input, shape index: {}]
  %s2 = inlined_call_operand.hbm [shape: f32[2,8,256], index: 2, kind: output, shape index: {}]
  %s3 = sld [smem:[#allocation0]]
  $region45: #{tpu_custom_call.1} parent=0
    _
  %s5 = ssub.s32 1, %s3
  %s6 = scalar_select 0, %s5, %s3
  $region1: #{tpu_custom_call.1} parent=0
    #allocation2 [shape = 'u8[8192]{0}', space=vmem, size = 0x2000, scoped, tag = 'input window, operand 0']
    #allocation3 [shape = 's32[2]{0}', space=sflag, size = 0x8, scoped, tag = 'scoped memory for tpu_custom_call.1']
    #allocation4 [shape = 's32[2]{0}', space=sflag, size = 0x8, scoped, tag = 'scoped memory for tpu_custom_call.1']
    #allocation5 [shape = 'u8[16384]{0}', space=vmem, size = 0x4000, scoped, tag = 'output window, operand 0']
    %7 = vsyncpa [#allocation3], 0
    %s8 = scalar_lea.sflag [#allocation3], 1
    %9 = vsyncpa %s8, 0
    %10 = vsyncpa [#allocation4], 0
    %s11 = scalar_lea.sflag [#allocation4], 1
    %12 = vsyncpa %s11, 0
    loop: start=0, step=1, limit=4
    $region2: #{tpu_custom_call.1} parent=1 // loop_pre_header
      _
    $region3: #{tpu_custom_call.1} parent=1 // loop_header
      %s14 = sphi 0, %s18
      %p15 = scmp.ge.s32.totalorder %s14, 4
      %s21 = sphi 0, %s40
      %s22 = sphi 0, %s36
      %s23 = sphi 0, %s32
      %s24 = sphi 0, %s21
      %s25 = sphi 0, %s22
      %s26 = sphi 0, %s23
      %s27 = sphi 0, %s24
      %s28 = sphi 0, %s25
      %s29 = sphi 0, %s26
      %s45 = sphi 0, %s47
      %s48 = sphi 0, %s45
      %s49 = sphi 0, %s48
      %s65 = sphi 0, %s49
      %s71 = sphi 0, %s73
      %s74 = sphi 0, %s71
      %s75 = sphi 0, %s74
      %s91 = sphi 0, %s75
      %s101 = sphi 0, %s103
      %s104 = sphi 0, %s101
      %s105 = sphi 0, %s104
      %s121 = sphi 0, %s105
    $region4: #{tpu_custom_call.1} parent=1 // loop_header_branch
      %17 = sbr.rel (%p15) target = $region8
    $region5: #{tpu_custom_call.1} parent=1 // loop_body
      %s19 = ssub.s32 %s14, 1
      %s20 = ssub.s32 %s14, 2
      %s30 = sadd.s32 1, %s23
      %p31 = scmp.ge.s32.totalorder %s30, 1
      %s32 = scalar_select %p31, 0, %s30
      %s33 = sadd.s32 1, %s22
      %s34 = scalar_select %p31, %s33, %s22
      %p35 = scmp.ge.s32.totalorder %s34, 1
      %s36 = scalar_select %p35, 0, %s34
      %s37 = sadd.s32 1, %s21
      %s38 = scalar_select %p35, %s37, %s21
      %p39 = scmp.ge.s32.totalorder %s38, 2
      %s40 = scalar_select %p39, 0, %s38
      %s41 = ssub.s32 %s21, %s40
      %s42 = ssub.s32 %s22, %s36
      %s43 = sor.u32 %s41, %s42
      %p44 = scmp.eq.s32.totalorder %s43, 0
      %s46 = sadd.s32 %s45, 1
      %s47 = scalar_select %p44, %s45, %s46
      %p50 = pneg %p44
      %p51 = scmp.eq.s32.totalorder %s14, 1
      %p52 = por %p50, %p51
      %p53 = scmp.ne.s32.totalorder %s45, %s48
      %p54 = scmp.eq.s32.totalorder %s14, 0
      %p55 = por %p53, %p54
      %p56 = scmp.ne.s32.totalorder %s45, %s48
      %p57 = scmp.eq.s32.totalorder %s19, 1
      %p58 = por %p56, %p57
      %p59 = scmp.ne.s32.totalorder %s48, %s49
      %p60 = scmp.eq.s32.totalorder %s19, 0
      %p61 = por %p59, %p60
      %p62 = scmp.ne.s32.totalorder %s48, %s49
      %p63 = scmp.eq.s32.totalorder %s20, 1
      %p64 = por %p62, %p63
      %p66 = scmp.ne.s32.totalorder %s49, %s65
      %p67 = scmp.eq.s32.totalorder %s20, 0
      %p68 = por %p66, %p67
      %s69 = ssub.s32 %s23, %s32
      %p70 = scmp.eq.s32.totalorder %s69, 0
      %s72 = sadd.s32 %s71, 1
      %s73 = scalar_select %p70, %s71, %s72
      %p76 = pneg %p70
      %p77 = scmp.eq.s32.totalorder %s14, 1
      %p78 = por %p76, %p77
      %p79 = scmp.ne.s32.totalorder %s71, %s74
      %p80 = scmp.eq.s32.totalorder %s14, 0
      %p81 = por %p79, %p80
      %p82 = scmp.ne.s32.totalorder %s71, %s74
      %p83 = scmp.eq.s32.totalorder %s19, 1
      %p84 = por %p82, %p83
      %p85 = scmp.ne.s32.totalorder %s74, %s75
      %p86 = scmp.eq.s32.totalorder %s19, 0
      %p87 = por %p85, %p86
      %p88 = scmp.ne.s32.totalorder %s74, %s75
      %p89 = scmp.eq.s32.totalorder %s20, 1
      %p90 = por %p88, %p89
      %p92 = scmp.ne.s32.totalorder %s75, %s91
      %p93 = scmp.eq.s32.totalorder %s20, 0
      %p94 = por %p92, %p93
      %s95 = ssub.s32 %s21, %s40
      %s96 = ssub.s32 %s23, %s32
      %s97 = sor.u32 %s95, %s96
      %s98 = ssub.s32 %s22, %s36
      %s99 = sor.u32 %s97, %s98
      %p100 = scmp.eq.s32.totalorder %s99, 0
      %s102 = sadd.s32 %s101, 1
      %s103 = scalar_select %p100, %s101, %s102
      %p106 = pneg %p100
      %p107 = scmp.eq.s32.totalorder %s14, 1
      %p108 = por %p106, %p107
      %p109 = scmp.ne.s32.totalorder %s101, %s104
      %p110 = scmp.eq.s32.totalorder %s14, 0
      %p111 = por %p109, %p110
      %p112 = scmp.ne.s32.totalorder %s101, %s104
      %p113 = scmp.eq.s32.totalorder %s19, 1
      %p114 = por %p112, %p113
      %p115 = scmp.ne.s32.totalorder %s104, %s105
      %p116 = scmp.eq.s32.totalorder %s19, 0
      %p117 = por %p115, %p116
      %p118 = scmp.ne.s32.totalorder %s104, %s105
      %p119 = scmp.eq.s32.totalorder %s20, 1
      %p120 = por %p118, %p119
      %p122 = scmp.ne.s32.totalorder %s105, %s121
      %p123 = scmp.eq.s32.totalorder %s20, 0
      %p124 = por %p122, %p123
      %p125 = scmp.le.s32.totalorder 1, %s14
      %p126 = scmp.lt.s32.totalorder %s14, 3
      %p127 = pnand %p125, %p126
      %p128 = pneg %p127
      // Predicated region
      $region9: #{tpu_custom_call.1} parent=5 // pred_check
        _
      $region10: #{tpu_custom_call.1} parent=5 // pred_check_branch
        %130 = sbr.rel (%p127) target = $region12
      $region11: #{tpu_custom_call.1} parent=5 // pred_region
        %s131 = ssub.s32 %s14, 1
        // Predicated region
        $region13: #{tpu_custom_call.1} parent=11 // pred_check
          %p132 = pneg %p87
        $region14: #{tpu_custom_call.1} parent=11 // pred_check_branch
          %134 = sbr.rel (%p132) target = $region16
        $region15: #{tpu_custom_call.1} parent=11 // pred_region
          %p135 = scmp.lt.s32.totalorder %s26, 0
          %s136 = scalar_select %p135, %s26, 0
          %s137 = smul.addr %s136, 8
          %s138 = scalar_lea.vmem %s1, %s137
        $region16: #{tpu_custom_call.1} parent=11 // pred_fallthru
          _
      $region12: #{tpu_custom_call.1} parent=5 // pred_fallthru
        _
      %p139 = scmp.lt.s32.totalorder %s14, 2
      // Predicated region
      $region17: #{tpu_custom_call.1} parent=5 // pred_check
        %p140 = pneg %p139
      $region18: #{tpu_custom_call.1} parent=5 // pred_check_branch
        %142 = sbr.rel (%p140) target = $region20
      $region19: #{tpu_custom_call.1} parent=5 // pred_region
        // Predicated region
        $region21: #{tpu_custom_call.1} parent=19 // pred_check
          %p143 = pneg %p55
        $region22: #{tpu_custom_call.1} parent=19 // pred_check_branch
          %145 = sbr.rel (%p143) target = $region24
        $region23: #{tpu_custom_call.1} parent=19 // pred_region
          %s146 = sand.u32 %s45, 1
          %s147 = scalar_lea.sflag [#allocation3], %s146
          %s148 = sand.u32 %s45, 1
          %s149 = smul.addr %s148, 8
          %s150 = scalar_lea.vmem [#allocation2], %s149
          %s151 = smul.u32 2, %s22
          %153 = vsyncadd %s147, 0
          %s154 = smul.addr %s21, 2
          %s155 = sadd.s32 %s151, %s154
          %s156 = smul.addr %s155, 4
          %s157 = scalar_lea.hbm %s0, %s156
          %s159 = sshll.u32 %s157, 4
          %s160 = int_to_ptr.hbm [resolvable:$true] %s159
          %s161 = sshll.u32 %s150, 4
          %s162 = int_to_ptr.vmem [resolvable:$true] %s161
          %164 = dma.hbm_to_vmem [thread:$0]  %s160, 128, %s162, %s147
        $region24: #{tpu_custom_call.1} parent=19 // pred_fallthru
          _
      $region20: #{tpu_custom_call.1} parent=5 // pred_fallthru
        _
      %p165 = scmp.le.s32.totalorder 1, %s14
      %p166 = scmp.lt.s32.totalorder %s14, 3
      %p167 = pnand %p165, %p166
      %p168 = pneg %p167
      // Predicated region
      $region25: #{tpu_custom_call.1} parent=5 // pred_check
        _
      $region26: #{tpu_custom_call.1} parent=5 // pred_check_branch
        %170 = sbr.rel (%p167) target = $region28
      $region27: #{tpu_custom_call.1} parent=5 // pred_region
        %s171 = ssub.s32 %s14, 1
        %s172 = sand.u32 %s48, 1
        %s173 = scalar_lea.sflag [#allocation3], %s172
        %s174 = sand.u32 %s48, 1
        %s175 = smul.addr %s174, 8
        %s176 = scalar_lea.vmem [#allocation2], %s175
        // Predicated region
        $region29: #{tpu_custom_call.1} parent=27 // pred_check
          %p177 = pneg %p61
        $region30: #{tpu_custom_call.1} parent=27 // pred_check_branch
          %179 = sbr.rel (%p177) target = $region32
        $region31: #{tpu_custom_call.1} parent=27 // pred_region
          %181 = dma.done %s173, 128
        $region32: #{tpu_custom_call.1} parent=27 // pred_fallthru
          _
        %s182 = sand.u32 %s48, 1
        %s183 = scalar_lea.sflag [#allocation3], %s182
        %s184 = sand.u32 %s48, 1
        %s185 = smul.addr %s184, 8
        %s186 = scalar_lea.vmem [#allocation2], %s185
        %p187 = pneg %p61
        %p188 = pneg %p58
        %p189 = scmp.lt.s32.totalorder %s26, 0
        %s190 = scalar_select %p189, %s26, 0
        %s191 = smul.addr %s190, 8
        %s192 = scalar_lea.vmem %s1, %s191
        %p193 = pneg %p87
        %p194 = pneg %p84
        %p195 = pneg %p117
        %p196 = pneg %p114
        %s197 = sand.u32 %s104, 1
        %s198 = scalar_lea.sflag [#allocation4], %s197
        %s199 = sand.u32 %s104, 1
        %s200 = smul.addr %s199, 16
        %s201 = scalar_lea.vmem [#allocation5], %s200
        %s202 = smul.u32 2, %s25
        %p203 = scmp.lt.s32.totalorder %s26, 0
        %s204 = scalar_select %p203, %s26, 0
        %s205 = smul.addr %s204, 8
        %s206 = scalar_lea.vmem %s1, %s205
        %s207 = smul.u32 2, %s25
        %v208 = vld [vmem:[%s206] sm:$0xff]
        %v209 = vld [vmem:[%s176] sm:$0xff]
        %211 = vst [vmem:[#allocation1] ss:$2 sm:$0xff] %v209
        %v212 = vld.sshfl [vmem:[#allocation1] sm:$0xff pattern:$0x75316420]
        %v213 = vld.sshfl [vmem:[#allocation1 + $0x8] sm:$0xff pattern:$0x75316420]
        %vm214 = vcmask 31744
        %v216 = vsel %vm214, %v208, 0
        %vm218 = vcmask 1043456
        %v219 = vsel %vm218, %v212, 0
        %v221 = vsel %vm218, %v213, 0
        %223 = vmatpush.msra.mxu0 0.0
        %224 = vmatpush.msra.mxu0 0.0
        %225 = vmatpush.msra.mxu0 0.0
        %226 = vmatpush.msra.mxu0 0.0
        %227 = vmatpush.msra.mxu0 0.0
        %228 = vmatpush.msra.mxu0 0.0
        %229 = vmatpush.msra.mxu0 0.0
        %230 = vmatpush.msra.mxu0 0.0
        %231 = vmatpush.msra.mxu0 0.0
        %232 = vmatpush.msra.mxu0 0.0
        %233 = vmatpush.msra.mxu0 0.0
        %234 = vmatpush.msra.mxu0 0.0
        %235 = vmatpush.msra.mxu0 0.0
        %236 = vmatpush.msra.mxu0 0.0
        %237 = vmatpush.msra.mxu0 0.0
        %238 = vmatpush.msra.mxu0 %v219
        %239 = vmatmul.f32.gmra.mxu0 %v216
        %v240 = vpop.f32.mrf.mxu0
        %v241 = vadd.f32 0.0, %v240
        %242 = vdwg.mxu0
        %243 = vmatpush.msra.mxu0 0.0
        %244 = vmatpush.msra.mxu0 0.0
        %245 = vmatpush.msra.mxu0 0.0
        %246 = vmatpush.msra.mxu0 0.0
        %247 = vmatpush.msra.mxu0 0.0
        %248 = vmatpush.msra.mxu0 0.0
        %249 = vmatpush.msra.mxu0 0.0
        %250 = vmatpush.msra.mxu0 0.0
        %251 = vmatpush.msra.mxu0 0.0
        %252 = vmatpush.msra.mxu0 0.0
        %253 = vmatpush.msra.mxu0 0.0
        %254 = vmatpush.msra.mxu0 0.0
        %255 = vmatpush.msra.mxu0 0.0
        %256 = vmatpush.msra.mxu0 0.0
        %257 = vmatpush.msra.mxu0 0.0
        %258 = vmatpush.msra.mxu0 %v221
        %259 = vmatmul.f32.gmra.mxu0 %v216
        %v260 = vpop.f32.mrf.mxu0
        %v261 = vadd.f32 0.0, %v260
        %262 = vdwg.mxu0
        %263 = vst [vmem:[%s201] sm:$0xff] %v241
        %264 = vst [vmem:[%s201 + $0x8] sm:$0xff] %v261
        %s265 = sand.u32 %s104, 1
        %s266 = scalar_lea.sflag [#allocation4], %s265
        %s267 = sand.u32 %s104, 1
        %s268 = smul.addr %s267, 16
        %s269 = scalar_lea.vmem [#allocation5], %s268
        // Predicated region
        $region33: #{tpu_custom_call.1} parent=27 // pred_check
          %p270 = pneg %p114
        $region34: #{tpu_custom_call.1} parent=27 // pred_check_branch
          %272 = sbr.rel (%p270) target = $region36
        $region35: #{tpu_custom_call.1} parent=27 // pred_region
          %s273 = smul.u32 2, %s25
          %275 = vsyncadd %s266, 0
          %s276 = smul.addr %s26, 2
          %s277 = sadd.s32 %s273, %s276
          %s278 = smul.addr %s24, 2
          %s279 = sadd.s32 %s277, %s278
          %s280 = smul.addr %s279, 8
          %s281 = scalar_lea.hbm %s2, %s280
          %s283 = sshll.u32 %s269, 4
          %s284 = int_to_ptr.vmem [resolvable:$true] %s283
          %s285 = sshll.u32 %s281, 4
          %s286 = int_to_ptr.hbm [resolvable:$true] %s285
          %288 = dma.vmem_to_hbm [thread:$0]  %s284, 256, %s286, %s266
        $region36: #{tpu_custom_call.1} parent=27 // pred_fallthru
          _
      $region28: #{tpu_custom_call.1} parent=5 // pred_fallthru
        _
      %p289 = scmp.le.s32.totalorder 2, %s14
      // Predicated region
      $region37: #{tpu_custom_call.1} parent=5 // pred_check
        %p290 = pneg %p289
      $region38: #{tpu_custom_call.1} parent=5 // pred_check_branch
        %292 = sbr.rel (%p290) target = $region40
      $region39: #{tpu_custom_call.1} parent=5 // pred_region
        %s293 = ssub.s32 %s14, 2
        // Predicated region
        $region41: #{tpu_custom_call.1} parent=39 // pred_check
          %p294 = pneg %p120
        $region42: #{tpu_custom_call.1} parent=39 // pred_check_branch
          %296 = sbr.rel (%p294) target = $region44
        $region43: #{tpu_custom_call.1} parent=39 // pred_region
          %s297 = sand.u32 %s105, 1
          %s298 = scalar_lea.sflag [#allocation4], %s297
          %s299 = sand.u32 %s105, 1
          %s300 = smul.addr %s299, 16
          %s301 = scalar_lea.vmem [#allocation5], %s300
          %303 = dma.done %s298, 256
        $region44: #{tpu_custom_call.1} parent=39 // pred_fallthru
          _
      $region40: #{tpu_custom_call.1} parent=5 // pred_fallthru
        _
    $region6: #{tpu_custom_call.1} parent=1 // loop_footer
      %s18 = sadd.s32 1, %s14
    $region7: #{tpu_custom_call.1} parent=1 // loop_footer_branch
      %13 = sbr.rel target = $region3
    $region8: #{tpu_custom_call.1} parent=1 // loop_exit
      _
    %304 = vsyncpa [#allocation3], 1
    %s305 = scalar_lea.sflag [#allocation3], 1
    %306 = vsyncpa %s305, 1
    %307 = vsyncpa [#allocation4], 1
    %s308 = scalar_lea.sflag [#allocation4], 1
    %309 = vsyncpa %s308, 1

// kernel: tpu_custom_call.1
$region0: #{tpu_custom_call.1}
  #allocation0 [shape = 'u32[]', space=smem, size = 0x4, offset = 0x4, fixed_abs, tag = 'smem constant byte address 0x4 - core index']
  #allocation1 [shape = 'u32[72,128]{1,0:T(1,128)}', space=vmem, size = 0x9000, scoped, tag = 'internal scratch']
  %s0 = inlined_call_operand.hbm [shape: f32[2,4,256], index: 0, kind: input, shape index: {}]
  %s1 = inlined_call_operand.vmem [shape: f32[8,4], index: 1, kind: input, shape index: {}]
  %s2 = inlined_call_operand.hbm [shape: f32[2,8,256], index: 2, kind: output, shape index: {}]
  %s3 = sld [smem:[#allocation0]]
  $region45: #{tpu_custom_call.1} parent=0
    _
  %s5 = ssub.s32 1, %s3
  %s6 = scalar_select 0, %s5, %s3
  $region1: #{tpu_custom_call.1} parent=0
    #allocation2 [shape = 'u8[8192]{0}', space=vmem, size = 0x2000, scoped, tag = 'input window, operand 0']
    #allocation3 [shape = 's32[2]{0}', space=sflag, size = 0x8, scoped, tag = 'scoped memory for tpu_custom_call.1']
    #allocation4 [shape = 's32[2]{0}', space=sflag, size = 0x8, scoped, tag = 'scoped memory for tpu_custom_call.1']
    #allocation5 [shape = 'u8[16384]{0}', space=vmem, size = 0x4000, scoped, tag = 'output window, operand 0']
    %7 = vsyncpa [#allocation3], 0
    %s8 = scalar_lea.sflag [#allocation3], 1
    %9 = vsyncpa %s8, 0
    %10 = vsyncpa [#allocation4], 0
    %s11 = scalar_lea.sflag [#allocation4], 1
    %12 = vsyncpa %s11, 0
    loop: start=0, step=1, limit=4
    $region2: #{tpu_custom_call.1} parent=1 // loop_pre_header
      _
    $region3: #{tpu_custom_call.1} parent=1 // loop_header
      %s14 = sphi 0, %s18
      %p15 = scmp.ge.s32.totalorder %s14, 4
      %s21 = sphi 0, %s40
      %s22 = sphi 0, %s36
      %s23 = sphi 0, %s32
      %s24 = sphi 0, %s21
      %s25 = sphi 0, %s22
      %s26 = sphi 0, %s23
      %s27 = sphi 0, %s24
      %s28 = sphi 0, %s25
      %s29 = sphi 0, %s26
      %s45 = sphi 0, %s47
      %s48 = sphi 0, %s45
      %s49 = sphi 0, %s48
      %s65 = sphi 0, %s49
      %s71 = sphi 0, %s73
      %s74 = sphi 0, %s71
      %s75 = sphi 0, %s74
      %s91 = sphi 0, %s75
      %s101 = sphi 0, %s103
      %s104 = sphi 0, %s101
      %s105 = sphi 0, %s104
      %s121 = sphi 0, %s105
    $region4: #{tpu_custom_call.1} parent=1 // loop_header_branch
      %17 = sbr.rel (%p15) target = $region8
    $region5: #{tpu_custom_call.1} parent=1 // loop_body
      %s19 = ssub.s32 %s14, 1
      %s20 = ssub.s32 %s14, 2
      %s30 = sadd.s32 1, %s23
      %p31 = scmp.ge.s32.totalorder %s30, 1
      %s32 = scalar_select %p31, 0, %s30
      %s33 = sadd.s32 1, %s22
      %s34 = scalar_select %p31, %s33, %s22
      %p35 = scmp.ge.s32.totalorder %s34, 1
      %s36 = scalar_select %p35, 0, %s34
      %s37 = sadd.s32 1, %s21
      %s38 = scalar_select %p35, %s37, %s21
      %p39 = scmp.ge.s32.totalorder %s38, 2
      %s40 = scalar_select %p39, 0, %s38
      %s41 = ssub.s32 %s21, %s40
      %s42 = ssub.s32 %s22, %s36
      %s43 = sor.u32 %s41, %s42
      %p44 = scmp.eq.s32.totalorder %s43, 0
      %s46 = sadd.s32 %s45, 1
      %s47 = scalar_select %p44, %s45, %s46
      %p50 = pneg %p44
      %p51 = scmp.eq.s32.totalorder %s14, 1
      %p52 = por %p50, %p51
      %p53 = scmp.ne.s32.totalorder %s45, %s48
      %p54 = scmp.eq.s32.totalorder %s14, 0
      %p55 = por %p53, %p54
      %p56 = scmp.ne.s32.totalorder %s45, %s48
      %p57 = scmp.eq.s32.totalorder %s19, 1
      %p58 = por %p56, %p57
      %p59 = scmp.ne.s32.totalorder %s48, %s49
      %p60 = scmp.eq.s32.totalorder %s19, 0
      %p61 = por %p59, %p60
      %p62 = scmp.ne.s32.totalorder %s48, %s49
      %p63 = scmp.eq.s32.totalorder %s20, 1
      %p64 = por %p62, %p63
      %p66 = scmp.ne.s32.totalorder %s49, %s65
      %p67 = scmp.eq.s32.totalorder %s20, 0
      %p68 = por %p66, %p67
      %s69 = ssub.s32 %s23, %s32
      %p70 = scmp.eq.s32.totalorder %s69, 0
      %s72 = sadd.s32 %s71, 1
      %s73 = scalar_select %p70, %s71, %s72
      %p76 = pneg %p70
      %p77 = scmp.eq.s32.totalorder %s14, 1
      %p78 = por %p76, %p77
      %p79 = scmp.ne.s32.totalorder %s71, %s74
      %p80 = scmp.eq.s32.totalorder %s14, 0
      %p81 = por %p79, %p80
      %p82 = scmp.ne.s32.totalorder %s71, %s74
      %p83 = scmp.eq.s32.totalorder %s19, 1
      %p84 = por %p82, %p83
      %p85 = scmp.ne.s32.totalorder %s74, %s75
      %p86 = scmp.eq.s32.totalorder %s19, 0
      %p87 = por %p85, %p86
      %p88 = scmp.ne.s32.totalorder %s74, %s75
      %p89 = scmp.eq.s32.totalorder %s20, 1
      %p90 = por %p88, %p89
      %p92 = scmp.ne.s32.totalorder %s75, %s91
      %p93 = scmp.eq.s32.totalorder %s20, 0
      %p94 = por %p92, %p93
      %s95 = ssub.s32 %s21, %s40
      %s96 = ssub.s32 %s23, %s32
      %s97 = sor.u32 %s95, %s96
      %s98 = ssub.s32 %s22, %s36
      %s99 = sor.u32 %s97, %s98
      %p100 = scmp.eq.s32.totalorder %s99, 0
      %s102 = sadd.s32 %s101, 1
      %s103 = scalar_select %p100, %s101, %s102
      %p106 = pneg %p100
      %p107 = scmp.eq.s32.totalorder %s14, 1
      %p108 = por %p106, %p107
      %p109 = scmp.ne.s32.totalorder %s101, %s104
      %p110 = scmp.eq.s32.totalorder %s14, 0
      %p111 = por %p109, %p110
      %p112 = scmp.ne.s32.totalorder %s101, %s104
      %p113 = scmp.eq.s32.totalorder %s19, 1
      %p114 = por %p112, %p113
      %p115 = scmp.ne.s32.totalorder %s104, %s105
      %p116 = scmp.eq.s32.totalorder %s19, 0
      %p117 = por %p115, %p116
      %p118 = scmp.ne.s32.totalorder %s104, %s105
      %p119 = scmp.eq.s32.totalorder %s20, 1
      %p120 = por %p118, %p119
      %p122 = scmp.ne.s32.totalorder %s105, %s121
      %p123 = scmp.eq.s32.totalorder %s20, 0
      %p124 = por %p122, %p123
      %p125 = scmp.le.s32.totalorder 1, %s14
      %p126 = scmp.lt.s32.totalorder %s14, 3
      %p127 = pnand %p125, %p126
      %p128 = pneg %p127
      // Predicated region
      $region9: #{tpu_custom_call.1} parent=5 // pred_check
        _
      $region10: #{tpu_custom_call.1} parent=5 // pred_check_branch
        %130 = sbr.rel (%p127) target = $region12
      $region11: #{tpu_custom_call.1} parent=5 // pred_region
        %s131 = ssub.s32 %s14, 1
        // Predicated region
        $region13: #{tpu_custom_call.1} parent=11 // pred_check
          %p132 = pneg %p87
        $region14: #{tpu_custom_call.1} parent=11 // pred_check_branch
          %134 = sbr.rel (%p132) target = $region16
        $region15: #{tpu_custom_call.1} parent=11 // pred_region
          %p135 = scmp.lt.s32.totalorder %s26, 0
          %s136 = scalar_select %p135, %s26, 0
          %s137 = smul.addr %s136, 8
          %s138 = scalar_lea.vmem %s1, %s137
        $region16: #{tpu_custom_call.1} parent=11 // pred_fallthru
          _
      $region12: #{tpu_custom_call.1} parent=5 // pred_fallthru
        _
      %p139 = scmp.lt.s32.totalorder %s14, 2
      // Predicated region
      $region17: #{tpu_custom_call.1} parent=5 // pred_check
        %p140 = pneg %p139
      $region18: #{tpu_custom_call.1} parent=5 // pred_check_branch
        %142 = sbr.rel (%p140) target = $region20
      $region19: #{tpu_custom_call.1} parent=5 // pred_region
        // Predicated region
        $region21: #{tpu_custom_call.1} parent=19 // pred_check
          %p143 = pneg %p55
        $region22: #{tpu_custom_call.1} parent=19 // pred_check_branch
          %145 = sbr.rel (%p143) target = $region24
        $region23: #{tpu_custom_call.1} parent=19 // pred_region
          %s146 = sand.u32 %s45, 1
          %s147 = scalar_lea.sflag [#allocation3], %s146
          %s148 = sand.u32 %s45, 1
          %s149 = smul.addr %s148, 8
          %s150 = scalar_lea.vmem [#allocation2], %s149
          %s151 = smul.u32 2, %s22
          %153 = vsyncadd %s147, 0
          %s154 = smul.addr %s21, 2
          %s155 = sadd.s32 %s151, %s154
          %s156 = smul.addr %s155, 4
          %s157 = scalar_lea.hbm %s0, %s156
          %s159 = sshll.u32 %s157, 4
          %s160 = int_to_ptr.hbm [resolvable:$true] %s159
          %s161 = sshll.u32 %s150, 4
          %s162 = int_to_ptr.vmem [resolvable:$true] %s161
          %164 = dma.hbm_to_vmem [thread:$0]  %s160, 128, %s162, %s147
        $region24: #{tpu_custom_call.1} parent=19 // pred_fallthru
          _
      $region20: #{tpu_custom_call.1} parent=5 // pred_fallthru
        _
      %p165 = scmp.le.s32.totalorder 1, %s14
      %p166 = scmp.lt.s32.totalorder %s14, 3
      %p167 = pnand %p165, %p166
      %p168 = pneg %p167
      // Predicated region
      $region25: #{tpu_custom_call.1} parent=5 // pred_check
        _
      $region26: #{tpu_custom_call.1} parent=5 // pred_check_branch
        %170 = sbr.rel (%p167) target = $region28
      $region27: #{tpu_custom_call.1} parent=5 // pred_region
        %s171 = ssub.s32 %s14, 1
        %s172 = sand.u32 %s48, 1
        %s173 = scalar_lea.sflag [#allocation3], %s172
        %s174 = sand.u32 %s48, 1
        %s175 = smul.addr %s174, 8
        %s176 = scalar_lea.vmem [#allocation2], %s175
        // Predicated region
        $region29: #{tpu_custom_call.1} parent=27 // pred_check
          %p177 = pneg %p61
        $region30: #{tpu_custom_call.1} parent=27 // pred_check_branch
          %179 = sbr.rel (%p177) target = $region32
        $region31: #{tpu_custom_call.1} parent=27 // pred_region
          %181 = dma.done %s173, 128
        $region32: #{tpu_custom_call.1} parent=27 // pred_fallthru
          _
        %s182 = sand.u32 %s48, 1
        %s183 = scalar_lea.sflag [#allocation3], %s182
        %s184 = sand.u32 %s48, 1
        %s185 = smul.addr %s184, 8
        %s186 = scalar_lea.vmem [#allocation2], %s185
        %p187 = pneg %p61
        %p188 = pneg %p58
        %p189 = scmp.lt.s32.totalorder %s26, 0
        %s190 = scalar_select %p189, %s26, 0
        %s191 = smul.addr %s190, 8
        %s192 = scalar_lea.vmem %s1, %s191
        %p193 = pneg %p87
        %p194 = pneg %p84
        %p195 = pneg %p117
        %p196 = pneg %p114
        %s197 = sand.u32 %s104, 1
        %s198 = scalar_lea.sflag [#allocation4], %s197
        %s199 = sand.u32 %s104, 1
        %s200 = smul.addr %s199, 16
        %s201 = scalar_lea.vmem [#allocation5], %s200
        %s202 = smul.u32 2, %s25
        %p203 = scmp.lt.s32.totalorder %s26, 0
        %s204 = scalar_select %p203, %s26, 0
        %s205 = smul.addr %s204, 8
        %s206 = scalar_lea.vmem %s1, %s205
        %s207 = smul.u32 2, %s25
        %v208 = vld [vmem:[%s206] sm:$0xff]
        %v209 = vld [vmem:[%s176] sm:$0xff]
        %211 = vst [vmem:[#allocation1] ss:$2 sm:$0xff] %v209
        %v212 = vld.sshfl [vmem:[#allocation1] sm:$0xff pattern:$0x75316420]
        %v213 = vld.sshfl [vmem:[#allocation1 + $0x8] sm:$0xff pattern:$0x75316420]
        %vm214 = vcmask 31744
        %v216 = vsel %vm214, %v208, 0
        %vm218 = vcmask 1043456
        %v219 = vsel %vm218, %v212, 0
        %v221 = vsel %vm218, %v213, 0
        %223 = vmatpush.msra.mxu0 0.0
        %224 = vmatpush.msra.mxu0 0.0
        %225 = vmatpush.msra.mxu0 0.0
        %226 = vmatpush.msra.mxu0 0.0
        %227 = vmatpush.msra.mxu0 0.0
        %228 = vmatpush.msra.mxu0 0.0
        %229 = vmatpush.msra.mxu0 0.0
        %230 = vmatpush.msra.mxu0 0.0
        %231 = vmatpush.msra.mxu0 0.0
        %232 = vmatpush.msra.mxu0 0.0
        %233 = vmatpush.msra.mxu0 0.0
        %234 = vmatpush.msra.mxu0 0.0
        %235 = vmatpush.msra.mxu0 0.0
        %236 = vmatpush.msra.mxu0 0.0
        %237 = vmatpush.msra.mxu0 0.0
        %238 = vmatpush.msra.mxu0 %v219
        %239 = vmatmul.f32.gmra.mxu0 %v216
        %v240 = vpop.f32.mrf.mxu0
        %v241 = vadd.f32 0.0, %v240
        %242 = vdwg.mxu0
        %243 = vmatpush.msra.mxu0 0.0
        %244 = vmatpush.msra.mxu0 0.0
        %245 = vmatpush.msra.mxu0 0.0
        %246 = vmatpush.msra.mxu0 0.0
        %247 = vmatpush.msra.mxu0 0.0
        %248 = vmatpush.msra.mxu0 0.0
        %249 = vmatpush.msra.mxu0 0.0
        %250 = vmatpush.msra.mxu0 0.0
        %251 = vmatpush.msra.mxu0 0.0
        %252 = vmatpush.msra.mxu0 0.0
        %253 = vmatpush.msra.mxu0 0.0
        %254 = vmatpush.msra.mxu0 0.0
        %255 = vmatpush.msra.mxu0 0.0
        %256 = vmatpush.msra.mxu0 0.0
        %257 = vmatpush.msra.mxu0 0.0
        %258 = vmatpush.msra.mxu0 %v221
        %259 = vmatmul.f32.gmra.mxu0 %v216
        %v260 = vpop.f32.mrf.mxu0
        %v261 = vadd.f32 0.0, %v260
        %262 = vdwg.mxu0
        %263 = vst [vmem:[%s201] sm:$0xff] %v241
        %264 = vst [vmem:[%s201 + $0x8] sm:$0xff] %v261
        %s265 = sand.u32 %s104, 1
        %s266 = scalar_lea.sflag [#allocation4], %s265
        %s267 = sand.u32 %s104, 1
        %s268 = smul.addr %s267, 16
        %s269 = scalar_lea.vmem [#allocation5], %s268
        // Predicated region
        $region33: #{tpu_custom_call.1} parent=27 // pred_check
          %p270 = pneg %p114
        $region34: #{tpu_custom_call.1} parent=27 // pred_check_branch
          %272 = sbr.rel (%p270) target = $region36
        $region35: #{tpu_custom_call.1} parent=27 // pred_region
          %s273 = smul.u32 2, %s25
          %275 = vsyncadd %s266, 0
          %s276 = smul.addr %s26, 2
          %s277 = sadd.s32 %s273, %s276
          %s278 = smul.addr %s24, 2
          %s279 = sadd.s32 %s277, %s278
          %s280 = smul.addr %s279, 8
          %s281 = scalar_lea.hbm %s2, %s280
          %s283 = sshll.u32 %s269, 4
          %s284 = int_to_ptr.vmem [resolvable:$true] %s283
          %s285 = sshll.u32 %s281, 4
          %s286 = int_to_ptr.hbm [resolvable:$true] %s285
          %288 = dma.vmem_to_hbm [thread:$0]  %s284, 256, %s286, %s266
        $region36: #{tpu_custom_call.1} parent=27 // pred_fallthru
          _
      $region28: #{tpu_custom_call.1} parent=5 // pred_fallthru
        _
      %p289 = scmp.le.s32.totalorder 2, %s14
      // Predicated region
      $region37: #{tpu_custom_call.1} parent=5 // pred_check
        %p290 = pneg %p289
      $region38: #{tpu_custom_call.1} parent=5 // pred_check_branch
        %292 = sbr.rel (%p290) target = $region40
      $region39: #{tpu_custom_call.1} parent=5 // pred_region
        %s293 = ssub.s32 %s14, 2
        // Predicated region
        $region41: #{tpu_custom_call.1} parent=39 // pred_check
          %p294 = pneg %p120
        $region42: #{tpu_custom_call.1} parent=39 // pred_check_branch
          %296 = sbr.rel (%p294) target = $region44
        $region43: #{tpu_custom_call.1} parent=39 // pred_region
          %s297 = sand.u32 %s105, 1
          %s298 = scalar_lea.sflag [#allocation4], %s297
          %s299 = sand.u32 %s105, 1
          %s300 = smul.addr %s299, 16
          %s301 = scalar_lea.vmem [#allocation5], %s300
          %303 = dma.done %s298, 256
        $region44: #{tpu_custom_call.1} parent=39 // pred_fallthru
          _
      $region40: #{tpu_custom_call.1} parent=5 // pred_fallthru
        _
    $region6: #{tpu_custom_call.1} parent=1 // loop_footer
      %s18 = sadd.s32 1, %s14
    $region7: #{tpu_custom_call.1} parent=1 // loop_footer_branch
      %13 = sbr.rel target = $region3
    $region8: #{tpu_custom_call.1} parent=1 // loop_exit
      _
    %304 = vsyncpa [#allocation3], 1
    %s305 = scalar_lea.sflag [#allocation3], 1
    %306 = vsyncpa %s305, 1
    %307 = vsyncpa [#allocation4], 1
    %s308 = scalar_lea.sflag [#allocation4], 1
    %309 = vsyncpa %s308, 1

</llo_original>
